<compile_context>
chip_gen: v7x
topology: tpu7x:2x2x1
jax: 0.10.0
libtpu: 0.0.40
codegen_flags: <defaults>
</compile_context>

<pallas_src>
import functools

import jax
import jax.numpy as jnp
from jax import lax
from jax.experimental import pallas as pl
from jax.experimental.pallas import tpu as pltpu

NEG_MASK = -1e30      # additive mask value for padded sequence / vocab positions
NEG_INIT = -3.0e38    # finite "-inf" init for running maxima


def _round_up(x, m):
    return ((x + m - 1) // m) * m


# --------------------------------------------------------------------------- #
# Kernel A: attention + context (grid = (batch tiles, seq tiles))
#   pA rows: 0 b_dec, 1 w_attn, 2 bn_g, 3 bn_b, 4 bn_m, 5 bn_v
# --------------------------------------------------------------------------- #
def _attn_ctx_kernel(dec_op_ref, enc_ref, enc1_ref, src_ref,
                     Wd_ref, pA_ref,
                     scores_ref, matt_ref, latt_ref, ctx_ref,
                     dec1_sc, m_sc, l_sc, acc_sc):
    s = pl.program_id(1)
    ns = pl.num_programs(1)
    bf16 = jnp.bfloat16

    @pl.when(s == 0)
    def _init():
        b_dec = pA_ref[0:1, :]
        dec1_sc[...] = (
            jnp.dot(dec_op_ref[...].astype(bf16), Wd_ref[...],
                    preferred_element_type=jnp.float32) + b_dec)
        m_sc[...] = jnp.full(m_sc.shape, NEG_INIT, jnp.float32)
        l_sc[...] = jnp.zeros(l_sc.shape, jnp.float32)
        acc_sc[...] = jnp.zeros(acc_sc.shape, jnp.float32)

    w_attn = pA_ref[1:2, :]
    # features = tanh(enc_op1 + dec_op1); enc_op1 streamed bf16, upcast for tanh
    feats = jnp.tanh(enc1_ref[...].astype(jnp.float32)
                     + dec1_sc[...][:, None, :])                   # (TB, TS, D2)
    logits = jnp.sum(feats * w_attn[None, :, :], axis=-1)          # (TB, TS)
    # mask pad positions with -1e30 (== post-softmax mask + renorm, but stable)
    logits = jnp.where(src_ref[...] != 0, logits, NEG_MASK)
    scores_ref[...] = logits

    # online softmax stats + bf16 MXU context accumulation (f32 accumulate)
    m_new = jnp.maximum(m_sc[...], jnp.max(logits, axis=-1, keepdims=True))
    alpha = jnp.exp(m_sc[...] - m_new)
    e = jnp.exp(logits - m_new)                                    # (TB, TS)
    l_sc[...] = alpha * l_sc[...] + jnp.sum(e, axis=-1, keepdims=True)
    acc_sc[...] = alpha * acc_sc[...] + jnp.einsum(
        'bqs,bsd->bqd', e[:, None, :].astype(bf16), enc_ref[...],
        preferred_element_type=jnp.float32)[:, 0, :]
    m_sc[...] = m_new

    @pl.when(s == ns - 1)
    def _finalize():
        bn_g = pA_ref[2:3, :]
        bn_b = pA_ref[3:4, :]
        bn_m = pA_ref[4:5, :]
        bn_v = pA_ref[5:6, :]
        l_safe = jnp.where(l_sc[...] > 0.0, l_sc[...], 1.0)        # all-pad guard
        ctx = acc_sc[...] * pl.reciprocal(l_safe, approx=True)
        # BatchNorm1d (eval mode, running stats)
        ctx_ref[...] = (ctx - bn_m) * (bn_g * lax.rsqrt(bn_v + 1e-5)) + bn_b
        matt_ref[...] = m_sc[...]
        latt_ref[...] = l_sc[...]


# --------------------------------------------------------------------------- #
# Kernel B: vocab softmax stats + cached logits (grid = (batch, vocab tiles))
# --------------------------------------------------------------------------- #
def _vocab_stats_kernel(dec_out_ref, ctx_ref, W1a_ref, W1b_ref, b1_ref,
                        W2_ref, b2_ref, h1_ref, vm_ref, vl_ref, vlog_ref):
    j = pl.program_id(1)
    bf16 = jnp.bfloat16

    @pl.when(j == 0)
    def _init():
        # concat-free Linear(3D -> D): split weight, two matmuls
        h1_ref[...] = (
            jnp.dot(dec_out_ref[...].astype(bf16), W1a_ref[...],
                    preferred_element_type=jnp.float32)
            + jnp.dot(ctx_ref[...].astype(bf16), W1b_ref[...],
                      preferred_element_type=jnp.float32)
            + b1_ref[...])
        vm_ref[...] = jnp.full(vm_ref.shape, NEG_INIT, jnp.float32)
        vl_ref[...] = jnp.zeros(vl_ref.shape, jnp.float32)

    vlog = (jnp.dot(h1_ref[...].astype(bf16), W2_ref[...],
                    preferred_element_type=jnp.float32) + b2_ref[...])
    # cache the logits (bf16) for Kernel C so W_v2 is streamed/matmul'd once;
    # stats are computed from the *stored* bf16 values for self-consistency.
    vlog_bf = vlog.astype(bf16)
    vlog_ref[...] = vlog_bf
    vlog_r = vlog_bf.astype(jnp.float32)
    m_new = jnp.maximum(vm_ref[...], jnp.max(vlog_r, axis=-1, keepdims=True))
    alpha = jnp.exp(vm_ref[...] - m_new)
    vl_ref[...] = alpha * vl_ref[...] + jnp.sum(jnp.exp(vlog_r - m_new),
                                                axis=-1, keepdims=True)
    vm_ref[...] = m_new


# --------------------------------------------------------------------------- #
# Kernel C: p_vocab finalize + p_gen gate + copy scatter (grid = (batch, vocab))
#   pC rows: 0 w_pc, 1 w_ps, 2 b_p (broadcast)
# --------------------------------------------------------------------------- #
def _vocab_final_kernel(scores_ref, matt_ref, latt_ref, ctx_ref, dec_op_ref,
                        dec_inp_ref, src_ref, vlog_ref, vm_ref, vl_ref,
                        pC_ref, wpx_ref,
                        pfin_ref, attn_ref, pgen_sc, sattn_sc, *, sc):
    j = pl.program_id(1)
    TB, TV = pfin_ref.shape
    S_pad = src_ref.shape[1]
    bf16 = jnp.bfloat16

    @pl.when(j == 0)
    def _init():
        l_safe = jnp.where(latt_ref[...] > 0.0, latt_ref[...], 1.0)
        attn = jnp.exp(scores_ref[...] - matt_ref[...]) * pl.reciprocal(
            l_safe, approx=True)                                    # (TB, S_pad)
        attn_ref[...] = attn
        # pointer-gen gate
        w_pc = pC_ref[0:1, :]
        w_ps = pC_ref[1:2, :]
        b_p = pC_ref[2:3, 0:1]
        gate = (jnp.sum(ctx_ref[...] * w_pc, axis=1, keepdims=True)
                + jnp.sum(dec_op_ref[...] * w_ps, axis=1, keepdims=True)
                + jnp.sum(dec_inp_ref[...] * wpx_ref[...], axis=1, keepdims=True)
                + b_p)
        p_gen = jax.nn.sigmoid(gate)
        pgen_sc[...] = p_gen
        sattn_sc[...] = (1.0 - p_gen) * attn

    vl_safe = jnp.where(vl_ref[...] > 0.0, vl_ref[...], 1.0)
    p_vocab = (jnp.exp(vlog_ref[...].astype(jnp.float32) - vm_ref[...])
               * pl.reciprocal(vl_safe, approx=True))
    pf = pgen_sc[...] * p_vocab                                     # (TB, TV)

    # scatter_add(1, src, src_attn) folded into this vocab tile: per-chunk
    # one-hot (bf16) reduced on the MXU with f32 accumulation. Never (B, S, V).
    v_base = j * TV
    src = src_ref[...] - v_base                 # loop-invariant 2-D subtract
    sattn = sattn_sc[...].astype(bf16)
    iota = lax.broadcasted_iota(jnp.int32, (TB, sc, TV), 2)         # hoisted
    for s0 in range(0, S_pad, sc):
        ids = src[:, s0:s0 + sc]
        sa = sattn[:, s0:s0 + sc]
        onehot = (ids[:, :, None] == iota).astype(bf16)
        pf = pf + jnp.einsum('bqs,bsv->bqv', sa[:, None, :], onehot,
                             preferred_element_type=jnp.float32)[:, 0, :]

    pf = jnp.where(pf == 0.0, 1e-12, pf)
    pfin_ref[...] = pf


# --------------------------------------------------------------------------- #
# Wrapper
# --------------------------------------------------------------------------- #
def generate_forward(params, dec_output, dec_hid, dec_inp, enc_op, enc_op1,
                     src_inp, *, seq_tile=512, vocab_tile=1024):
    h, c = dec_hid
    B, S, D2 = enc_op.shape
    Dm = params["W_v1"].shape[1]              # d_model
    Vg = params["W_v2"].shape[1]              # vocab_size - oov_size
    V = Vg + params["oov_size"]
    E = dec_inp.shape[-1]
    f32 = jnp.float32
    bf16 = jnp.bfloat16

    # --- plain-JAX glue (pure layout: LSTM-state concat / squeezes) ---
    dec_op = jnp.concatenate([h[0], c[0]], axis=-1).astype(f32)    # (B, 2D)
    dec_out = dec_output[:, 0, :].astype(f32)                      # (B, Dm)
    dec_in = dec_inp[:, 0, :].astype(f32)                          # (B, E)

    # --- batch padding / tiling ---
    if B <= 64:
        tb = _round_up(B, 8)
        B_pad = tb
    else:
        tb = 64
        B_pad = _round_up(B, 64)
    ts = min(seq_tile, _round_up(S, 128))
    S_pad = _round_up(S, ts)
    tv = min(vocab_tile, _round_up(V, 128))
    V_pad = _round_up(V, tv)
    nb, ns, nv = B_pad // tb, S_pad // ts, V_pad // tv
    pad_b = B_pad - B

    enc_p = jnp.pad(enc_op.astype(bf16), ((0, pad_b), (0, S_pad - S), (0, 0)))
    enc1_p = jnp.pad(enc_op1.astype(bf16), ((0, pad_b), (0, S_pad - S), (0, 0)))
    src_p = jnp.pad(src_inp.astype(jnp.int32), ((0, pad_b), (0, S_pad - S)))
    dec_op_p = jnp.pad(dec_op, ((0, pad_b), (0, 0)))
    dec_out_p = jnp.pad(dec_out, ((0, pad_b), (0, 0)))
    dec_in_p = jnp.pad(dec_in, ((0, pad_b), (0, 0)))

    # bf16 weights (f32 accumulation in-kernel); OOV + alignment columns of the
    # vocab projection get zero weight and a -1e30 bias -> p_vocab exactly 0
    # there (same as the reference concat-with-zeros), no extra copies needed.
    W_dec_bf = params["W_dec"].astype(bf16)
    W1 = params["W_v1"].astype(f32)
    W1a = W1[:Dm, :].astype(bf16)
    W1b = W1[Dm:, :].astype(bf16)
    W2p = jnp.pad(params["W_v2"].astype(f32),
                  ((0, 0), (0, V_pad - Vg))).astype(bf16)
    b2p = jnp.pad(params["b_v2"].astype(f32), ((0, 0), (0, V_pad - Vg)),
                  constant_values=NEG_MASK)

    # packed broadcast params (single DMA descriptor per kernel)
    pA = jnp.zeros((8, D2), f32)
    pA = pA.at[0].set(params["b_dec"].reshape(-1))
    pA = pA.at[1].set(params["w_attn"].reshape(-1))
    pA = pA.at[2].set(params["bn_g"].reshape(-1))
    pA = pA.at[3].set(params["bn_b"].reshape(-1))
    pA = pA.at[4].set(params["bn_m"].reshape(-1))
    pA = pA.at[5].set(params["bn_v"].reshape(-1))

    pC = jnp.zeros((8, D2), f32)
    pC = pC.at[0].set(params["w_pc"].reshape(-1))
    pC = pC.at[1].set(params["w_ps"].reshape(-1))
    pC = pC.at[2].set(jnp.broadcast_to(params["b_p"].reshape(()), (D2,)))

    cparams = pltpu.CompilerParams(
        dimension_semantics=("parallel", "arbitrary"),
        vmem_limit_bytes=48 * 1024 * 1024)     # <= 48 MiB: safe on v7x (64 MiB)

    # ---------------- Kernel A: attention + context ----------------
    scores, m_att, l_att, ctx_n = pl.pallas_call(
        _attn_ctx_kernel,
        out_shape=(jax.ShapeDtypeStruct((B_pad, S_pad), f32),
                   jax.ShapeDtypeStruct((B_pad, 1), f32),
                   jax.ShapeDtypeStruct((B_pad, 1), f32),
                   jax.ShapeDtypeStruct((B_pad, D2), f32)),
        grid_spec=pltpu.PrefetchScalarGridSpec(
            num_scalar_prefetch=0,
            grid=(nb, ns),
            in_specs=[
                pl.BlockSpec((tb, D2), lambda b, s: (b, 0)),         # dec_op
                pl.BlockSpec((tb, ts, D2), lambda b, s: (b, s, 0)),  # enc_op bf16
                pl.BlockSpec((tb, ts, D2), lambda b, s: (b, s, 0)),  # enc_op1 bf16
                pl.BlockSpec((tb, ts), lambda b, s: (b, s)),         # src
                pl.BlockSpec((D2, D2), lambda b, s: (0, 0)),         # W_dec
                pl.BlockSpec((8, D2), lambda b, s: (0, 0)),          # packed pA
            ],
            out_specs=(
                pl.BlockSpec((tb, ts), lambda b, s: (b, s)),         # scores
                pl.BlockSpec((tb, 1), lambda b, s: (b, 0)),          # m
                pl.BlockSpec((tb, 1), lambda b, s: (b, 0)),          # l
                pl.BlockSpec((tb, D2), lambda b, s: (b, 0)),         # ctx_n
            ),
            scratch_shapes=[pltpu.VMEM((tb, D2), f32),
                            pltpu.VMEM((tb, 1), f32),
                            pltpu.VMEM((tb, 1), f32),
                            pltpu.VMEM((tb, D2), f32)]),
        compiler_params=cparams,
    )(dec_op_p, enc_p, enc1_p, src_p, W_dec_bf, pA)

    # ---------------- Kernel B: vocab softmax stats + cached logits ------------
    h1, vm, vl, vlog = pl.pallas_call(
        _vocab_stats_kernel,
        out_shape=(jax.ShapeDtypeStruct((B_pad, Dm), f32),
                   jax.ShapeDtypeStruct((B_pad, 1), f32),
                   jax.ShapeDtypeStruct((B_pad, 1), f32),
                   jax.ShapeDtypeStruct((B_pad, V_pad), bf16)),
        grid_spec=pltpu.PrefetchScalarGridSpec(
            num_scalar_prefetch=0,
            grid=(nb, nv),
            in_specs=[
                pl.BlockSpec((tb, Dm), lambda b, j: (b, 0)),         # dec_out
                pl.BlockSpec((tb, D2), lambda b, j: (b, 0)),         # ctx_n
                pl.BlockSpec((Dm, Dm), lambda b, j: (0, 0)),         # W_v1a
                pl.BlockSpec((D2, Dm), lambda b, j: (0, 0)),         # W_v1b
                pl.BlockSpec((1, Dm), lambda b, j: (0, 0)),          # b_v1
                pl.BlockSpec((Dm, tv), lambda b, j: (0, j)),         # W_v2 tile
                pl.BlockSpec((1, tv), lambda b, j: (0, j)),          # b_v2 tile
            ],
            out_specs=(
                pl.BlockSpec((tb, Dm), lambda b, j: (b, 0)),         # h1
                pl.BlockSpec((tb, 1), lambda b, j: (b, 0)),          # vm
                pl.BlockSpec((tb, 1), lambda b, j: (b, 0)),          # vl
                pl.BlockSpec((tb, tv), lambda b, j: (b, j)),         # vlog (bf16)
            ),
            scratch_shapes=[]),
        compiler_params=cparams,
    )(dec_out_p, ctx_n, W1a, W1b, params["b_v1"].astype(f32), W2p, b2p)

    # ---------------- Kernel C: finalize p_vocab + gate + copy ----------------
    # chunk size for the (tb, sc, tv) one-hot/iota temporaries: keep them small
    elem_budget = 1 << 20
    cands = [S_pad] + [c for c in (1024, 512, 256, 128, 64, 32, 16, 8)
                       if c < S_pad and S_pad % c == 0]
    sc = next((c for c in cands if tb * c * tv <= elem_budget), 8)

    p_final_p, attn_p = pl.pallas_call(
        functools.partial(_vocab_final_kernel, sc=sc),
        out_shape=(jax.ShapeDtypeStruct((B_pad, V_pad), f32),
                   jax.ShapeDtypeStruct((B_pad, S_pad), f32)),
        grid_spec=pltpu.PrefetchScalarGridSpec(
            num_scalar_prefetch=0,
            grid=(nb, nv),
            in_specs=[
                pl.BlockSpec((tb, S_pad), lambda b, j: (b, 0)),      # scores
                pl.BlockSpec((tb, 1), lambda b, j: (b, 0)),          # m_att
                pl.BlockSpec((tb, 1), lambda b, j: (b, 0)),          # l_att
                pl.BlockSpec((tb, D2), lambda b, j: (b, 0)),         # ctx_n
                pl.BlockSpec((tb, D2), lambda b, j: (b, 0)),         # dec_op
                pl.BlockSpec((tb, E), lambda b, j: (b, 0)),          # dec_inp
                pl.BlockSpec((tb, S_pad), lambda b, j: (b, 0)),      # src
                pl.BlockSpec((tb, tv), lambda b, j: (b, j)),         # vlog tile
                pl.BlockSpec((tb, 1), lambda b, j: (b, 0)),          # vm
                pl.BlockSpec((tb, 1), lambda b, j: (b, 0)),          # vl
                pl.BlockSpec((8, D2), lambda b, j: (0, 0)),          # packed pC
                pl.BlockSpec((1, E), lambda b, j: (0, 0)),           # w_px
            ],
            out_specs=(
                pl.BlockSpec((tb, tv), lambda b, j: (b, j)),         # p_final
                pl.BlockSpec((tb, S_pad), lambda b, j: (b, 0)),      # attn
            ),
            scratch_shapes=[pltpu.VMEM((tb, 1), f32),
                            pltpu.VMEM((tb, S_pad), f32)]),
        compiler_params=cparams,
    )(scores, m_att, l_att, ctx_n, dec_op_p, dec_in_p, src_p, vlog, vm, vl,
      pC, params["w_px"].astype(f32))

    return p_final_p[:B, :V], attn_p[:B, :S], ctx_n[:B]


# --------------------------------------------------------------------------- #
# Pure-JAX reference (mirrors the PyTorch forward, f32 everywhere)
# --------------------------------------------------------------------------- #
def reference_forward(params, dec_output, dec_hid, dec_inp, enc_op, enc_op1,
                      src_inp):
    h, c = dec_hid
    B = src_inp.shape[0]
    dec_op = jnp.concatenate([h[0], c[0]], axis=-1)
    dec_op1 = dec_op @ params["W_dec"] + params["b_dec"]
    feats = jnp.tanh(enc_op1 + dec_op1[:, None, :])
    logits = jnp.sum(feats * params["w_attn"][None, :, :], axis=-1)
    attn = jax.nn.softmax(logits, axis=-1)
    mask = (src_inp != 0).astype(jnp.float32)
    attn = attn * mask
    attn = attn / jnp.sum(attn, axis=1, keepdims=True)
    ctx = jnp.einsum('bs,bsd->bd', attn, enc_op)
    ctx = ((ctx - params["bn_m"])
           * (params["bn_g"] / jnp.sqrt(params["bn_v"] + 1e-5))
           + params["bn_b"])
    temp = jnp.concatenate([dec_output[:, 0, :], ctx], axis=1)
    h1 = temp @ params["W_v1"] + params["b_v1"]
    vlog = h1 @ params["W_v2"] + params["b_v2"]
    p_vocab = jax.nn.softmax(vlog, axis=-1)
    p_vocab = jnp.concatenate(
        [p_vocab, jnp.zeros((B, params["oov_size"]), jnp.float32)], axis=1)
    gate = (jnp.sum(ctx * params["w_pc"], axis=1, keepdims=True)
            + jnp.sum(dec_op * params["w_ps"], axis=1, keepdims=True)
            + jnp.sum(dec_inp[:, 0, :] * params["w_px"], axis=1, keepdims=True)
            + params["b_p"])
    p_gen = jax.nn.sigmoid(gate)
    src_attn = (1.0 - p_gen) * attn
    p_final = p_gen * p_vocab
    p_final = p_final.at[jnp.arange(B)[:, None], src_inp].add(src_attn)
    p_final = jnp.where(p_final == 0.0, 1e-12, p_final)
    return p_final, attn, ctx


def init_params(key, d_model, vocab_size, oov_size, emb):
    std = 1e-4
    D2, D3 = 2 * d_model, 3 * d_model
    Vg = vocab_size - oov_size
    ks = jax.random.split(key, 12)
    nrm = lambda k, s: (std * jax.random.normal(k, s)).astype(jnp.float32)
    return {
        "oov_size": oov_size,
        "W_dec": nrm(ks[0], (D2, D2)), "b_dec": nrm(ks[1], (1, D2)),
        "w_attn": nrm(ks[2], (1, D2)),
        "W_v1": nrm(ks[3], (D3, d_model)), "b_v1": nrm(ks[4], (1, d_model)),
        "W_v2": nrm(ks[5], (d_model, Vg)), "b_v2": nrm(ks[6], (1, Vg)),
        # BatchNorm1d defaults (eval mode): gamma=1, beta=0, running mean/var 0/1
        "bn_g": jnp.ones((1, D2), jnp.float32), "bn_b": jnp.zeros((1, D2), jnp.float32),
        "bn_m": jnp.zeros((1, D2), jnp.float32), "bn_v": jnp.ones((1, D2), jnp.float32),
        # pointer-gen gate parameters
        "w_pc": nrm(ks[7], (1, D2)), "w_ps": nrm(ks[8], (1, D2)),
        "w_px": nrm(ks[9], (1, emb)), "b_p": nrm(ks[10], (1, 1)),
        # mod_enc_op weight (used by cache_enc_operations glue)
        "W_enc": nrm(ks[11], (D2, D2)),
    }


if __name__ == "__main__":
    B, D, S, V, OOV, E = 2, 32, 200, 320, 70, 32
    key = jax.random.PRNGKey(0)
    k_par, k_do, k_h, k_c, k_di, k_enc, k_src = jax.random.split(key, 7)

    params = init_params(k_par, D, V, OOV, E)

    dec_output = jax.random.normal(k_do, (B, 1, D), jnp.float32)
    dec_hid = (jax.random.normal(k_h, (1, B, D), jnp.float32),
               jax.random.normal(k_c, (1, B, D), jnp.float32))
    dec_inp = jax.random.normal(k_di, (B, 1, E), jnp.float32)
    enc_op = jax.random.normal(k_enc, (B, S, 2 * D), jnp.float32)
    enc_op1 = enc_op @ params["W_enc"]          # cache_enc_operations glue
    src_inp = jax.random.randint(k_src, (B, S), 1, V, dtype=jnp.int32)
    src_inp = src_inp.at[:, -40:].set(0)        # padded tail -> exercises mask
    src_inp = src_inp.at[0, 5].set(0)           # interior pad position

    # small tiles here to exercise multi-tile grids at toy shapes
    p_final, attn, ctx = generate_forward(
        params, dec_output, dec_hid, dec_inp, enc_op, enc_op1, src_inp,
        seq_tile=128, vocab_tile=128)
    jax.block_until_ready((p_final, attn, ctx))

    assert p_final.shape == (B, V) and attn.shape == (B, S) and ctx.shape == (B, 2 * D)
    assert bool(jnp.all(jnp.isfinite(p_final)))

    p_ref, a_ref, c_ref = reference_forward(
        params, dec_output, dec_hid, dec_inp, enc_op, enc_op1, src_inp)
    assert float(jnp.max(jnp.abs(p_final - p_ref))) < 5e-3
    assert float(jnp.max(jnp.abs(attn - a_ref))) < 5e-3
    assert float(jnp.max(jnp.abs(ctx - c_ref))) < 5e-3
    assert float(jnp.max(jnp.abs(jnp.sum(p_final, axis=1) - 1.0))) < 2e-2

    print("KERNEL_OK")
</pallas_src>

<mosaic_0001>
module attributes {stable_mosaic.version = 11 : i64} {
  func.func @_attn_ctx_kernel(%arg0: i32, %arg1: i32, %arg2: memref<8x64xf32, #tpu.memory_space<vmem>>, %arg3: memref<8x128x64xbf16, #tpu.memory_space<vmem>>, %arg4: memref<8x128x64xbf16, #tpu.memory_space<vmem>>, %arg5: memref<8x128xi32, #tpu.memory_space<vmem>>, %arg6: memref<64x64xbf16, #tpu.memory_space<vmem>>, %arg7: memref<8x64xf32, #tpu.memory_space<vmem>>, %arg8: memref<8x128xf32, #tpu.memory_space<vmem>>, %arg9: memref<8x1xf32, #tpu.memory_space<vmem>>, %arg10: memref<8x1xf32, #tpu.memory_space<vmem>>, %arg11: memref<8x64xf32, #tpu.memory_space<vmem>>, %arg12: memref<8x64xf32, #tpu.memory_space<vmem>>, %arg13: memref<8x1xf32, #tpu.memory_space<vmem>>, %arg14: memref<8x1xf32, #tpu.memory_space<vmem>>, %arg15: memref<8x64xf32, #tpu.memory_space<vmem>>) attributes {dimension_semantics = [#tpu.dimension_semantics<parallel>, #tpu.dimension_semantics<arbitrary>], iteration_bounds = array<i64: 1, 2>, scalar_prefetch = 0 : i64, scratch_operands = 4 : i64, tpu.core_type = #tpu.core_type<tc>, window_params = [{transform_indices = @transform_0, window_bounds = array<i64: 8, 64>}, {transform_indices = @transform_1, window_bounds = array<i64: 8, 128, 64>}, {transform_indices = @transform_2, window_bounds = array<i64: 8, 128, 64>}, {transform_indices = @transform_3, window_bounds = array<i64: 8, 128>}, {pipeline_mode = #tpu.pipeline_mode<synchronous>, transform_indices = @transform_4, window_bounds = array<i64: 64, 64>}, {pipeline_mode = #tpu.pipeline_mode<synchronous>, transform_indices = @transform_5, window_bounds = array<i64: 8, 64>}, {transform_indices = @transform_6, window_bounds = array<i64: 8, 128>}, {transform_indices = @transform_7, window_bounds = array<i64: 8, 1>}, {transform_indices = @transform_8, window_bounds = array<i64: 8, 1>}, {transform_indices = @transform_9, window_bounds = array<i64: 8, 64>}]} {
    %c0_i32 = arith.constant 0 : i32
    %0 = arith.cmpi eq, %arg1, %c0_i32 : i32
    %1 = arith.extui %0 : i1 to i32
    %c0_i32_0 = arith.constant 0 : i32
    %2 = arith.cmpi ne, %1, %c0_i32_0 : i32
    scf.if %2 {
      %c0_33 = arith.constant 0 : index
      %c0_34 = arith.constant 0 : index
      %51 = vector.load %arg7[%c0_33, %c0_34] : memref<8x64xf32, #tpu.memory_space<vmem>>, vector<1x64xf32>
      %c0_35 = arith.constant 0 : index
      %c0_36 = arith.constant 0 : index
      %52 = vector.load %arg2[%c0_35, %c0_36] : memref<8x64xf32, #tpu.memory_space<vmem>>, vector<8x64xf32>
      %53 = arith.truncf %52 : vector<8x64xf32> to vector<8x64xbf16>
      %c0_37 = arith.constant 0 : index
      %c0_38 = arith.constant 0 : index
      %54 = vector.load %arg6[%c0_37, %c0_38] : memref<64x64xbf16, #tpu.memory_space<vmem>>, vector<64x64xbf16>
      %cst_39 = arith.constant dense<0.000000e+00> : vector<8x64xf32>
      %55 = tpu.matmul %53, %54, %cst_39 {dimension_numbers = #tpu.dot_dimension_numbers<[1], [0], [0], [1], [0, 0, 1, 1], [], []>} : vector<8x64xbf16>, vector<64x64xbf16>, vector<8x64xf32> -> vector<8x64xf32>
      %56 = vector.broadcast %51 : vector<1x64xf32> to vector<8x64xf32>
      %57 = arith.addf %55, %56 : vector<8x64xf32>
      %c0_40 = arith.constant 0 : index
      %c0_41 = arith.constant 0 : index
      %58 = vector.load %arg12[%c0_40, %c0_41] : memref<8x64xf32, #tpu.memory_space<vmem>>, vector<8x64xf32>
      tpu.vector_store %arg12[%c0_40, %c0_41], %57 {strides = array<i32>} : memref<8x64xf32, #tpu.memory_space<vmem>>, vector<8x64xf32>,
      %cst_42 = arith.constant -3.000000e+38 : f32
      %59 = vector.broadcast %cst_42 : f32 to vector<8x1xf32>
      %c0_43 = arith.constant 0 : index
      %c0_44 = arith.constant 0 : index
      %60 = vector.load %arg13[%c0_43, %c0_44] : memref<8x1xf32, #tpu.memory_space<vmem>>, vector<8x1xf32>
      tpu.vector_store %arg13[%c0_43, %c0_44], %59 {strides = array<i32>} : memref<8x1xf32, #tpu.memory_space<vmem>>, vector<8x1xf32>,
      %cst_45 = arith.constant 0.000000e+00 : f32
      %61 = vector.broadcast %cst_45 : f32 to vector<8x1xf32>
      %c0_46 = arith.constant 0 : index
      %c0_47 = arith.constant 0 : index
      %62 = vector.load %arg14[%c0_46, %c0_47] : memref<8x1xf32, #tpu.memory_space<vmem>>, vector<8x1xf32>
      tpu.vector_store %arg14[%c0_46, %c0_47], %61 {strides = array<i32>} : memref<8x1xf32, #tpu.memory_space<vmem>>, vector<8x1xf32>,
      %cst_48 = arith.constant 0.000000e+00 : f32
      %63 = vector.broadcast %cst_48 : f32 to vector<8x64xf32>
      %c0_49 = arith.constant 0 : index
      %c0_50 = arith.constant 0 : index
      %64 = vector.load %arg15[%c0_49, %c0_50] : memref<8x64xf32, #tpu.memory_space<vmem>>, vector<8x64xf32>
      tpu.vector_store %arg15[%c0_49, %c0_50], %63 {strides = array<i32>} : memref<8x64xf32, #tpu.memory_space<vmem>>, vector<8x64xf32>,
    } else {
    }
    %c1 = arith.constant 1 : index
    %c0 = arith.constant 0 : index
    %3 = vector.load %arg7[%c1, %c0] : memref<8x64xf32, #tpu.memory_space<vmem>>, vector<1x64xf32>
    %c0_1 = arith.constant 0 : index
    %c0_2 = arith.constant 0 : index
    %c0_3 = arith.constant 0 : index
    %4 = vector.load %arg4[%c0_1, %c0_2, %c0_3] : memref<8x128x64xbf16, #tpu.memory_space<vmem>>, vector<8x128x64xbf16>
    %5 = arith.extf %4 : vector<8x128x64xbf16> to vector<8x128x64xf32>
    %c0_4 = arith.constant 0 : index
    %c0_5 = arith.constant 0 : index
    %6 = vector.load %arg12[%c0_4, %c0_5] : memref<8x64xf32, #tpu.memory_space<vmem>>, vector<8x64xf32>
    %7 = vector.shape_cast %6 : vector<8x64xf32> to vector<8x1x64xf32>
    %8 = vector.broadcast %7 : vector<8x1x64xf32> to vector<8x128x64xf32>
    %9 = arith.addf %5, %8 : vector<8x128x64xf32>
    %10 = math.tanh %9 : vector<8x128x64xf32>
    %11 = vector.shape_cast %3 : vector<1x64xf32> to vector<1x1x64xf32>
    %12 = vector.broadcast %11 : vector<1x1x64xf32> to vector<8x128x64xf32>
    %13 = arith.mulf %10, %12 : vector<8x128x64xf32>
    %cst = arith.constant dense<0.000000e+00> : vector<8x128xf32>
    %14 = vector.multi_reduction <add>, %13, %cst [2] : vector<8x128x64xf32> to vector<8x128xf32>
    %c0_6 = arith.constant 0 : index
    %c0_7 = arith.constant 0 : index
    %15 = vector.load %arg5[%c0_6, %c0_7] : memref<8x128xi32, #tpu.memory_space<vmem>>, vector<8x128xi32>
    %c0_i32_8 = arith.constant 0 : i32
    %16 = vector.broadcast %c0_i32_8 : i32 to vector<8x128xi32>
    %17 = arith.cmpi ne, %15, %16 : vector<8x128xi32>
    %cst_9 = arith.constant -1.000000e+30 : f32
    %18 = vector.broadcast %cst_9 : f32 to vector<8x128xf32>
    %19 = arith.select %17, %14, %18 : vector<8x128xi1>, vector<8x128xf32>
    %c0_10 = arith.constant 0 : index
    %c0_11 = arith.constant 0 : index
    %20 = vector.load %arg8[%c0_10, %c0_11] : memref<8x128xf32, #tpu.memory_space<vmem>>, vector<8x128xf32>
    tpu.vector_store %arg8[%c0_10, %c0_11], %19 {strides = array<i32>} : memref<8x128xf32, #tpu.memory_space<vmem>>, vector<8x128xf32>,
    %c0_12 = arith.constant 0 : index
    %c0_13 = arith.constant 0 : index
    %21 = vector.load %arg13[%c0_12, %c0_13] : memref<8x1xf32, #tpu.memory_space<vmem>>, vector<8x1xf32>
    %cst_14 = arith.constant dense<0xFF800000> : vector<8xf32>
    %22 = vector.multi_reduction <maximumf>, %19, %cst_14 [1] : vector<8x128xf32> to vector<8xf32>
    %23 = vector.shape_cast %22 : vector<8xf32> to vector<8x1xf32>
    %24 = arith.maximumf %21, %23 : vector<8x1xf32>
    %c0_15 = arith.constant 0 : index
    %c0_16 = arith.constant 0 : index
    %25 = vector.load %arg13[%c0_15, %c0_16] : memref<8x1xf32, #tpu.memory_space<vmem>>, vector<8x1xf32>
    %26 = arith.subf %25, %24 : vector<8x1xf32>
    %27 = math.exp %26 : vector<8x1xf32>
    %28 = vector.broadcast %24 : vector<8x1xf32> to vector<8x128xf32>
    %29 = arith.subf %19, %28 : vector<8x128xf32>
    %30 = math.exp %29 : vector<8x128xf32>
    %c0_17 = arith.constant 0 : index
    %c0_18 = arith.constant 0 : index
    %31 = vector.load %arg14[%c0_17, %c0_18] : memref<8x1xf32, #tpu.memory_space<vmem>>, vector<8x1xf32>
    %32 = arith.mulf %27, %31 : vector<8x1xf32>
    %cst_19 = arith.constant dense<0.000000e+00> : vector<8xf32>
    %33 = vector.multi_reduction <add>, %30, %cst_19 [1] : vector<8x128xf32> to vector<8xf32>
    %34 = vector.shape_cast %33 : vector<8xf32> to vector<8x1xf32>
    %35 = arith.addf %32, %34 : vector<8x1xf32>
    %c0_20 = arith.constant 0 : index
    %c0_21 = arith.constant 0 : index
    %36 = vector.load %arg14[%c0_20, %c0_21] : memref<8x1xf32, #tpu.memory_space<vmem>>, vector<8x1xf32>
    tpu.vector_store %arg14[%c0_20, %c0_21], %35 {strides = array<i32>} : memref<8x1xf32, #tpu.memory_space<vmem>>, vector<8x1xf32>,
    %c0_22 = arith.constant 0 : index
    %c0_23 = arith.constant 0 : index
    %37 = vector.load %arg15[%c0_22, %c0_23] : memref<8x64xf32, #tpu.memory_space<vmem>>, vector<8x64xf32>
    %38 = vector.broadcast %27 : vector<8x1xf32> to vector<8x64xf32>
    %39 = arith.mulf %38, %37 : vector<8x64xf32>
    %40 = vector.shape_cast %30 : vector<8x128xf32> to vector<8x1x128xf32>
    %41 = arith.truncf %40 : vector<8x1x128xf32> to vector<8x1x128xbf16>
    %c0_24 = arith.constant 0 : index
    %c0_25 = arith.constant 0 : index
    %c0_26 = arith.constant 0 : index
    %42 = vector.load %arg3[%c0_24, %c0_25, %c0_26] : memref<8x128x64xbf16, #tpu.memory_space<vmem>>, vector<8x128x64xbf16>
    "tpu.trace_start"() <{level = 10 : i32, message = "bqs,bsd->bqd"}> : () -> ()
    %cst_27 = arith.constant dense<0.000000e+00> : vector<8x1x64xf32>
    %43 = tpu.matmul %41, %42, %cst_27 {dimension_numbers = #tpu.dot_dimension_numbers<[2], [1], [1], [2], [0, 0, 0, 1, 1, 2], [0], [0]>} : vector<8x1x128xbf16>, vector<8x128x64xbf16>, vector<8x1x64xf32> -> vector<8x1x64xf32>
    "tpu.trace_stop"() : () -> ()
    %44 = vector.shape_cast %43 : vector<8x1x64xf32> to vector<8x64xf32>
    %45 = arith.addf %39, %44 : vector<8x64xf32>
    %c0_28 = arith.constant 0 : index
    %c0_29 = arith.constant 0 : index
    %46 = vector.load %arg15[%c0_28, %c0_29] : memref<8x64xf32, #tpu.memory_space<vmem>>, vector<8x64xf32>
    tpu.vector_store %arg15[%c0_28, %c0_29], %45 {strides = array<i32>} : memref<8x64xf32, #tpu.memory_space<vmem>>, vector<8x64xf32>,
    %c0_30 = arith.constant 0 : index
    %c0_31 = arith.constant 0 : index
    %47 = vector.load %arg13[%c0_30, %c0_31] : memref<8x1xf32, #tpu.memory_space<vmem>>, vector<8x1xf32>
    tpu.vector_store %arg13[%c0_30, %c0_31], %24 {strides = array<i32>} : memref<8x1xf32, #tpu.memory_space<vmem>>, vector<8x1xf32>,
    %c1_i32 = arith.constant 1 : i32
    %48 = arith.cmpi eq, %arg1, %c1_i32 : i32
    %49 = arith.extui %48 : i1 to i32
    %c0_i32_32 = arith.constant 0 : i32
    %50 = arith.cmpi ne, %49, %c0_i32_32 : i32
    scf.if %50 {
      %c2 = arith.constant 2 : index
      %c0_33 = arith.constant 0 : index
      %51 = vector.load %arg7[%c2, %c0_33] : memref<8x64xf32, #tpu.memory_space<vmem>>, vector<1x64xf32>
      %c3 = arith.constant 3 : index
      %c0_34 = arith.constant 0 : index
      %52 = vector.load %arg7[%c3, %c0_34] : memref<8x64xf32, #tpu.memory_space<vmem>>, vector<1x64xf32>
      %c4 = arith.constant 4 : index
      %c0_35 = arith.constant 0 : index
      %53 = vector.load %arg7[%c4, %c0_35] : memref<8x64xf32, #tpu.memory_space<vmem>>, vector<1x64xf32>
      %c5 = arith.constant 5 : index
      %c0_36 = arith.constant 0 : index
      %54 = vector.load %arg7[%c5, %c0_36] : memref<8x64xf32, #tpu.memory_space<vmem>>, vector<1x64xf32>
      %c0_37 = arith.constant 0 : index
      %c0_38 = arith.constant 0 : index
      %55 = vector.load %arg14[%c0_37, %c0_38] : memref<8x1xf32, #tpu.memory_space<vmem>>, vector<8x1xf32>
      %cst_39 = arith.constant 0.000000e+00 : f32
      %56 = vector.broadcast %cst_39 : f32 to vector<8x1xf32>
      %57 = arith.cmpf ogt, %55, %56 : vector<8x1xf32>
      %c0_40 = arith.constant 0 : index
      %c0_41 = arith.constant 0 : index
      %58 = vector.load %arg14[%c0_40, %c0_41] : memref<8x1xf32, #tpu.memory_space<vmem>>, vector<8x1xf32>
      %cst_42 = arith.constant 1.000000e+00 : f32
      %59 = vector.broadcast %cst_42 : f32 to vector<8x1xf32>
      %60 = arith.select %57, %58, %59 : vector<8x1xi1>, vector<8x1xf32>
      %c0_43 = arith.constant 0 : index
      %c0_44 = arith.constant 0 : index
      %61 = vector.load %arg15[%c0_43, %c0_44] : memref<8x64xf32, #tpu.memory_space<vmem>>, vector<8x64xf32>
      %62 = tpu.reciprocal %60 {approx = true} : vector<8x1xf32> -> vector<8x1xf32>
      %63 = vector.broadcast %62 : vector<8x1xf32> to vector<8x64xf32>
      %64 = arith.mulf %61, %63 : vector<8x64xf32>
      %65 = vector.broadcast %53 : vector<1x64xf32> to vector<8x64xf32>
      %66 = arith.subf %64, %65 : vector<8x64xf32>
      %cst_45 = arith.constant 9.99999974E-6 : f32
      %67 = vector.broadcast %cst_45 : f32 to vector<1x64xf32>
      %68 = arith.addf %54, %67 : vector<1x64xf32>
      %69 = math.rsqrt %68 : vector<1x64xf32>
      %70 = arith.mulf %51, %69 : vector<1x64xf32>
      %71 = vector.broadcast %70 : vector<1x64xf32> to vector<8x64xf32>
      %72 = arith.mulf %66, %71 : vector<8x64xf32>
      %73 = vector.broadcast %52 : vector<1x64xf32> to vector<8x64xf32>
      %74 = arith.addf %72, %73 : vector<8x64xf32>
      %c0_46 = arith.constant 0 : index
      %c0_47 = arith.constant 0 : index
      %75 = vector.load %arg11[%c0_46, %c0_47] : memref<8x64xf32, #tpu.memory_space<vmem>>, vector<8x64xf32>
      tpu.vector_store %arg11[%c0_46, %c0_47], %74 {strides = array<i32>} : memref<8x64xf32, #tpu.memory_space<vmem>>, vector<8x64xf32>,
      %c0_48 = arith.constant 0 : index
      %c0_49 = arith.constant 0 : index
      %76 = vector.load %arg13[%c0_48, %c0_49] : memref<8x1xf32, #tpu.memory_space<vmem>>, vector<8x1xf32>
      %c0_50 = arith.constant 0 : index
      %c0_51 = arith.constant 0 : index
      %77 = vector.load %arg9[%c0_50, %c0_51] : memref<8x1xf32, #tpu.memory_space<vmem>>, vector<8x1xf32>
      tpu.vector_store %arg9[%c0_50, %c0_51], %76 {strides = array<i32>} : memref<8x1xf32, #tpu.memory_space<vmem>>, vector<8x1xf32>,
      %c0_52 = arith.constant 0 : index
      %c0_53 = arith.constant 0 : index
      %78 = vector.load %arg14[%c0_52, %c0_53] : memref<8x1xf32, #tpu.memory_space<vmem>>, vector<8x1xf32>
      %c0_54 = arith.constant 0 : index
      %c0_55 = arith.constant 0 : index
      %79 = vector.load %arg10[%c0_54, %c0_55] : memref<8x1xf32, #tpu.memory_space<vmem>>, vector<8x1xf32>
      tpu.vector_store %arg10[%c0_54, %c0_55], %78 {strides = array<i32>} : memref<8x1xf32, #tpu.memory_space<vmem>>, vector<8x1xf32>,
    } else {
    }
    return
  }
  func.func @transform_0(%arg0: i32, %arg1: i32) -> (i32, i32) {
    %c0_i32 = arith.constant 0 : i32
    %c0_i32_0 = arith.constant 0 : i32
    return %arg0, %c0_i32 : i32, i32
  }
  func.func @transform_1(%arg0: i32, %arg1: i32) -> (i32, i32, i32) {
    %c0_i32 = arith.constant 0 : i32
    %c0_i32_0 = arith.constant 0 : i32
    return %arg0, %arg1, %c0_i32 : i32, i32, i32
  }
  func.func @transform_2(%arg0: i32, %arg1: i32) -> (i32, i32, i32) {
    %c0_i32 = arith.constant 0 : i32
    %c0_i32_0 = arith.constant 0 : i32
    return %arg0, %arg1, %c0_i32 : i32, i32, i32
  }
  func.func @transform_3(%arg0: i32, %arg1: i32) -> (i32, i32) {
    %c0_i32 = arith.constant 0 : i32
    return %arg0, %arg1 : i32, i32
  }
  func.func @transform_4(%arg0: i32, %arg1: i32) -> (i32, i32) {
    %c0_i32 = arith.constant 0 : i32
    %c0_i32_0 = arith.constant 0 : i32
    %c0_i32_1 = arith.constant 0 : i32
    return %c0_i32, %c0_i32_0 : i32, i32
  }
  func.func @transform_5(%arg0: i32, %arg1: i32) -> (i32, i32) {
    %c0_i32 = arith.constant 0 : i32
    %c0_i32_0 = arith.constant 0 : i32
    %c0_i32_1 = arith.constant 0 : i32
    return %c0_i32, %c0_i32_0 : i32, i32
  }
  func.func @transform_6(%arg0: i32, %arg1: i32) -> (i32, i32) {
    %c0_i32 = arith.constant 0 : i32
    return %arg0, %arg1 : i32, i32
  }
  func.func @transform_7(%arg0: i32, %arg1: i32) -> (i32, i32) {
    %c0_i32 = arith.constant 0 : i32
    %c0_i32_0 = arith.constant 0 : i32
    return %arg0, %c0_i32 : i32, i32
  }
  func.func @transform_8(%arg0: i32, %arg1: i32) -> (i32, i32) {
    %c0_i32 = arith.constant 0 : i32
    %c0_i32_0 = arith.constant 0 : i32
    return %arg0, %c0_i32 : i32, i32
  }
  func.func @transform_9(%arg0: i32, %arg1: i32) -> (i32, i32) {
    %c0_i32 = arith.constant 0 : i32
    %c0_i32_0 = arith.constant 0 : i32
    return %arg0, %c0_i32 : i32, i32
  }
}

</mosaic_0001>

<llo_original>
// kernel: tpu_custom_call.1
$region0: #{tpu_custom_call.1}
  #allocation0 [shape = 'u32[]', space=smem, size = 0x4, offset = 0x4, fixed_abs, tag = 'smem constant byte address 0x4 - core index']
  #allocation1 [shape = 'u32[144,128]{1,0:T(1,128)}', space=vmem, size = 0x12000, scoped, tag = 'internal scratch']
  #allocation2 [shape = 'f32[8,64]{1,0:T(8,128)}', space=vmem, size = 0x1000, scoped, tag = 'scratch operand']
  #allocation3 [shape = 'f32[8,1]{1,0:T(8,128)}', space=vmem, size = 0x1000, scoped, tag = 'scratch operand']
  #allocation4 [shape = 'f32[8,1]{1,0:T(8,128)}', space=vmem, size = 0x1000, scoped, tag = 'scratch operand']
  #allocation5 [shape = 'f32[8,64]{1,0:T(8,128)}', space=vmem, size = 0x1000, scoped, tag = 'scratch operand']
  %s0 = inlined_call_operand.vmem [shape: f32[8,64], index: 0, kind: input, shape index: {}]
  %s1 = inlined_call_operand.vmem [shape: bf16[8,256,64], index: 1, kind: input, shape index: {}]
  %s2 = inlined_call_operand.vmem [shape: bf16[8,256,64], index: 2, kind: input, shape index: {}]
  %s3 = inlined_call_operand.vmem [shape: s32[8,256], index: 3, kind: input, shape index: {}]
  %s4 = inlined_call_operand.vmem [shape: bf16[64,64], index: 4, kind: input, shape index: {}]
  %s5 = inlined_call_operand.vmem [shape: f32[8,64], index: 5, kind: input, shape index: {}]
  %s6 = inlined_call_operand.hbm [shape: f32[8,256], index: 6, kind: output, shape index: {0}]
  %s7 = inlined_call_operand.vmem [shape: f32[8,1], index: 7, kind: output, shape index: {1}]
  %s8 = inlined_call_operand.vmem [shape: f32[8,1], index: 8, kind: output, shape index: {2}]
  %s9 = inlined_call_operand.hbm [shape: f32[8,64], index: 9, kind: output, shape index: {3}]
  %10 = xla_tuple %s6, %s7, %s8, %s9
  %s11 = sld [smem:[#allocation0]]
  $region171: #{tpu_custom_call.1} parent=0
    _
  %s13 = ssub.s32 1, %s11
  %s14 = scalar_select 0, %s13, %s11
  $region1: #{tpu_custom_call.1} parent=0
    #allocation6 [shape = 'u8[524288]{0}', space=vmem, size = 0x80000, scoped, tag = 'input window, operand 1']
    #allocation7 [shape = 'u8[524288]{0}', space=vmem, size = 0x80000, scoped, tag = 'input window, operand 2']
    #allocation8 [shape = 'u8[8192]{0}', space=vmem, size = 0x2000, scoped, tag = 'output window, operand 0']
    #allocation9 [shape = 's32[2]{0}', space=sflag, size = 0x8, scoped, tag = 'scoped memory for tpu_custom_call.1']
    #allocation10 [shape = 'u8[4096]{0}', space=vmem, size = 0x1000, scoped, tag = 'output window, operand 3, single buffered']
    #allocation11 [shape = 's32[1]{0}', space=sflag, size = 0x4, scoped, tag = 'scoped memory for tpu_custom_call.1']
    %15 = vsyncpa [#allocation9], 0
    %s16 = scalar_lea.sflag [#allocation9], 1
    %17 = vsyncpa %s16, 0
    %18 = vsyncpa [#allocation11], 0
    loop: start=0, step=1, limit=4
    $region2: #{tpu_custom_call.1} parent=1 // loop_pre_header
      _
    $region3: #{tpu_custom_call.1} parent=1 // loop_header
      %s20 = sphi 0, %s24
      %p21 = scmp.ge.s32.totalorder %s20, 4
      %s27 = sphi 0, %s39
      %s28 = sphi 0, %s35
      %s29 = sphi 0, %s27
      %s30 = sphi 0, %s28
      %s31 = sphi 0, %s29
      %s32 = sphi 0, %s30
      %s42 = sphi 0, %s44
      %s45 = sphi 0, %s42
      %s46 = sphi 0, %s45
      %s62 = sphi 0, %s46
      %s70 = sphi 0, %s72
      %s73 = sphi 0, %s70
      %s74 = sphi 0, %s73
      %s90 = sphi 0, %s74
      %s98 = sphi 0, %s100
      %s101 = sphi 0, %s98
      %s102 = sphi 0, %s101
      %s118 = sphi 0, %s102
      %s126 = sphi 0, %s128
      %s129 = sphi 0, %s126
      %s130 = sphi 0, %s129
      %s146 = sphi 0, %s130
      %s150 = sphi 0, %s150
      %s152 = sphi 0, %s150
      %s153 = sphi 0, %s152
      %s167 = sphi 0, %s153
      %s171 = sphi 0, %s171
      %s173 = sphi 0, %s171
      %s174 = sphi 0, %s173
      %s188 = sphi 0, %s174
      %s196 = sphi 0, %s198
      %s199 = sphi 0, %s196
      %s200 = sphi 0, %s199
      %s216 = sphi 0, %s200
      %s222 = sphi 0, %s224
      %s225 = sphi 0, %s222
      %s226 = sphi 0, %s225
      %s242 = sphi 0, %s226
      %s248 = sphi 0, %s250
      %s251 = sphi 0, %s248
      %s252 = sphi 0, %s251
      %s268 = sphi 0, %s252
      %s274 = sphi 0, %s276
      %s277 = sphi 0, %s274
      %s278 = sphi 0, %s277
      %s294 = sphi 0, %s278
    $region4: #{tpu_custom_call.1} parent=1 // loop_header_branch
      %23 = sbr.rel (%p21) target = $region8
    $region5: #{tpu_custom_call.1} parent=1 // loop_body
      %s25 = ssub.s32 %s20, 1
      %s26 = ssub.s32 %s20, 2
      %s33 = sadd.s32 1, %s28
      %p34 = scmp.ge.s32.totalorder %s33, 2
      %s35 = scalar_select %p34, 0, %s33
      %s36 = sadd.s32 1, %s27
      %s37 = scalar_select %p34, %s36, %s27
      %p38 = scmp.ge.s32.totalorder %s37, 1
      %s39 = scalar_select %p38, 0, %s37
      %s40 = ssub.s32 %s27, %s39
      %p41 = scmp.eq.s32.totalorder %s40, 0
      %s43 = sadd.s32 %s42, 1
      %s44 = scalar_select %p41, %s42, %s43
      %p47 = pneg %p41
      %p48 = scmp.eq.s32.totalorder %s20, 1
      %p49 = por %p47, %p48
      %p50 = scmp.ne.s32.totalorder %s42, %s45
      %p51 = scmp.eq.s32.totalorder %s20, 0
      %p52 = por %p50, %p51
      %p53 = scmp.ne.s32.totalorder %s42, %s45
      %p54 = scmp.eq.s32.totalorder %s25, 1
      %p55 = por %p53, %p54
      %p56 = scmp.ne.s32.totalorder %s45, %s46
      %p57 = scmp.eq.s32.totalorder %s25, 0
      %p58 = por %p56, %p57
      %p59 = scmp.ne.s32.totalorder %s45, %s46
      %p60 = scmp.eq.s32.totalorder %s26, 1
      %p61 = por %p59, %p60
      %p63 = scmp.ne.s32.totalorder %s46, %s62
      %p64 = scmp.eq.s32.totalorder %s26, 0
      %p65 = por %p63, %p64
      %s66 = ssub.s32 %s27, %s39
      %s67 = ssub.s32 %s28, %s35
      %s68 = sor.u32 %s66, %s67
      %p69 = scmp.eq.s32.totalorder %s68, 0
      %s71 = sadd.s32 %s70, 1
      %s72 = scalar_select %p69, %s70, %s71
      %p75 = pneg %p69
      %p76 = scmp.eq.s32.totalorder %s20, 1
      %p77 = por %p75, %p76
      %p78 = scmp.ne.s32.totalorder %s70, %s73
      %p79 = scmp.eq.s32.totalorder %s20, 0
      %p80 = por %p78, %p79
      %p81 = scmp.ne.s32.totalorder %s70, %s73
      %p82 = scmp.eq.s32.totalorder %s25, 1
      %p83 = por %p81, %p82
      %p84 = scmp.ne.s32.totalorder %s73, %s74
      %p85 = scmp.eq.s32.totalorder %s25, 0
      %p86 = por %p84, %p85
      %p87 = scmp.ne.s32.totalorder %s73, %s74
      %p88 = scmp.eq.s32.totalorder %s26, 1
      %p89 = por %p87, %p88
      %p91 = scmp.ne.s32.totalorder %s74, %s90
      %p92 = scmp.eq.s32.totalorder %s26, 0
      %p93 = por %p91, %p92
      %s94 = ssub.s32 %s27, %s39
      %s95 = ssub.s32 %s28, %s35
      %s96 = sor.u32 %s94, %s95
      %p97 = scmp.eq.s32.totalorder %s96, 0
      %s99 = sadd.s32 %s98, 1
      %s100 = scalar_select %p97, %s98, %s99
      %p103 = pneg %p97
      %p104 = scmp.eq.s32.totalorder %s20, 1
      %p105 = por %p103, %p104
      %p106 = scmp.ne.s32.totalorder %s98, %s101
      %p107 = scmp.eq.s32.totalorder %s20, 0
      %p108 = por %p106, %p107
      %p109 = scmp.ne.s32.totalorder %s98, %s101
      %p110 = scmp.eq.s32.totalorder %s25, 1
      %p111 = por %p109, %p110
      %p112 = scmp.ne.s32.totalorder %s101, %s102
      %p113 = scmp.eq.s32.totalorder %s25, 0
      %p114 = por %p112, %p113
      %p115 = scmp.ne.s32.totalorder %s101, %s102
      %p116 = scmp.eq.s32.totalorder %s26, 1
      %p117 = por %p115, %p116
      %p119 = scmp.ne.s32.totalorder %s102, %s118
      %p120 = scmp.eq.s32.totalorder %s26, 0
      %p121 = por %p119, %p120
      %s122 = ssub.s32 %s27, %s39
      %s123 = ssub.s32 %s28, %s35
      %s124 = sor.u32 %s122, %s123
      %p125 = scmp.eq.s32.totalorder %s124, 0
      %s127 = sadd.s32 %s126, 1
      %s128 = scalar_select %p125, %s126, %s127
      %p131 = pneg %p125
      %p132 = scmp.eq.s32.totalorder %s20, 1
      %p133 = por %p131, %p132
      %p134 = scmp.ne.s32.totalorder %s126, %s129
      %p135 = scmp.eq.s32.totalorder %s20, 0
      %p136 = por %p134, %p135
      %p137 = scmp.ne.s32.totalorder %s126, %s129
      %p138 = scmp.eq.s32.totalorder %s25, 1
      %p139 = por %p137, %p138
      %p140 = scmp.ne.s32.totalorder %s129, %s130
      %p141 = scmp.eq.s32.totalorder %s25, 0
      %p142 = por %p140, %p141
      %p143 = scmp.ne.s32.totalorder %s129, %s130
      %p144 = scmp.eq.s32.totalorder %s26, 1
      %p145 = por %p143, %p144
      %p147 = scmp.ne.s32.totalorder %s130, %s146
      %p148 = scmp.eq.s32.totalorder %s26, 0
      %p149 = por %p147, %p148
      %s151 = sadd.s32 %s150, 1
      %p154 = scmp.eq.s32.totalorder %s20, 1
      %p155 = scmp.ne.s32.totalorder %s150, %s152
      %p156 = scmp.eq.s32.totalorder %s20, 0
      %p157 = por %p155, %p156
      %p158 = scmp.ne.s32.totalorder %s150, %s152
      %p159 = scmp.eq.s32.totalorder %s25, 1
      %p160 = por %p158, %p159
      %p161 = scmp.ne.s32.totalorder %s152, %s153
      %p162 = scmp.eq.s32.totalorder %s25, 0
      %p163 = por %p161, %p162
      %p164 = scmp.ne.s32.totalorder %s152, %s153
      %p165 = scmp.eq.s32.totalorder %s26, 1
      %p166 = por %p164, %p165
      %p168 = scmp.ne.s32.totalorder %s153, %s167
      %p169 = scmp.eq.s32.totalorder %s26, 0
      %p170 = por %p168, %p169
      %s172 = sadd.s32 %s171, 1
      %p175 = scmp.eq.s32.totalorder %s20, 1
      %p176 = scmp.ne.s32.totalorder %s171, %s173
      %p177 = scmp.eq.s32.totalorder %s20, 0
      %p178 = por %p176, %p177
      %p179 = scmp.ne.s32.totalorder %s171, %s173
      %p180 = scmp.eq.s32.totalorder %s25, 1
      %p181 = por %p179, %p180
      %p182 = scmp.ne.s32.totalorder %s173, %s174
      %p183 = scmp.eq.s32.totalorder %s25, 0
      %p184 = por %p182, %p183
      %p185 = scmp.ne.s32.totalorder %s173, %s174
      %p186 = scmp.eq.s32.totalorder %s26, 1
      %p187 = por %p185, %p186
      %p189 = scmp.ne.s32.totalorder %s174, %s188
      %p190 = scmp.eq.s32.totalorder %s26, 0
      %p191 = por %p189, %p190
      %s192 = ssub.s32 %s27, %s39
      %s193 = ssub.s32 %s28, %s35
      %s194 = sor.u32 %s192, %s193
      %p195 = scmp.eq.s32.totalorder %s194, 0
      %s197 = sadd.s32 %s196, 1
      %s198 = scalar_select %p195, %s196, %s197
      %p201 = pneg %p195
      %p202 = scmp.eq.s32.totalorder %s20, 1
      %p203 = por %p201, %p202
      %p204 = scmp.ne.s32.totalorder %s196, %s199
      %p205 = scmp.eq.s32.totalorder %s20, 0
      %p206 = por %p204, %p205
      %p207 = scmp.ne.s32.totalorder %s196, %s199
      %p208 = scmp.eq.s32.totalorder %s25, 1
      %p209 = por %p207, %p208
      %p210 = scmp.ne.s32.totalorder %s199, %s200
      %p211 = scmp.eq.s32.totalorder %s25, 0
      %p212 = por %p210, %p211
      %p213 = scmp.ne.s32.totalorder %s199, %s200
      %p214 = scmp.eq.s32.totalorder %s26, 1
      %p215 = por %p213, %p214
      %p217 = scmp.ne.s32.totalorder %s200, %s216
      %p218 = scmp.eq.s32.totalorder %s26, 0
      %p219 = por %p217, %p218
      %s220 = ssub.s32 %s27, %s39
      %p221 = scmp.eq.s32.totalorder %s220, 0
      %s223 = sadd.s32 %s222, 1
      %s224 = scalar_select %p221, %s222, %s223
      %p227 = pneg %p221
      %p228 = scmp.eq.s32.totalorder %s20, 1
      %p229 = por %p227, %p228
      %p230 = scmp.ne.s32.totalorder %s222, %s225
      %p231 = scmp.eq.s32.totalorder %s20, 0
      %p232 = por %p230, %p231
      %p233 = scmp.ne.s32.totalorder %s222, %s225
      %p234 = scmp.eq.s32.totalorder %s25, 1
      %p235 = por %p233, %p234
      %p236 = scmp.ne.s32.totalorder %s225, %s226
      %p237 = scmp.eq.s32.totalorder %s25, 0
      %p238 = por %p236, %p237
      %p239 = scmp.ne.s32.totalorder %s225, %s226
      %p240 = scmp.eq.s32.totalorder %s26, 1
      %p241 = por %p239, %p240
      %p243 = scmp.ne.s32.totalorder %s226, %s242
      %p244 = scmp.eq.s32.totalorder %s26, 0
      %p245 = por %p243, %p244
      %s246 = ssub.s32 %s27, %s39
      %p247 = scmp.eq.s32.totalorder %s246, 0
      %s249 = sadd.s32 %s248, 1
      %s250 = scalar_select %p247, %s248, %s249
      %p253 = pneg %p247
      %p254 = scmp.eq.s32.totalorder %s20, 1
      %p255 = por %p253, %p254
      %p256 = scmp.ne.s32.totalorder %s248, %s251
      %p257 = scmp.eq.s32.totalorder %s20, 0
      %p258 = por %p256, %p257
      %p259 = scmp.ne.s32.totalorder %s248, %s251
      %p260 = scmp.eq.s32.totalorder %s25, 1
      %p261 = por %p259, %p260
      %p262 = scmp.ne.s32.totalorder %s251, %s252
      %p263 = scmp.eq.s32.totalorder %s25, 0
      %p264 = por %p262, %p263
      %p265 = scmp.ne.s32.totalorder %s251, %s252
      %p266 = scmp.eq.s32.totalorder %s26, 1
      %p267 = por %p265, %p266
      %p269 = scmp.ne.s32.totalorder %s252, %s268
      %p270 = scmp.eq.s32.totalorder %s26, 0
      %p271 = por %p269, %p270
      %s272 = ssub.s32 %s27, %s39
      %p273 = scmp.eq.s32.totalorder %s272, 0
      %s275 = sadd.s32 %s274, 1
      %s276 = scalar_select %p273, %s274, %s275
      %p279 = pneg %p273
      %p280 = scmp.eq.s32.totalorder %s20, 1
      %p281 = por %p279, %p280
      %p282 = scmp.ne.s32.totalorder %s274, %s277
      %p283 = scmp.eq.s32.totalorder %s20, 0
      %p284 = por %p282, %p283
      %p285 = scmp.ne.s32.totalorder %s274, %s277
      %p286 = scmp.eq.s32.totalorder %s25, 1
      %p287 = por %p285, %p286
      %p288 = scmp.ne.s32.totalorder %s277, %s278
      %p289 = scmp.eq.s32.totalorder %s25, 0
      %p290 = por %p288, %p289
      %p291 = scmp.ne.s32.totalorder %s277, %s278
      %p292 = scmp.eq.s32.totalorder %s26, 1
      %p293 = por %p291, %p292
      %p295 = scmp.ne.s32.totalorder %s278, %s294
      %p296 = scmp.eq.s32.totalorder %s26, 0
      %p297 = por %p295, %p296
      %p298 = scmp.le.s32.totalorder 1, %s20
      %p299 = scmp.lt.s32.totalorder %s20, 3
      %p300 = pnand %p298, %p299
      %p301 = pneg %p300
      // Predicated region
      $region9: #{tpu_custom_call.1} parent=5 // pred_check
        _
      $region10: #{tpu_custom_call.1} parent=5 // pred_check_branch
        %303 = sbr.rel (%p300) target = $region12
      $region11: #{tpu_custom_call.1} parent=5 // pred_region
        %s304 = ssub.s32 %s20, 1
        // Predicated region
        $region13: #{tpu_custom_call.1} parent=11 // pred_check
          %p305 = pneg %p58
        $region14: #{tpu_custom_call.1} parent=11 // pred_check_branch
          %307 = sbr.rel (%p305) target = $region16
        $region15: #{tpu_custom_call.1} parent=11 // pred_region
          %p308 = scmp.lt.s32.totalorder %s29, 0
          %s309 = scalar_select %p308, %s29, 0
          %s310 = smul.addr %s309, 8
          %s311 = scalar_lea.vmem %s0, %s310
        $region16: #{tpu_custom_call.1} parent=11 // pred_fallthru
          _
        // Predicated region
        $region17: #{tpu_custom_call.1} parent=11 // pred_check
          %p312 = pneg %p163
        $region18: #{tpu_custom_call.1} parent=11 // pred_check_branch
          %314 = sbr.rel (%p312) target = $region20
        $region19: #{tpu_custom_call.1} parent=11 // pred_region
          _
        $region20: #{tpu_custom_call.1} parent=11 // pred_fallthru
          _
        // Predicated region
        $region21: #{tpu_custom_call.1} parent=11 // pred_check
          %p315 = pneg %p184
        $region22: #{tpu_custom_call.1} parent=11 // pred_check_branch
          %317 = sbr.rel (%p315) target = $region24
        $region23: #{tpu_custom_call.1} parent=11 // pred_region
          _
        $region24: #{tpu_custom_call.1} parent=11 // pred_fallthru
          _
      $region12: #{tpu_custom_call.1} parent=5 // pred_fallthru
        _
      %p318 = scmp.lt.s32.totalorder %s20, 2
      // Predicated region
      $region25: #{tpu_custom_call.1} parent=5 // pred_check
        %p319 = pneg %p318
      $region26: #{tpu_custom_call.1} parent=5 // pred_check_branch
        %321 = sbr.rel (%p319) target = $region28
      $region27: #{tpu_custom_call.1} parent=5 // pred_region
        // Predicated region
        $region29: #{tpu_custom_call.1} parent=27 // pred_check
          %p322 = pneg %p80
        $region30: #{tpu_custom_call.1} parent=27 // pred_check_branch
          %324 = sbr.rel (%p322) target = $region32
        $region31: #{tpu_custom_call.1} parent=27 // pred_region
          %s325 = sand.u32 %s70, 1
          %s326 = sand.u32 %s70, 1
          %s327 = smul.addr %s326, 512
          %s328 = scalar_lea.vmem [#allocation6], %s327
          %s329 = smul.u32 8, %s27
          %s330 = smul.u32 16, %s28
          %s331 = smul.addr %s329, 32
          %s332 = sadd.s32 %s330, %s331
          %s333 = smul.addr %s332, 4
          %s334 = scalar_lea.vmem %s1, %s333
          // Predicated region
          $region33: #{tpu_custom_call.1} parent=31 // pred_check
            _
          $region34: #{tpu_custom_call.1} parent=31 // pred_check_branch
            %336 = sbr.rel (0) target = $region36
          $region35: #{tpu_custom_call.1} parent=31 // pred_region
            // Predicated region
            $region37: #{tpu_custom_call.1} parent=35 // pred_check
              _
            $region38: #{tpu_custom_call.1} parent=35 // pred_check_branch
              %338 = sbr.rel target = $region40
            $region39: #{tpu_custom_call.1} parent=35 // pred_region
              // Predicated region
              $region52: #{tpu_custom_call.1} parent=39 // pred_check
                _
              $region53: #{tpu_custom_call.1} parent=39 // pred_check_branch
                %607 = sbr.rel (0) target = $region55
              $region54: #{tpu_custom_call.1} parent=39 // pred_region
                loop: start=0, step=1, limit=1
                $region56: #{tpu_custom_call.1} parent=54 // loop_pre_header
                  _
                $region57: #{tpu_custom_call.1} parent=54 // loop_header
                  %s609 = sphi 0, %s613
                  %p610 = scmp.ge.s32.totalorder %s609, 1
                  %s614 = sphi %s334, %s334
                  %s615 = sphi %s328, %s328
                $region58: #{tpu_custom_call.1} parent=54 // loop_header_branch
                  %612 = sbr.rel (%p610) target = $region62
                $region59: #{tpu_custom_call.1} parent=54 // loop_body
                  _
                $region60: #{tpu_custom_call.1} parent=54 // loop_footer
                  %s613 = sadd.s32 1, %s609
                $region61: #{tpu_custom_call.1} parent=54 // loop_footer_branch
                  %608 = sbr.rel target = $region57
                $region62: #{tpu_custom_call.1} parent=54 // loop_exit
                  _
                loop: start=0, step=1, limit=1
                $region63: #{tpu_custom_call.1} parent=54 // loop_pre_header
                  _
                $region64: #{tpu_custom_call.1} parent=54 // loop_header
                  %s618 = sphi 0, %s622
                  %p619 = scmp.ge.s32.totalorder %s618, 1
                  %s623 = sphi %s334, %s334
                  %s624 = sphi %s328, %s328
                $region65: #{tpu_custom_call.1} parent=54 // loop_header_branch
                  %621 = sbr.rel (%p619) target = $region69
                $region66: #{tpu_custom_call.1} parent=54 // loop_body
                  %v625 = vld [vmem:[%s623] sm:$0xf]
                  %626 = vst [vmem:[%s624] sm:$0xf] %v625
                  %v627 = vld [vmem:[%s623 + $0x4] sm:$0xf]
                  %628 = vst [vmem:[%s624 + $0x4] sm:$0xf] %v627
                  %v629 = vld [vmem:[%s623 + $0x8] sm:$0xf]
                  %630 = vst [vmem:[%s624 + $0x8] sm:$0xf] %v629
                  %v631 = vld [vmem:[%s623 + $0xc] sm:$0xf]
                  %632 = vst [vmem:[%s624 + $0xc] sm:$0xf] %v631
                  %v633 = vld [vmem:[%s623 + $0x10] sm:$0xf]
                  %634 = vst [vmem:[%s624 + $0x10] sm:$0xf] %v633
                  %v635 = vld [vmem:[%s623 + $0x14] sm:$0xf]
                  %636 = vst [vmem:[%s624 + $0x14] sm:$0xf] %v635
                  %v637 = vld [vmem:[%s623 + $0x18] sm:$0xf]
                  %638 = vst [vmem:[%s624 + $0x18] sm:$0xf] %v637
                  %v639 = vld [vmem:[%s623 + $0x1c] sm:$0xf]
                  %640 = vst [vmem:[%s624 + $0x1c] sm:$0xf] %v639
                  %v641 = vld [vmem:[%s623 + $0x20] sm:$0xf]
                  %642 = vst [vmem:[%s624 + $0x20] sm:$0xf] %v641
                  %v643 = vld [vmem:[%s623 + $0x24] sm:$0xf]
                  %644 = vst [vmem:[%s624 + $0x24] sm:$0xf] %v643
                  %v645 = vld [vmem:[%s623 + $0x28] sm:$0xf]
                  %646 = vst [vmem:[%s624 + $0x28] sm:$0xf] %v645
                  %v647 = vld [vmem:[%s623 + $0x2c] sm:$0xf]
                  %648 = vst [vmem:[%s624 + $0x2c] sm:$0xf] %v647
                  %v649 = vld [vmem:[%s623 + $0x30] sm:$0xf]
                  %650 = vst [vmem:[%s624 + $0x30] sm:$0xf] %v649
                  %v651 = vld [vmem:[%s623 + $0x34] sm:$0xf]
                  %652 = vst [vmem:[%s624 + $0x34] sm:$0xf] %v651
                  %v653 = vld [vmem:[%s623 + $0x38] sm:$0xf]
                  %654 = vst [vmem:[%s624 + $0x38] sm:$0xf] %v653
                  %v655 = vld [vmem:[%s623 + $0x3c] sm:$0xf]
                  %656 = vst [vmem:[%s624 + $0x3c] sm:$0xf] %v655
                  %v657 = vld [vmem:[%s623 + $0x80] sm:$0xf]
                  %658 = vst [vmem:[%s624 + $0x40] sm:$0xf] %v657
                  %v659 = vld [vmem:[%s623 + $0x84] sm:$0xf]
                  %660 = vst [vmem:[%s624 + $0x44] sm:$0xf] %v659
                  %v661 = vld [vmem:[%s623 + $0x88] sm:$0xf]
                  %662 = vst [vmem:[%s624 + $0x48] sm:$0xf] %v661
                  %v663 = vld [vmem:[%s623 + $0x8c] sm:$0xf]
                  %664 = vst [vmem:[%s624 + $0x4c] sm:$0xf] %v663
                  %v665 = vld [vmem:[%s623 + $0x90] sm:$0xf]
                  %666 = vst [vmem:[%s624 + $0x50] sm:$0xf] %v665
                  %v667 = vld [vmem:[%s623 + $0x94] sm:$0xf]
                  %668 = vst [vmem:[%s624 + $0x54] sm:$0xf] %v667
                  %v669 = vld [vmem:[%s623 + $0x98] sm:$0xf]
                  %670 = vst [vmem:[%s624 + $0x58] sm:$0xf] %v669
                  %v671 = vld [vmem:[%s623 + $0x9c] sm:$0xf]
                  %672 = vst [vmem:[%s624 + $0x5c] sm:$0xf] %v671
                  %v673 = vld [vmem:[%s623 + $0xa0] sm:$0xf]
                  %674 = vst [vmem:[%s624 + $0x60] sm:$0xf] %v673
                  %v675 = vld [vmem:[%s623 + $0xa4] sm:$0xf]
                  %676 = vst [vmem:[%s624 + $0x64] sm:$0xf] %v675
                  %v677 = vld [vmem:[%s623 + $0xa8] sm:$0xf]
                  %678 = vst [vmem:[%s624 + $0x68] sm:$0xf] %v677
                  %v679 = vld [vmem:[%s623 + $0xac] sm:$0xf]
                  %680 = vst [vmem:[%s624 + $0x6c] sm:$0xf] %v679
                  %v681 = vld [vmem:[%s623 + $0xb0] sm:$0xf]
                  %682 = vst [vmem:[%s624 + $0x70] sm:$0xf] %v681
                  %v683 = vld [vmem:[%s623 + $0xb4] sm:$0xf]
                  %684 = vst [vmem:[%s624 + $0x74] sm:$0xf] %v683
                  %v685 = vld [vmem:[%s623 + $0xb8] sm:$0xf]
                  %686 = vst [vmem:[%s624 + $0x78] sm:$0xf] %v685
                  %v687 = vld [vmem:[%s623 + $0xbc] sm:$0xf]
                  %688 = vst [vmem:[%s624 + $0x7c] sm:$0xf] %v687
                  %v689 = vld [vmem:[%s623 + $0x100] sm:$0xf]
                  %690 = vst [vmem:[%s624 + $0x80] sm:$0xf] %v689
                  %v691 = vld [vmem:[%s623 + $0x104] sm:$0xf]
                  %692 = vst [vmem:[%s624 + $0x84] sm:$0xf] %v691
                  %v693 = vld [vmem:[%s623 + $0x108] sm:$0xf]
                  %694 = vst [vmem:[%s624 + $0x88] sm:$0xf] %v693
                  %v695 = vld [vmem:[%s623 + $0x10c] sm:$0xf]
                  %696 = vst [vmem:[%s624 + $0x8c] sm:$0xf] %v695
                  %v697 = vld [vmem:[%s623 + $0x110] sm:$0xf]
                  %698 = vst [vmem:[%s624 + $0x90] sm:$0xf] %v697
                  %v699 = vld [vmem:[%s623 + $0x114] sm:$0xf]
                  %700 = vst [vmem:[%s624 + $0x94] sm:$0xf] %v699
                  %v701 = vld [vmem:[%s623 + $0x118] sm:$0xf]
                  %702 = vst [vmem:[%s624 + $0x98] sm:$0xf] %v701
                  %v703 = vld [vmem:[%s623 + $0x11c] sm:$0xf]
                  %704 = vst [vmem:[%s624 + $0x9c] sm:$0xf] %v703
                  %v705 = vld [vmem:[%s623 + $0x120] sm:$0xf]
                  %706 = vst [vmem:[%s624 + $0xa0] sm:$0xf] %v705
                  %v707 = vld [vmem:[%s623 + $0x124] sm:$0xf]
                  %708 = vst [vmem:[%s624 + $0xa4] sm:$0xf] %v707
                  %v709 = vld [vmem:[%s623 + $0x128] sm:$0xf]
                  %710 = vst [vmem:[%s624 + $0xa8] sm:$0xf] %v709
                  %v711 = vld [vmem:[%s623 + $0x12c] sm:$0xf]
                  %712 = vst [vmem:[%s624 + $0xac] sm:$0xf] %v711
                  %v713 = vld [vmem:[%s623 + $0x130] sm:$0xf]
                  %714 = vst [vmem:[%s624 + $0xb0] sm:$0xf] %v713
                  %v715 = vld [vmem:[%s623 + $0x134] sm:$0xf]
                  %716 = vst [vmem:[%s624 + $0xb4] sm:$0xf] %v715
                  %v717 = vld [vmem:[%s623 + $0x138] sm:$0xf]
                  %718 = vst [vmem:[%s624 + $0xb8] sm:$0xf] %v717
                  %v719 = vld [vmem:[%s623 + $0x13c] sm:$0xf]
                  %720 = vst [vmem:[%s624 + $0xbc] sm:$0xf] %v719
                  %v721 = vld [vmem:[%s623 + $0x180] sm:$0xf]
                  %722 = vst [vmem:[%s624 + $0xc0] sm:$0xf] %v721
                  %v723 = vld [vmem:[%s623 + $0x184] sm:$0xf]
                  %724 = vst [vmem:[%s624 + $0xc4] sm:$0xf] %v723
                  %v725 = vld [vmem:[%s623 + $0x188] sm:$0xf]
                  %726 = vst [vmem:[%s624 + $0xc8] sm:$0xf] %v725
                  %v727 = vld [vmem:[%s623 + $0x18c] sm:$0xf]
                  %728 = vst [vmem:[%s624 + $0xcc] sm:$0xf] %v727
                  %v729 = vld [vmem:[%s623 + $0x190] sm:$0xf]
                  %730 = vst [vmem:[%s624 + $0xd0] sm:$0xf] %v729
                  %v731 = vld [vmem:[%s623 + $0x194] sm:$0xf]
                  %732 = vst [vmem:[%s624 + $0xd4] sm:$0xf] %v731
                  %v733 = vld [vmem:[%s623 + $0x198] sm:$0xf]
                  %734 = vst [vmem:[%s624 + $0xd8] sm:$0xf] %v733
                  %v735 = vld [vmem:[%s623 + $0x19c] sm:$0xf]
                  %736 = vst [vmem:[%s624 + $0xdc] sm:$0xf] %v735
                  %v737 = vld [vmem:[%s623 + $0x1a0] sm:$0xf]
                  %738 = vst [vmem:[%s624 + $0xe0] sm:$0xf] %v737
                  %v739 = vld [vmem:[%s623 + $0x1a4] sm:$0xf]
                  %740 = vst [vmem:[%s624 + $0xe4] sm:$0xf] %v739
                  %v741 = vld [vmem:[%s623 + $0x1a8] sm:$0xf]
                  %742 = vst [vmem:[%s624 + $0xe8] sm:$0xf] %v741
                  %v743 = vld [vmem:[%s623 + $0x1ac] sm:$0xf]
                  %744 = vst [vmem:[%s624 + $0xec] sm:$0xf] %v743
                  %v745 = vld [vmem:[%s623 + $0x1b0] sm:$0xf]
                  %746 = vst [vmem:[%s624 + $0xf0] sm:$0xf] %v745
                  %v747 = vld [vmem:[%s623 + $0x1b4] sm:$0xf]
                  %748 = vst [vmem:[%s624 + $0xf4] sm:$0xf] %v747
                  %v749 = vld [vmem:[%s623 + $0x1b8] sm:$0xf]
                  %750 = vst [vmem:[%s624 + $0xf8] sm:$0xf] %v749
                  %v751 = vld [vmem:[%s623 + $0x1bc] sm:$0xf]
                  %752 = vst [vmem:[%s624 + $0xfc] sm:$0xf] %v751
                  %v753 = vld [vmem:[%s623 + $0x200] sm:$0xf]
                  %754 = vst [vmem:[%s624 + $0x100] sm:$0xf] %v753
                  %v755 = vld [vmem:[%s623 + $0x204] sm:$0xf]
                  %756 = vst [vmem:[%s624 + $0x104] sm:$0xf] %v755
                  %v757 = vld [vmem:[%s623 + $0x208] sm:$0xf]
                  %758 = vst [vmem:[%s624 + $0x108] sm:$0xf] %v757
                  %v759 = vld [vmem:[%s623 + $0x20c] sm:$0xf]
                  %760 = vst [vmem:[%s624 + $0x10c] sm:$0xf] %v759
                  %v761 = vld [vmem:[%s623 + $0x210] sm:$0xf]
                  %762 = vst [vmem:[%s624 + $0x110] sm:$0xf] %v761
                  %v763 = vld [vmem:[%s623 + $0x214] sm:$0xf]
                  %764 = vst [vmem:[%s624 + $0x114] sm:$0xf] %v763
                  %v765 = vld [vmem:[%s623 + $0x218] sm:$0xf]
                  %766 = vst [vmem:[%s624 + $0x118] sm:$0xf] %v765
                  %v767 = vld [vmem:[%s623 + $0x21c] sm:$0xf]
                  %768 = vst [vmem:[%s624 + $0x11c] sm:$0xf] %v767
                  %v769 = vld [vmem:[%s623 + $0x220] sm:$0xf]
                  %770 = vst [vmem:[%s624 + $0x120] sm:$0xf] %v769
                  %v771 = vld [vmem:[%s623 + $0x224] sm:$0xf]
                  %772 = vst [vmem:[%s624 + $0x124] sm:$0xf] %v771
                  %v773 = vld [vmem:[%s623 + $0x228] sm:$0xf]
                  %774 = vst [vmem:[%s624 + $0x128] sm:$0xf] %v773
                  %v775 = vld [vmem:[%s623 + $0x22c] sm:$0xf]
                  %776 = vst [vmem:[%s624 + $0x12c] sm:$0xf] %v775
                  %v777 = vld [vmem:[%s623 + $0x230] sm:$0xf]
                  %778 = vst [vmem:[%s624 + $0x130] sm:$0xf] %v777
                  %v779 = vld [vmem:[%s623 + $0x234] sm:$0xf]
                  %780 = vst [vmem:[%s624 + $0x134] sm:$0xf] %v779
                  %v781 = vld [vmem:[%s623 + $0x238] sm:$0xf]
                  %782 = vst [vmem:[%s624 + $0x138] sm:$0xf] %v781
                  %v783 = vld [vmem:[%s623 + $0x23c] sm:$0xf]
                  %784 = vst [vmem:[%s624 + $0x13c] sm:$0xf] %v783
                  %v785 = vld [vmem:[%s623 + $0x280] sm:$0xf]
                  %786 = vst [vmem:[%s624 + $0x140] sm:$0xf] %v785
                  %v787 = vld [vmem:[%s623 + $0x284] sm:$0xf]
                  %788 = vst [vmem:[%s624 + $0x144] sm:$0xf] %v787
                  %v789 = vld [vmem:[%s623 + $0x288] sm:$0xf]
                  %790 = vst [vmem:[%s624 + $0x148] sm:$0xf] %v789
                  %v791 = vld [vmem:[%s623 + $0x28c] sm:$0xf]
                  %792 = vst [vmem:[%s624 + $0x14c] sm:$0xf] %v791
                  %v793 = vld [vmem:[%s623 + $0x290] sm:$0xf]
                  %794 = vst [vmem:[%s624 + $0x150] sm:$0xf] %v793
                  %v795 = vld [vmem:[%s623 + $0x294] sm:$0xf]
                  %796 = vst [vmem:[%s624 + $0x154] sm:$0xf] %v795
                  %v797 = vld [vmem:[%s623 + $0x298] sm:$0xf]
                  %798 = vst [vmem:[%s624 + $0x158] sm:$0xf] %v797
                  %v799 = vld [vmem:[%s623 + $0x29c] sm:$0xf]
                  %800 = vst [vmem:[%s624 + $0x15c] sm:$0xf] %v799
                  %v801 = vld [vmem:[%s623 + $0x2a0] sm:$0xf]
                  %802 = vst [vmem:[%s624 + $0x160] sm:$0xf] %v801
                  %v803 = vld [vmem:[%s623 + $0x2a4] sm:$0xf]
                  %804 = vst [vmem:[%s624 + $0x164] sm:$0xf] %v803
                  %v805 = vld [vmem:[%s623 + $0x2a8] sm:$0xf]
                  %806 = vst [vmem:[%s624 + $0x168] sm:$0xf] %v805
                  %v807 = vld [vmem:[%s623 + $0x2ac] sm:$0xf]
                  %808 = vst [vmem:[%s624 + $0x16c] sm:$0xf] %v807
                  %v809 = vld [vmem:[%s623 + $0x2b0] sm:$0xf]
                  %810 = vst [vmem:[%s624 + $0x170] sm:$0xf] %v809
                  %v811 = vld [vmem:[%s623 + $0x2b4] sm:$0xf]
                  %812 = vst [vmem:[%s624 + $0x174] sm:$0xf] %v811
                  %v813 = vld [vmem:[%s623 + $0x2b8] sm:$0xf]
                  %814 = vst [vmem:[%s624 + $0x178] sm:$0xf] %v813
                  %v815 = vld [vmem:[%s623 + $0x2bc] sm:$0xf]
                  %816 = vst [vmem:[%s624 + $0x17c] sm:$0xf] %v815
                  %v817 = vld [vmem:[%s623 + $0x300] sm:$0xf]
                  %818 = vst [vmem:[%s624 + $0x180] sm:$0xf] %v817
                  %v819 = vld [vmem:[%s623 + $0x304] sm:$0xf]
                  %820 = vst [vmem:[%s624 + $0x184] sm:$0xf] %v819
                  %v821 = vld [vmem:[%s623 + $0x308] sm:$0xf]
                  %822 = vst [vmem:[%s624 + $0x188] sm:$0xf] %v821
                  %v823 = vld [vmem:[%s623 + $0x30c] sm:$0xf]
                  %824 = vst [vmem:[%s624 + $0x18c] sm:$0xf] %v823
                  %v825 = vld [vmem:[%s623 + $0x310] sm:$0xf]
                  %826 = vst [vmem:[%s624 + $0x190] sm:$0xf] %v825
                  %v827 = vld [vmem:[%s623 + $0x314] sm:$0xf]
                  %828 = vst [vmem:[%s624 + $0x194] sm:$0xf] %v827
                  %v829 = vld [vmem:[%s623 + $0x318] sm:$0xf]
                  %830 = vst [vmem:[%s624 + $0x198] sm:$0xf] %v829
                  %v831 = vld [vmem:[%s623 + $0x31c] sm:$0xf]
                  %832 = vst [vmem:[%s624 + $0x19c] sm:$0xf] %v831
                  %v833 = vld [vmem:[%s623 + $0x320] sm:$0xf]
                  %834 = vst [vmem:[%s624 + $0x1a0] sm:$0xf] %v833
                  %v835 = vld [vmem:[%s623 + $0x324] sm:$0xf]
                  %836 = vst [vmem:[%s624 + $0x1a4] sm:$0xf] %v835
                  %v837 = vld [vmem:[%s623 + $0x328] sm:$0xf]
                  %838 = vst [vmem:[%s624 + $0x1a8] sm:$0xf] %v837
                  %v839 = vld [vmem:[%s623 + $0x32c] sm:$0xf]
                  %840 = vst [vmem:[%s624 + $0x1ac] sm:$0xf] %v839
                  %v841 = vld [vmem:[%s623 + $0x330] sm:$0xf]
                  %842 = vst [vmem:[%s624 + $0x1b0] sm:$0xf] %v841
                  %v843 = vld [vmem:[%s623 + $0x334] sm:$0xf]
                  %844 = vst [vmem:[%s624 + $0x1b4] sm:$0xf] %v843
                  %v845 = vld [vmem:[%s623 + $0x338] sm:$0xf]
                  %846 = vst [vmem:[%s624 + $0x1b8] sm:$0xf] %v845
                  %v847 = vld [vmem:[%s623 + $0x33c] sm:$0xf]
                  %848 = vst [vmem:[%s624 + $0x1bc] sm:$0xf] %v847
                  %v849 = vld [vmem:[%s623 + $0x380] sm:$0xf]
                  %850 = vst [vmem:[%s624 + $0x1c0] sm:$0xf] %v849
                  %v851 = vld [vmem:[%s623 + $0x384] sm:$0xf]
                  %852 = vst [vmem:[%s624 + $0x1c4] sm:$0xf] %v851
                  %v853 = vld [vmem:[%s623 + $0x388] sm:$0xf]
                  %854 = vst [vmem:[%s624 + $0x1c8] sm:$0xf] %v853
                  %v855 = vld [vmem:[%s623 + $0x38c] sm:$0xf]
                  %856 = vst [vmem:[%s624 + $0x1cc] sm:$0xf] %v855
                  %v857 = vld [vmem:[%s623 + $0x390] sm:$0xf]
                  %858 = vst [vmem:[%s624 + $0x1d0] sm:$0xf] %v857
                  %v859 = vld [vmem:[%s623 + $0x394] sm:$0xf]
                  %860 = vst [vmem:[%s624 + $0x1d4] sm:$0xf] %v859
                  %v861 = vld [vmem:[%s623 + $0x398] sm:$0xf]
                  %862 = vst [vmem:[%s624 + $0x1d8] sm:$0xf] %v861
                  %v863 = vld [vmem:[%s623 + $0x39c] sm:$0xf]
                  %864 = vst [vmem:[%s624 + $0x1dc] sm:$0xf] %v863
                  %v865 = vld [vmem:[%s623 + $0x3a0] sm:$0xf]
                  %866 = vst [vmem:[%s624 + $0x1e0] sm:$0xf] %v865
                  %v867 = vld [vmem:[%s623 + $0x3a4] sm:$0xf]
                  %868 = vst [vmem:[%s624 + $0x1e4] sm:$0xf] %v867
                  %v869 = vld [vmem:[%s623 + $0x3a8] sm:$0xf]
                  %870 = vst [vmem:[%s624 + $0x1e8] sm:$0xf] %v869
                  %v871 = vld [vmem:[%s623 + $0x3ac] sm:$0xf]
                  %872 = vst [vmem:[%s624 + $0x1ec] sm:$0xf] %v871
                  %v873 = vld [vmem:[%s623 + $0x3b0] sm:$0xf]
                  %874 = vst [vmem:[%s624 + $0x1f0] sm:$0xf] %v873
                  %v875 = vld [vmem:[%s623 + $0x3b4] sm:$0xf]
                  %876 = vst [vmem:[%s624 + $0x1f4] sm:$0xf] %v875
                  %v877 = vld [vmem:[%s623 + $0x3b8] sm:$0xf]
                  %878 = vst [vmem:[%s624 + $0x1f8] sm:$0xf] %v877
                  %v879 = vld [vmem:[%s623 + $0x3bc] sm:$0xf]
                  %880 = vst [vmem:[%s624 + $0x1fc] sm:$0xf] %v879
                $region67: #{tpu_custom_call.1} parent=54 // loop_footer
                  %s622 = sadd.s32 1, %s618
                $region68: #{tpu_custom_call.1} parent=54 // loop_footer_branch
                  %617 = sbr.rel target = $region64
                $region69: #{tpu_custom_call.1} parent=54 // loop_exit
                  _
              $region55: #{tpu_custom_call.1} parent=39 // pred_fallthru
                _
            $region40: #{tpu_custom_call.1} parent=35 // pred_fallthru
              _
            // Predicated region
            $region41: #{tpu_custom_call.1} parent=35 // pred_check
              _
            $region42: #{tpu_custom_call.1} parent=35 // pred_check_branch
              %340 = sbr.rel (0) target = $region44
            $region43: #{tpu_custom_call.1} parent=35 // pred_region
              loop: start=0, step=1, limit=1
              $region45: #{tpu_custom_call.1} parent=43 // loop_pre_header
                _
              $region46: #{tpu_custom_call.1} parent=43 // loop_header
                %s343 = sphi 0, %s347
                %p344 = scmp.ge.s32.totalorder %s343, 1
                %s348 = sphi %s334, %s334
                %s349 = sphi %s328, %s328
              $region47: #{tpu_custom_call.1} parent=43 // loop_header_branch
                %346 = sbr.rel (%p344) target = $region51
              $region48: #{tpu_custom_call.1} parent=43 // loop_body
                %v350 = vld [vmem:[%s348] sm:$0xf]
                %351 = vst [vmem:[%s349] sm:$0xf] %v350
                %v352 = vld [vmem:[%s348 + $0x4] sm:$0xf]
                %353 = vst [vmem:[%s349 + $0x4] sm:$0xf] %v352
                %v354 = vld [vmem:[%s348 + $0x8] sm:$0xf]
                %355 = vst [vmem:[%s349 + $0x8] sm:$0xf] %v354
                %v356 = vld [vmem:[%s348 + $0xc] sm:$0xf]
                %357 = vst [vmem:[%s349 + $0xc] sm:$0xf] %v356
                %v358 = vld [vmem:[%s348 + $0x10] sm:$0xf]
                %359 = vst [vmem:[%s349 + $0x10] sm:$0xf] %v358
                %v360 = vld [vmem:[%s348 + $0x14] sm:$0xf]
                %361 = vst [vmem:[%s349 + $0x14] sm:$0xf] %v360
                %v362 = vld [vmem:[%s348 + $0x18] sm:$0xf]
                %363 = vst [vmem:[%s349 + $0x18] sm:$0xf] %v362
                %v364 = vld [vmem:[%s348 + $0x1c] sm:$0xf]
                %365 = vst [vmem:[%s349 + $0x1c] sm:$0xf] %v364
                %v366 = vld [vmem:[%s348 + $0x20] sm:$0xf]
                %367 = vst [vmem:[%s349 + $0x20] sm:$0xf] %v366
                %v368 = vld [vmem:[%s348 + $0x24] sm:$0xf]
                %369 = vst [vmem:[%s349 + $0x24] sm:$0xf] %v368
                %v370 = vld [vmem:[%s348 + $0x28] sm:$0xf]
                %371 = vst [vmem:[%s349 + $0x28] sm:$0xf] %v370
                %v372 = vld [vmem:[%s348 + $0x2c] sm:$0xf]
                %373 = vst [vmem:[%s349 + $0x2c] sm:$0xf] %v372
                %v374 = vld [vmem:[%s348 + $0x30] sm:$0xf]
                %375 = vst [vmem:[%s349 + $0x30] sm:$0xf] %v374
                %v376 = vld [vmem:[%s348 + $0x34] sm:$0xf]
                %377 = vst [vmem:[%s349 + $0x34] sm:$0xf] %v376
                %v378 = vld [vmem:[%s348 + $0x38] sm:$0xf]
                %379 = vst [vmem:[%s349 + $0x38] sm:$0xf] %v378
                %v380 = vld [vmem:[%s348 + $0x3c] sm:$0xf]
                %381 = vst [vmem:[%s349 + $0x3c] sm:$0xf] %v380
                %v382 = vld [vmem:[%s348 + $0x80] sm:$0xf]
                %383 = vst [vmem:[%s349 + $0x40] sm:$0xf] %v382
                %v384 = vld [vmem:[%s348 + $0x84] sm:$0xf]
                %385 = vst [vmem:[%s349 + $0x44] sm:$0xf] %v384
                %v386 = vld [vmem:[%s348 + $0x88] sm:$0xf]
                %387 = vst [vmem:[%s349 + $0x48] sm:$0xf] %v386
                %v388 = vld [vmem:[%s348 + $0x8c] sm:$0xf]
                %389 = vst [vmem:[%s349 + $0x4c] sm:$0xf] %v388
                %v390 = vld [vmem:[%s348 + $0x90] sm:$0xf]
                %391 = vst [vmem:[%s349 + $0x50] sm:$0xf] %v390
                %v392 = vld [vmem:[%s348 + $0x94] sm:$0xf]
                %393 = vst [vmem:[%s349 + $0x54] sm:$0xf] %v392
                %v394 = vld [vmem:[%s348 + $0x98] sm:$0xf]
                %395 = vst [vmem:[%s349 + $0x58] sm:$0xf] %v394
                %v396 = vld [vmem:[%s348 + $0x9c] sm:$0xf]
                %397 = vst [vmem:[%s349 + $0x5c] sm:$0xf] %v396
                %v398 = vld [vmem:[%s348 + $0xa0] sm:$0xf]
                %399 = vst [vmem:[%s349 + $0x60] sm:$0xf] %v398
                %v400 = vld [vmem:[%s348 + $0xa4] sm:$0xf]
                %401 = vst [vmem:[%s349 + $0x64] sm:$0xf] %v400
                %v402 = vld [vmem:[%s348 + $0xa8] sm:$0xf]
                %403 = vst [vmem:[%s349 + $0x68] sm:$0xf] %v402
                %v404 = vld [vmem:[%s348 + $0xac] sm:$0xf]
                %405 = vst [vmem:[%s349 + $0x6c] sm:$0xf] %v404
                %v406 = vld [vmem:[%s348 + $0xb0] sm:$0xf]
                %407 = vst [vmem:[%s349 + $0x70] sm:$0xf] %v406
                %v408 = vld [vmem:[%s348 + $0xb4] sm:$0xf]
                %409 = vst [vmem:[%s349 + $0x74] sm:$0xf] %v408
                %v410 = vld [vmem:[%s348 + $0xb8] sm:$0xf]
                %411 = vst [vmem:[%s349 + $0x78] sm:$0xf] %v410
                %v412 = vld [vmem:[%s348 + $0xbc] sm:$0xf]
                %413 = vst [vmem:[%s349 + $0x7c] sm:$0xf] %v412
                %v414 = vld [vmem:[%s348 + $0x100] sm:$0xf]
                %415 = vst [vmem:[%s349 + $0x80] sm:$0xf] %v414
                %v416 = vld [vmem:[%s348 + $0x104] sm:$0xf]
                %417 = vst [vmem:[%s349 + $0x84] sm:$0xf] %v416
                %v418 = vld [vmem:[%s348 + $0x108] sm:$0xf]
                %419 = vst [vmem:[%s349 + $0x88] sm:$0xf] %v418
                %v420 = vld [vmem:[%s348 + $0x10c] sm:$0xf]
                %421 = vst [vmem:[%s349 + $0x8c] sm:$0xf] %v420
                %v422 = vld [vmem:[%s348 + $0x110] sm:$0xf]
                %423 = vst [vmem:[%s349 + $0x90] sm:$0xf] %v422
                %v424 = vld [vmem:[%s348 + $0x114] sm:$0xf]
                %425 = vst [vmem:[%s349 + $0x94] sm:$0xf] %v424
                %v426 = vld [vmem:[%s348 + $0x118] sm:$0xf]
                %427 = vst [vmem:[%s349 + $0x98] sm:$0xf] %v426
                %v428 = vld [vmem:[%s348 + $0x11c] sm:$0xf]
                %429 = vst [vmem:[%s349 + $0x9c] sm:$0xf] %v428
                %v430 = vld [vmem:[%s348 + $0x120] sm:$0xf]
                %431 = vst [vmem:[%s349 + $0xa0] sm:$0xf] %v430
                %v432 = vld [vmem:[%s348 + $0x124] sm:$0xf]
                %433 = vst [vmem:[%s349 + $0xa4] sm:$0xf] %v432
                %v434 = vld [vmem:[%s348 + $0x128] sm:$0xf]
                %435 = vst [vmem:[%s349 + $0xa8] sm:$0xf] %v434
                %v436 = vld [vmem:[%s348 + $0x12c] sm:$0xf]
                %437 = vst [vmem:[%s349 + $0xac] sm:$0xf] %v436
                %v438 = vld [vmem:[%s348 + $0x130] sm:$0xf]
                %439 = vst [vmem:[%s349 + $0xb0] sm:$0xf] %v438
                %v440 = vld [vmem:[%s348 + $0x134] sm:$0xf]
                %441 = vst [vmem:[%s349 + $0xb4] sm:$0xf] %v440
                %v442 = vld [vmem:[%s348 + $0x138] sm:$0xf]
                %443 = vst [vmem:[%s349 + $0xb8] sm:$0xf] %v442
                %v444 = vld [vmem:[%s348 + $0x13c] sm:$0xf]
                %445 = vst [vmem:[%s349 + $0xbc] sm:$0xf] %v444
                %v446 = vld [vmem:[%s348 + $0x180] sm:$0xf]
                %447 = vst [vmem:[%s349 + $0xc0] sm:$0xf] %v446
                %v448 = vld [vmem:[%s348 + $0x184] sm:$0xf]
                %449 = vst [vmem:[%s349 + $0xc4] sm:$0xf] %v448
                %v450 = vld [vmem:[%s348 + $0x188] sm:$0xf]
                %451 = vst [vmem:[%s349 + $0xc8] sm:$0xf] %v450
                %v452 = vld [vmem:[%s348 + $0x18c] sm:$0xf]
                %453 = vst [vmem:[%s349 + $0xcc] sm:$0xf] %v452
                %v454 = vld [vmem:[%s348 + $0x190] sm:$0xf]
                %455 = vst [vmem:[%s349 + $0xd0] sm:$0xf] %v454
                %v456 = vld [vmem:[%s348 + $0x194] sm:$0xf]
                %457 = vst [vmem:[%s349 + $0xd4] sm:$0xf] %v456
                %v458 = vld [vmem:[%s348 + $0x198] sm:$0xf]
                %459 = vst [vmem:[%s349 + $0xd8] sm:$0xf] %v458
                %v460 = vld [vmem:[%s348 + $0x19c] sm:$0xf]
                %461 = vst [vmem:[%s349 + $0xdc] sm:$0xf] %v460
                %v462 = vld [vmem:[%s348 + $0x1a0] sm:$0xf]
                %463 = vst [vmem:[%s349 + $0xe0] sm:$0xf] %v462
                %v464 = vld [vmem:[%s348 + $0x1a4] sm:$0xf]
                %465 = vst [vmem:[%s349 + $0xe4] sm:$0xf] %v464
                %v466 = vld [vmem:[%s348 + $0x1a8] sm:$0xf]
                %467 = vst [vmem:[%s349 + $0xe8] sm:$0xf] %v466
                %v468 = vld [vmem:[%s348 + $0x1ac] sm:$0xf]
                %469 = vst [vmem:[%s349 + $0xec] sm:$0xf] %v468
                %v470 = vld [vmem:[%s348 + $0x1b0] sm:$0xf]
                %471 = vst [vmem:[%s349 + $0xf0] sm:$0xf] %v470
                %v472 = vld [vmem:[%s348 + $0x1b4] sm:$0xf]
                %473 = vst [vmem:[%s349 + $0xf4] sm:$0xf] %v472
                %v474 = vld [vmem:[%s348 + $0x1b8] sm:$0xf]
                %475 = vst [vmem:[%s349 + $0xf8] sm:$0xf] %v474
                %v476 = vld [vmem:[%s348 + $0x1bc] sm:$0xf]
                %477 = vst [vmem:[%s349 + $0xfc] sm:$0xf] %v476
                %v478 = vld [vmem:[%s348 + $0x200] sm:$0xf]
                %479 = vst [vmem:[%s349 + $0x100] sm:$0xf] %v478
                %v480 = vld [vmem:[%s348 + $0x204] sm:$0xf]
                %481 = vst [vmem:[%s349 + $0x104] sm:$0xf] %v480
                %v482 = vld [vmem:[%s348 + $0x208] sm:$0xf]
                %483 = vst [vmem:[%s349 + $0x108] sm:$0xf] %v482
                %v484 = vld [vmem:[%s348 + $0x20c] sm:$0xf]
                %485 = vst [vmem:[%s349 + $0x10c] sm:$0xf] %v484
                %v486 = vld [vmem:[%s348 + $0x210] sm:$0xf]
                %487 = vst [vmem:[%s349 + $0x110] sm:$0xf] %v486
                %v488 = vld [vmem:[%s348 + $0x214] sm:$0xf]
                %489 = vst [vmem:[%s349 + $0x114] sm:$0xf] %v488
                %v490 = vld [vmem:[%s348 + $0x218] sm:$0xf]
                %491 = vst [vmem:[%s349 + $0x118] sm:$0xf] %v490
                %v492 = vld [vmem:[%s348 + $0x21c] sm:$0xf]
                %493 = vst [vmem:[%s349 + $0x11c] sm:$0xf] %v492
                %v494 = vld [vmem:[%s348 + $0x220] sm:$0xf]
                %495 = vst [vmem:[%s349 + $0x120] sm:$0xf] %v494
                %v496 = vld [vmem:[%s348 + $0x224] sm:$0xf]
                %497 = vst [vmem:[%s349 + $0x124] sm:$0xf] %v496
                %v498 = vld [vmem:[%s348 + $0x228] sm:$0xf]
                %499 = vst [vmem:[%s349 + $0x128] sm:$0xf] %v498
                %v500 = vld [vmem:[%s348 + $0x22c] sm:$0xf]
                %501 = vst [vmem:[%s349 + $0x12c] sm:$0xf] %v500
                %v502 = vld [vmem:[%s348 + $0x230] sm:$0xf]
                %503 = vst [vmem:[%s349 + $0x130] sm:$0xf] %v502
                %v504 = vld [vmem:[%s348 + $0x234] sm:$0xf]
                %505 = vst [vmem:[%s349 + $0x134] sm:$0xf] %v504
                %v506 = vld [vmem:[%s348 + $0x238] sm:$0xf]
                %507 = vst [vmem:[%s349 + $0x138] sm:$0xf] %v506
                %v508 = vld [vmem:[%s348 + $0x23c] sm:$0xf]
                %509 = vst [vmem:[%s349 + $0x13c] sm:$0xf] %v508
                %v510 = vld [vmem:[%s348 + $0x280] sm:$0xf]
                %511 = vst [vmem:[%s349 + $0x140] sm:$0xf] %v510
                %v512 = vld [vmem:[%s348 + $0x284] sm:$0xf]
                %513 = vst [vmem:[%s349 + $0x144] sm:$0xf] %v512
                %v514 = vld [vmem:[%s348 + $0x288] sm:$0xf]
                %515 = vst [vmem:[%s349 + $0x148] sm:$0xf] %v514
                %v516 = vld [vmem:[%s348 + $0x28c] sm:$0xf]
                %517 = vst [vmem:[%s349 + $0x14c] sm:$0xf] %v516
                %v518 = vld [vmem:[%s348 + $0x290] sm:$0xf]
                %519 = vst [vmem:[%s349 + $0x150] sm:$0xf] %v518
                %v520 = vld [vmem:[%s348 + $0x294] sm:$0xf]
                %521 = vst [vmem:[%s349 + $0x154] sm:$0xf] %v520
                %v522 = vld [vmem:[%s348 + $0x298] sm:$0xf]
                %523 = vst [vmem:[%s349 + $0x158] sm:$0xf] %v522
                %v524 = vld [vmem:[%s348 + $0x29c] sm:$0xf]
                %525 = vst [vmem:[%s349 + $0x15c] sm:$0xf] %v524
                %v526 = vld [vmem:[%s348 + $0x2a0] sm:$0xf]
                %527 = vst [vmem:[%s349 + $0x160] sm:$0xf] %v526
                %v528 = vld [vmem:[%s348 + $0x2a4] sm:$0xf]
                %529 = vst [vmem:[%s349 + $0x164] sm:$0xf] %v528
                %v530 = vld [vmem:[%s348 + $0x2a8] sm:$0xf]
                %531 = vst [vmem:[%s349 + $0x168] sm:$0xf] %v530
                %v532 = vld [vmem:[%s348 + $0x2ac] sm:$0xf]
                %533 = vst [vmem:[%s349 + $0x16c] sm:$0xf] %v532
                %v534 = vld [vmem:[%s348 + $0x2b0] sm:$0xf]
                %535 = vst [vmem:[%s349 + $0x170] sm:$0xf] %v534
                %v536 = vld [vmem:[%s348 + $0x2b4] sm:$0xf]
                %537 = vst [vmem:[%s349 + $0x174] sm:$0xf] %v536
                %v538 = vld [vmem:[%s348 + $0x2b8] sm:$0xf]
                %539 = vst [vmem:[%s349 + $0x178] sm:$0xf] %v538
                %v540 = vld [vmem:[%s348 + $0x2bc] sm:$0xf]
                %541 = vst [vmem:[%s349 + $0x17c] sm:$0xf] %v540
                %v542 = vld [vmem:[%s348 + $0x300] sm:$0xf]
                %543 = vst [vmem:[%s349 + $0x180] sm:$0xf] %v542
                %v544 = vld [vmem:[%s348 + $0x304] sm:$0xf]
                %545 = vst [vmem:[%s349 + $0x184] sm:$0xf] %v544
                %v546 = vld [vmem:[%s348 + $0x308] sm:$0xf]
                %547 = vst [vmem:[%s349 + $0x188] sm:$0xf] %v546
                %v548 = vld [vmem:[%s348 + $0x30c] sm:$0xf]
                %549 = vst [vmem:[%s349 + $0x18c] sm:$0xf] %v548
                %v550 = vld [vmem:[%s348 + $0x310] sm:$0xf]
                %551 = vst [vmem:[%s349 + $0x190] sm:$0xf] %v550
                %v552 = vld [vmem:[%s348 + $0x314] sm:$0xf]
                %553 = vst [vmem:[%s349 + $0x194] sm:$0xf] %v552
                %v554 = vld [vmem:[%s348 + $0x318] sm:$0xf]
                %555 = vst [vmem:[%s349 + $0x198] sm:$0xf] %v554
                %v556 = vld [vmem:[%s348 + $0x31c] sm:$0xf]
                %557 = vst [vmem:[%s349 + $0x19c] sm:$0xf] %v556
                %v558 = vld [vmem:[%s348 + $0x320] sm:$0xf]
                %559 = vst [vmem:[%s349 + $0x1a0] sm:$0xf] %v558
                %v560 = vld [vmem:[%s348 + $0x324] sm:$0xf]
                %561 = vst [vmem:[%s349 + $0x1a4] sm:$0xf] %v560
                %v562 = vld [vmem:[%s348 + $0x328] sm:$0xf]
                %563 = vst [vmem:[%s349 + $0x1a8] sm:$0xf] %v562
                %v564 = vld [vmem:[%s348 + $0x32c] sm:$0xf]
                %565 = vst [vmem:[%s349 + $0x1ac] sm:$0xf] %v564
                %v566 = vld [vmem:[%s348 + $0x330] sm:$0xf]
                %567 = vst [vmem:[%s349 + $0x1b0] sm:$0xf] %v566
                %v568 = vld [vmem:[%s348 + $0x334] sm:$0xf]
                %569 = vst [vmem:[%s349 + $0x1b4] sm:$0xf] %v568
                %v570 = vld [vmem:[%s348 + $0x338] sm:$0xf]
                %571 = vst [vmem:[%s349 + $0x1b8] sm:$0xf] %v570
                %v572 = vld [vmem:[%s348 + $0x33c] sm:$0xf]
                %573 = vst [vmem:[%s349 + $0x1bc] sm:$0xf] %v572
                %v574 = vld [vmem:[%s348 + $0x380] sm:$0xf]
                %575 = vst [vmem:[%s349 + $0x1c0] sm:$0xf] %v574
                %v576 = vld [vmem:[%s348 + $0x384] sm:$0xf]
                %577 = vst [vmem:[%s349 + $0x1c4] sm:$0xf] %v576
                %v578 = vld [vmem:[%s348 + $0x388] sm:$0xf]
                %579 = vst [vmem:[%s349 + $0x1c8] sm:$0xf] %v578
                %v580 = vld [vmem:[%s348 + $0x38c] sm:$0xf]
                %581 = vst [vmem:[%s349 + $0x1cc] sm:$0xf] %v580
                %v582 = vld [vmem:[%s348 + $0x390] sm:$0xf]
                %583 = vst [vmem:[%s349 + $0x1d0] sm:$0xf] %v582
                %v584 = vld [vmem:[%s348 + $0x394] sm:$0xf]
                %585 = vst [vmem:[%s349 + $0x1d4] sm:$0xf] %v584
                %v586 = vld [vmem:[%s348 + $0x398] sm:$0xf]
                %587 = vst [vmem:[%s349 + $0x1d8] sm:$0xf] %v586
                %v588 = vld [vmem:[%s348 + $0x39c] sm:$0xf]
                %589 = vst [vmem:[%s349 + $0x1dc] sm:$0xf] %v588
                %v590 = vld [vmem:[%s348 + $0x3a0] sm:$0xf]
                %591 = vst [vmem:[%s349 + $0x1e0] sm:$0xf] %v590
                %v592 = vld [vmem:[%s348 + $0x3a4] sm:$0xf]
                %593 = vst [vmem:[%s349 + $0x1e4] sm:$0xf] %v592
                %v594 = vld [vmem:[%s348 + $0x3a8] sm:$0xf]
                %595 = vst [vmem:[%s349 + $0x1e8] sm:$0xf] %v594
                %v596 = vld [vmem:[%s348 + $0x3ac] sm:$0xf]
                %597 = vst [vmem:[%s349 + $0x1ec] sm:$0xf] %v596
                %v598 = vld [vmem:[%s348 + $0x3b0] sm:$0xf]
                %599 = vst [vmem:[%s349 + $0x1f0] sm:$0xf] %v598
                %v600 = vld [vmem:[%s348 + $0x3b4] sm:$0xf]
                %601 = vst [vmem:[%s349 + $0x1f4] sm:$0xf] %v600
                %v602 = vld [vmem:[%s348 + $0x3b8] sm:$0xf]
                %603 = vst [vmem:[%s349 + $0x1f8] sm:$0xf] %v602
                %v604 = vld [vmem:[%s348 + $0x3bc] sm:$0xf]
                %605 = vst [vmem:[%s349 + $0x1fc] sm:$0xf] %v604
              $region49: #{tpu_custom_call.1} parent=43 // loop_footer
                %s347 = sadd.s32 1, %s343
              $region50: #{tpu_custom_call.1} parent=43 // loop_footer_branch
                %342 = sbr.rel target = $region46
              $region51: #{tpu_custom_call.1} parent=43 // loop_exit
                _
            $region44: #{tpu_custom_call.1} parent=35 // pred_fallthru
              _
          $region36: #{tpu_custom_call.1} parent=31 // pred_fallthru
            _
          %881 = vnop
        $region32: #{tpu_custom_call.1} parent=27 // pred_fallthru
          _
        // Predicated region
        $region70: #{tpu_custom_call.1} parent=27 // pred_check
          %p882 = pneg %p108
        $region71: #{tpu_custom_call.1} parent=27 // pred_check_branch
          %884 = sbr.rel (%p882) target = $region73
        $region72: #{tpu_custom_call.1} parent=27 // pred_region
          %s885 = sand.u32 %s98, 1
          %s886 = sand.u32 %s98, 1
          %s887 = smul.addr %s886, 512
          %s888 = scalar_lea.vmem [#allocation7], %s887
          %s889 = smul.u32 8, %s27
          %s890 = smul.u32 16, %s28
          %s891 = smul.addr %s889, 32
          %s892 = sadd.s32 %s890, %s891
          %s893 = smul.addr %s892, 4
          %s894 = scalar_lea.vmem %s2, %s893
          // Predicated region
          $region74: #{tpu_custom_call.1} parent=72 // pred_check
            _
          $region75: #{tpu_custom_call.1} parent=72 // pred_check_branch
            %896 = sbr.rel (0) target = $region77
          $region76: #{tpu_custom_call.1} parent=72 // pred_region
            // Predicated region
            $region78: #{tpu_custom_call.1} parent=76 // pred_check
              _
            $region79: #{tpu_custom_call.1} parent=76 // pred_check_branch
              %898 = sbr.rel target = $region81
            $region80: #{tpu_custom_call.1} parent=76 // pred_region
              // Predicated region
              $region93: #{tpu_custom_call.1} parent=80 // pred_check
                _
              $region94: #{tpu_custom_call.1} parent=80 // pred_check_branch
                %1167 = sbr.rel (0) target = $region96
              $region95: #{tpu_custom_call.1} parent=80 // pred_region
                loop: start=0, step=1, limit=1
                $region97: #{tpu_custom_call.1} parent=95 // loop_pre_header
                  _
                $region98: #{tpu_custom_call.1} parent=95 // loop_header
                  %s1169 = sphi 0, %s1173
                  %p1170 = scmp.ge.s32.totalorder %s1169, 1
                  %s1174 = sphi %s894, %s894
                  %s1175 = sphi %s888, %s888
                $region99: #{tpu_custom_call.1} parent=95 // loop_header_branch
                  %1172 = sbr.rel (%p1170) target = $region103
                $region100: #{tpu_custom_call.1} parent=95 // loop_body
                  _
                $region101: #{tpu_custom_call.1} parent=95 // loop_footer
                  %s1173 = sadd.s32 1, %s1169
                $region102: #{tpu_custom_call.1} parent=95 // loop_footer_branch
                  %1168 = sbr.rel target = $region98
                $region103: #{tpu_custom_call.1} parent=95 // loop_exit
                  _
                loop: start=0, step=1, limit=1
                $region104: #{tpu_custom_call.1} parent=95 // loop_pre_header
                  _
                $region105: #{tpu_custom_call.1} parent=95 // loop_header
                  %s1178 = sphi 0, %s1182
                  %p1179 = scmp.ge.s32.totalorder %s1178, 1
                  %s1183 = sphi %s894, %s894
                  %s1184 = sphi %s888, %s888
                $region106: #{tpu_custom_call.1} parent=95 // loop_header_branch
                  %1181 = sbr.rel (%p1179) target = $region110
                $region107: #{tpu_custom_call.1} parent=95 // loop_body
                  %v1185 = vld [vmem:[%s1183] sm:$0xf]
                  %1186 = vst [vmem:[%s1184] sm:$0xf] %v1185
                  %v1187 = vld [vmem:[%s1183 + $0x4] sm:$0xf]
                  %1188 = vst [vmem:[%s1184 + $0x4] sm:$0xf] %v1187
                  %v1189 = vld [vmem:[%s1183 + $0x8] sm:$0xf]
                  %1190 = vst [vmem:[%s1184 + $0x8] sm:$0xf] %v1189
                  %v1191 = vld [vmem:[%s1183 + $0xc] sm:$0xf]
                  %1192 = vst [vmem:[%s1184 + $0xc] sm:$0xf] %v1191
                  %v1193 = vld [vmem:[%s1183 + $0x10] sm:$0xf]
                  %1194 = vst [vmem:[%s1184 + $0x10] sm:$0xf] %v1193
                  %v1195 = vld [vmem:[%s1183 + $0x14] sm:$0xf]
                  %1196 = vst [vmem:[%s1184 + $0x14] sm:$0xf] %v1195
                  %v1197 = vld [vmem:[%s1183 + $0x18] sm:$0xf]
                  %1198 = vst [vmem:[%s1184 + $0x18] sm:$0xf] %v1197
                  %v1199 = vld [vmem:[%s1183 + $0x1c] sm:$0xf]
                  %1200 = vst [vmem:[%s1184 + $0x1c] sm:$0xf] %v1199
                  %v1201 = vld [vmem:[%s1183 + $0x20] sm:$0xf]
                  %1202 = vst [vmem:[%s1184 + $0x20] sm:$0xf] %v1201
                  %v1203 = vld [vmem:[%s1183 + $0x24] sm:$0xf]
                  %1204 = vst [vmem:[%s1184 + $0x24] sm:$0xf] %v1203
                  %v1205 = vld [vmem:[%s1183 + $0x28] sm:$0xf]
                  %1206 = vst [vmem:[%s1184 + $0x28] sm:$0xf] %v1205
                  %v1207 = vld [vmem:[%s1183 + $0x2c] sm:$0xf]
                  %1208 = vst [vmem:[%s1184 + $0x2c] sm:$0xf] %v1207
                  %v1209 = vld [vmem:[%s1183 + $0x30] sm:$0xf]
                  %1210 = vst [vmem:[%s1184 + $0x30] sm:$0xf] %v1209
                  %v1211 = vld [vmem:[%s1183 + $0x34] sm:$0xf]
                  %1212 = vst [vmem:[%s1184 + $0x34] sm:$0xf] %v1211
                  %v1213 = vld [vmem:[%s1183 + $0x38] sm:$0xf]
                  %1214 = vst [vmem:[%s1184 + $0x38] sm:$0xf] %v1213
                  %v1215 = vld [vmem:[%s1183 + $0x3c] sm:$0xf]
                  %1216 = vst [vmem:[%s1184 + $0x3c] sm:$0xf] %v1215
                  %v1217 = vld [vmem:[%s1183 + $0x80] sm:$0xf]
                  %1218 = vst [vmem:[%s1184 + $0x40] sm:$0xf] %v1217
                  %v1219 = vld [vmem:[%s1183 + $0x84] sm:$0xf]
                  %1220 = vst [vmem:[%s1184 + $0x44] sm:$0xf] %v1219
                  %v1221 = vld [vmem:[%s1183 + $0x88] sm:$0xf]
                  %1222 = vst [vmem:[%s1184 + $0x48] sm:$0xf] %v1221
                  %v1223 = vld [vmem:[%s1183 + $0x8c] sm:$0xf]
                  %1224 = vst [vmem:[%s1184 + $0x4c] sm:$0xf] %v1223
                  %v1225 = vld [vmem:[%s1183 + $0x90] sm:$0xf]
                  %1226 = vst [vmem:[%s1184 + $0x50] sm:$0xf] %v1225
                  %v1227 = vld [vmem:[%s1183 + $0x94] sm:$0xf]
                  %1228 = vst [vmem:[%s1184 + $0x54] sm:$0xf] %v1227
                  %v1229 = vld [vmem:[%s1183 + $0x98] sm:$0xf]
                  %1230 = vst [vmem:[%s1184 + $0x58] sm:$0xf] %v1229
                  %v1231 = vld [vmem:[%s1183 + $0x9c] sm:$0xf]
                  %1232 = vst [vmem:[%s1184 + $0x5c] sm:$0xf] %v1231
                  %v1233 = vld [vmem:[%s1183 + $0xa0] sm:$0xf]
                  %1234 = vst [vmem:[%s1184 + $0x60] sm:$0xf] %v1233
                  %v1235 = vld [vmem:[%s1183 + $0xa4] sm:$0xf]
                  %1236 = vst [vmem:[%s1184 + $0x64] sm:$0xf] %v1235
                  %v1237 = vld [vmem:[%s1183 + $0xa8] sm:$0xf]
                  %1238 = vst [vmem:[%s1184 + $0x68] sm:$0xf] %v1237
                  %v1239 = vld [vmem:[%s1183 + $0xac] sm:$0xf]
                  %1240 = vst [vmem:[%s1184 + $0x6c] sm:$0xf] %v1239
                  %v1241 = vld [vmem:[%s1183 + $0xb0] sm:$0xf]
                  %1242 = vst [vmem:[%s1184 + $0x70] sm:$0xf] %v1241
                  %v1243 = vld [vmem:[%s1183 + $0xb4] sm:$0xf]
                  %1244 = vst [vmem:[%s1184 + $0x74] sm:$0xf] %v1243
                  %v1245 = vld [vmem:[%s1183 + $0xb8] sm:$0xf]
                  %1246 = vst [vmem:[%s1184 + $0x78] sm:$0xf] %v1245
                  %v1247 = vld [vmem:[%s1183 + $0xbc] sm:$0xf]
                  %1248 = vst [vmem:[%s1184 + $0x7c] sm:$0xf] %v1247
                  %v1249 = vld [vmem:[%s1183 + $0x100] sm:$0xf]
                  %1250 = vst [vmem:[%s1184 + $0x80] sm:$0xf] %v1249
                  %v1251 = vld [vmem:[%s1183 + $0x104] sm:$0xf]
                  %1252 = vst [vmem:[%s1184 + $0x84] sm:$0xf] %v1251
                  %v1253 = vld [vmem:[%s1183 + $0x108] sm:$0xf]
                  %1254 = vst [vmem:[%s1184 + $0x88] sm:$0xf] %v1253
                  %v1255 = vld [vmem:[%s1183 + $0x10c] sm:$0xf]
                  %1256 = vst [vmem:[%s1184 + $0x8c] sm:$0xf] %v1255
                  %v1257 = vld [vmem:[%s1183 + $0x110] sm:$0xf]
                  %1258 = vst [vmem:[%s1184 + $0x90] sm:$0xf] %v1257
                  %v1259 = vld [vmem:[%s1183 + $0x114] sm:$0xf]
                  %1260 = vst [vmem:[%s1184 + $0x94] sm:$0xf] %v1259
                  %v1261 = vld [vmem:[%s1183 + $0x118] sm:$0xf]
                  %1262 = vst [vmem:[%s1184 + $0x98] sm:$0xf] %v1261
                  %v1263 = vld [vmem:[%s1183 + $0x11c] sm:$0xf]
                  %1264 = vst [vmem:[%s1184 + $0x9c] sm:$0xf] %v1263
                  %v1265 = vld [vmem:[%s1183 + $0x120] sm:$0xf]
                  %1266 = vst [vmem:[%s1184 + $0xa0] sm:$0xf] %v1265
                  %v1267 = vld [vmem:[%s1183 + $0x124] sm:$0xf]
                  %1268 = vst [vmem:[%s1184 + $0xa4] sm:$0xf] %v1267
                  %v1269 = vld [vmem:[%s1183 + $0x128] sm:$0xf]
                  %1270 = vst [vmem:[%s1184 + $0xa8] sm:$0xf] %v1269
                  %v1271 = vld [vmem:[%s1183 + $0x12c] sm:$0xf]
                  %1272 = vst [vmem:[%s1184 + $0xac] sm:$0xf] %v1271
                  %v1273 = vld [vmem:[%s1183 + $0x130] sm:$0xf]
                  %1274 = vst [vmem:[%s1184 + $0xb0] sm:$0xf] %v1273
                  %v1275 = vld [vmem:[%s1183 + $0x134] sm:$0xf]
                  %1276 = vst [vmem:[%s1184 + $0xb4] sm:$0xf] %v1275
                  %v1277 = vld [vmem:[%s1183 + $0x138] sm:$0xf]
                  %1278 = vst [vmem:[%s1184 + $0xb8] sm:$0xf] %v1277
                  %v1279 = vld [vmem:[%s1183 + $0x13c] sm:$0xf]
                  %1280 = vst [vmem:[%s1184 + $0xbc] sm:$0xf] %v1279
                  %v1281 = vld [vmem:[%s1183 + $0x180] sm:$0xf]
                  %1282 = vst [vmem:[%s1184 + $0xc0] sm:$0xf] %v1281
                  %v1283 = vld [vmem:[%s1183 + $0x184] sm:$0xf]
                  %1284 = vst [vmem:[%s1184 + $0xc4] sm:$0xf] %v1283
                  %v1285 = vld [vmem:[%s1183 + $0x188] sm:$0xf]
                  %1286 = vst [vmem:[%s1184 + $0xc8] sm:$0xf] %v1285
                  %v1287 = vld [vmem:[%s1183 + $0x18c] sm:$0xf]
                  %1288 = vst [vmem:[%s1184 + $0xcc] sm:$0xf] %v1287
                  %v1289 = vld [vmem:[%s1183 + $0x190] sm:$0xf]
                  %1290 = vst [vmem:[%s1184 + $0xd0] sm:$0xf] %v1289
                  %v1291 = vld [vmem:[%s1183 + $0x194] sm:$0xf]
                  %1292 = vst [vmem:[%s1184 + $0xd4] sm:$0xf] %v1291
                  %v1293 = vld [vmem:[%s1183 + $0x198] sm:$0xf]
                  %1294 = vst [vmem:[%s1184 + $0xd8] sm:$0xf] %v1293
                  %v1295 = vld [vmem:[%s1183 + $0x19c] sm:$0xf]
                  %1296 = vst [vmem:[%s1184 + $0xdc] sm:$0xf] %v1295
                  %v1297 = vld [vmem:[%s1183 + $0x1a0] sm:$0xf]
                  %1298 = vst [vmem:[%s1184 + $0xe0] sm:$0xf] %v1297
                  %v1299 = vld [vmem:[%s1183 + $0x1a4] sm:$0xf]
                  %1300 = vst [vmem:[%s1184 + $0xe4] sm:$0xf] %v1299
                  %v1301 = vld [vmem:[%s1183 + $0x1a8] sm:$0xf]
                  %1302 = vst [vmem:[%s1184 + $0xe8] sm:$0xf] %v1301
                  %v1303 = vld [vmem:[%s1183 + $0x1ac] sm:$0xf]
                  %1304 = vst [vmem:[%s1184 + $0xec] sm:$0xf] %v1303
                  %v1305 = vld [vmem:[%s1183 + $0x1b0] sm:$0xf]
                  %1306 = vst [vmem:[%s1184 + $0xf0] sm:$0xf] %v1305
                  %v1307 = vld [vmem:[%s1183 + $0x1b4] sm:$0xf]
                  %1308 = vst [vmem:[%s1184 + $0xf4] sm:$0xf] %v1307
                  %v1309 = vld [vmem:[%s1183 + $0x1b8] sm:$0xf]
                  %1310 = vst [vmem:[%s1184 + $0xf8] sm:$0xf] %v1309
                  %v1311 = vld [vmem:[%s1183 + $0x1bc] sm:$0xf]
                  %1312 = vst [vmem:[%s1184 + $0xfc] sm:$0xf] %v1311
                  %v1313 = vld [vmem:[%s1183 + $0x200] sm:$0xf]
                  %1314 = vst [vmem:[%s1184 + $0x100] sm:$0xf] %v1313
                  %v1315 = vld [vmem:[%s1183 + $0x204] sm:$0xf]
                  %1316 = vst [vmem:[%s1184 + $0x104] sm:$0xf] %v1315
                  %v1317 = vld [vmem:[%s1183 + $0x208] sm:$0xf]
                  %1318 = vst [vmem:[%s1184 + $0x108] sm:$0xf] %v1317
                  %v1319 = vld [vmem:[%s1183 + $0x20c] sm:$0xf]
                  %1320 = vst [vmem:[%s1184 + $0x10c] sm:$0xf] %v1319
                  %v1321 = vld [vmem:[%s1183 + $0x210] sm:$0xf]
                  %1322 = vst [vmem:[%s1184 + $0x110] sm:$0xf] %v1321
                  %v1323 = vld [vmem:[%s1183 + $0x214] sm:$0xf]
                  %1324 = vst [vmem:[%s1184 + $0x114] sm:$0xf] %v1323
                  %v1325 = vld [vmem:[%s1183 + $0x218] sm:$0xf]
                  %1326 = vst [vmem:[%s1184 + $0x118] sm:$0xf] %v1325
                  %v1327 = vld [vmem:[%s1183 + $0x21c] sm:$0xf]
                  %1328 = vst [vmem:[%s1184 + $0x11c] sm:$0xf] %v1327
                  %v1329 = vld [vmem:[%s1183 + $0x220] sm:$0xf]
                  %1330 = vst [vmem:[%s1184 + $0x120] sm:$0xf] %v1329
                  %v1331 = vld [vmem:[%s1183 + $0x224] sm:$0xf]
                  %1332 = vst [vmem:[%s1184 + $0x124] sm:$0xf] %v1331
                  %v1333 = vld [vmem:[%s1183 + $0x228] sm:$0xf]
                  %1334 = vst [vmem:[%s1184 + $0x128] sm:$0xf] %v1333
                  %v1335 = vld [vmem:[%s1183 + $0x22c] sm:$0xf]
                  %1336 = vst [vmem:[%s1184 + $0x12c] sm:$0xf] %v1335
                  %v1337 = vld [vmem:[%s1183 + $0x230] sm:$0xf]
                  %1338 = vst [vmem:[%s1184 + $0x130] sm:$0xf] %v1337
                  %v1339 = vld [vmem:[%s1183 + $0x234] sm:$0xf]
                  %1340 = vst [vmem:[%s1184 + $0x134] sm:$0xf] %v1339
                  %v1341 = vld [vmem:[%s1183 + $0x238] sm:$0xf]
                  %1342 = vst [vmem:[%s1184 + $0x138] sm:$0xf] %v1341
                  %v1343 = vld [vmem:[%s1183 + $0x23c] sm:$0xf]
                  %1344 = vst [vmem:[%s1184 + $0x13c] sm:$0xf] %v1343
                  %v1345 = vld [vmem:[%s1183 + $0x280] sm:$0xf]
                  %1346 = vst [vmem:[%s1184 + $0x140] sm:$0xf] %v1345
                  %v1347 = vld [vmem:[%s1183 + $0x284] sm:$0xf]
                  %1348 = vst [vmem:[%s1184 + $0x144] sm:$0xf] %v1347
                  %v1349 = vld [vmem:[%s1183 + $0x288] sm:$0xf]
                  %1350 = vst [vmem:[%s1184 + $0x148] sm:$0xf] %v1349
                  %v1351 = vld [vmem:[%s1183 + $0x28c] sm:$0xf]
                  %1352 = vst [vmem:[%s1184 + $0x14c] sm:$0xf] %v1351
                  %v1353 = vld [vmem:[%s1183 + $0x290] sm:$0xf]
                  %1354 = vst [vmem:[%s1184 + $0x150] sm:$0xf] %v1353
                  %v1355 = vld [vmem:[%s1183 + $0x294] sm:$0xf]
                  %1356 = vst [vmem:[%s1184 + $0x154] sm:$0xf] %v1355
                  %v1357 = vld [vmem:[%s1183 + $0x298] sm:$0xf]
                  %1358 = vst [vmem:[%s1184 + $0x158] sm:$0xf] %v1357
                  %v1359 = vld [vmem:[%s1183 + $0x29c] sm:$0xf]
                  %1360 = vst [vmem:[%s1184 + $0x15c] sm:$0xf] %v1359
                  %v1361 = vld [vmem:[%s1183 + $0x2a0] sm:$0xf]
                  %1362 = vst [vmem:[%s1184 + $0x160] sm:$0xf] %v1361
                  %v1363 = vld [vmem:[%s1183 + $0x2a4] sm:$0xf]
                  %1364 = vst [vmem:[%s1184 + $0x164] sm:$0xf] %v1363
                  %v1365 = vld [vmem:[%s1183 + $0x2a8] sm:$0xf]
                  %1366 = vst [vmem:[%s1184 + $0x168] sm:$0xf] %v1365
                  %v1367 = vld [vmem:[%s1183 + $0x2ac] sm:$0xf]
                  %1368 = vst [vmem:[%s1184 + $0x16c] sm:$0xf] %v1367
                  %v1369 = vld [vmem:[%s1183 + $0x2b0] sm:$0xf]
                  %1370 = vst [vmem:[%s1184 + $0x170] sm:$0xf] %v1369
                  %v1371 = vld [vmem:[%s1183 + $0x2b4] sm:$0xf]
                  %1372 = vst [vmem:[%s1184 + $0x174] sm:$0xf] %v1371
                  %v1373 = vld [vmem:[%s1183 + $0x2b8] sm:$0xf]
                  %1374 = vst [vmem:[%s1184 + $0x178] sm:$0xf] %v1373
                  %v1375 = vld [vmem:[%s1183 + $0x2bc] sm:$0xf]
                  %1376 = vst [vmem:[%s1184 + $0x17c] sm:$0xf] %v1375
                  %v1377 = vld [vmem:[%s1183 + $0x300] sm:$0xf]
                  %1378 = vst [vmem:[%s1184 + $0x180] sm:$0xf] %v1377
                  %v1379 = vld [vmem:[%s1183 + $0x304] sm:$0xf]
                  %1380 = vst [vmem:[%s1184 + $0x184] sm:$0xf] %v1379
                  %v1381 = vld [vmem:[%s1183 + $0x308] sm:$0xf]
                  %1382 = vst [vmem:[%s1184 + $0x188] sm:$0xf] %v1381
                  %v1383 = vld [vmem:[%s1183 + $0x30c] sm:$0xf]
                  %1384 = vst [vmem:[%s1184 + $0x18c] sm:$0xf] %v1383
                  %v1385 = vld [vmem:[%s1183 + $0x310] sm:$0xf]
                  %1386 = vst [vmem:[%s1184 + $0x190] sm:$0xf] %v1385
                  %v1387 = vld [vmem:[%s1183 + $0x314] sm:$0xf]
                  %1388 = vst [vmem:[%s1184 + $0x194] sm:$0xf] %v1387
                  %v1389 = vld [vmem:[%s1183 + $0x318] sm:$0xf]
                  %1390 = vst [vmem:[%s1184 + $0x198] sm:$0xf] %v1389
                  %v1391 = vld [vmem:[%s1183 + $0x31c] sm:$0xf]
                  %1392 = vst [vmem:[%s1184 + $0x19c] sm:$0xf] %v1391
                  %v1393 = vld [vmem:[%s1183 + $0x320] sm:$0xf]
                  %1394 = vst [vmem:[%s1184 + $0x1a0] sm:$0xf] %v1393
                  %v1395 = vld [vmem:[%s1183 + $0x324] sm:$0xf]
                  %1396 = vst [vmem:[%s1184 + $0x1a4] sm:$0xf] %v1395
                  %v1397 = vld [vmem:[%s1183 + $0x328] sm:$0xf]
                  %1398 = vst [vmem:[%s1184 + $0x1a8] sm:$0xf] %v1397
                  %v1399 = vld [vmem:[%s1183 + $0x32c] sm:$0xf]
                  %1400 = vst [vmem:[%s1184 + $0x1ac] sm:$0xf] %v1399
                  %v1401 = vld [vmem:[%s1183 + $0x330] sm:$0xf]
                  %1402 = vst [vmem:[%s1184 + $0x1b0] sm:$0xf] %v1401
                  %v1403 = vld [vmem:[%s1183 + $0x334] sm:$0xf]
                  %1404 = vst [vmem:[%s1184 + $0x1b4] sm:$0xf] %v1403
                  %v1405 = vld [vmem:[%s1183 + $0x338] sm:$0xf]
                  %1406 = vst [vmem:[%s1184 + $0x1b8] sm:$0xf] %v1405
                  %v1407 = vld [vmem:[%s1183 + $0x33c] sm:$0xf]
                  %1408 = vst [vmem:[%s1184 + $0x1bc] sm:$0xf] %v1407
                  %v1409 = vld [vmem:[%s1183 + $0x380] sm:$0xf]
                  %1410 = vst [vmem:[%s1184 + $0x1c0] sm:$0xf] %v1409
                  %v1411 = vld [vmem:[%s1183 + $0x384] sm:$0xf]
                  %1412 = vst [vmem:[%s1184 + $0x1c4] sm:$0xf] %v1411
                  %v1413 = vld [vmem:[%s1183 + $0x388] sm:$0xf]
                  %1414 = vst [vmem:[%s1184 + $0x1c8] sm:$0xf] %v1413
                  %v1415 = vld [vmem:[%s1183 + $0x38c] sm:$0xf]
                  %1416 = vst [vmem:[%s1184 + $0x1cc] sm:$0xf] %v1415
                  %v1417 = vld [vmem:[%s1183 + $0x390] sm:$0xf]
                  %1418 = vst [vmem:[%s1184 + $0x1d0] sm:$0xf] %v1417
                  %v1419 = vld [vmem:[%s1183 + $0x394] sm:$0xf]
                  %1420 = vst [vmem:[%s1184 + $0x1d4] sm:$0xf] %v1419
                  %v1421 = vld [vmem:[%s1183 + $0x398] sm:$0xf]
                  %1422 = vst [vmem:[%s1184 + $0x1d8] sm:$0xf] %v1421
                  %v1423 = vld [vmem:[%s1183 + $0x39c] sm:$0xf]
                  %1424 = vst [vmem:[%s1184 + $0x1dc] sm:$0xf] %v1423
                  %v1425 = vld [vmem:[%s1183 + $0x3a0] sm:$0xf]
                  %1426 = vst [vmem:[%s1184 + $0x1e0] sm:$0xf] %v1425
                  %v1427 = vld [vmem:[%s1183 + $0x3a4] sm:$0xf]
                  %1428 = vst [vmem:[%s1184 + $0x1e4] sm:$0xf] %v1427
                  %v1429 = vld [vmem:[%s1183 + $0x3a8] sm:$0xf]
                  %1430 = vst [vmem:[%s1184 + $0x1e8] sm:$0xf] %v1429
                  %v1431 = vld [vmem:[%s1183 + $0x3ac] sm:$0xf]
                  %1432 = vst [vmem:[%s1184 + $0x1ec] sm:$0xf] %v1431
                  %v1433 = vld [vmem:[%s1183 + $0x3b0] sm:$0xf]
                  %1434 = vst [vmem:[%s1184 + $0x1f0] sm:$0xf] %v1433
                  %v1435 = vld [vmem:[%s1183 + $0x3b4] sm:$0xf]
                  %1436 = vst [vmem:[%s1184 + $0x1f4] sm:$0xf] %v1435
                  %v1437 = vld [vmem:[%s1183 + $0x3b8] sm:$0xf]
                  %1438 = vst [vmem:[%s1184 + $0x1f8] sm:$0xf] %v1437
                  %v1439 = vld [vmem:[%s1183 + $0x3bc] sm:$0xf]
                  %1440 = vst [vmem:[%s1184 + $0x1fc] sm:$0xf] %v1439
                $region108: #{tpu_custom_call.1} parent=95 // loop_footer
                  %s1182 = sadd.s32 1, %s1178
                $region109: #{tpu_custom_call.1} parent=95 // loop_footer_branch
                  %1177 = sbr.rel target = $region105
                $region110: #{tpu_custom_call.1} parent=95 // loop_exit
                  _
              $region96: #{tpu_custom_call.1} parent=80 // pred_fallthru
                _
            $region81: #{tpu_custom_call.1} parent=76 // pred_fallthru
              _
            // Predicated region
            $region82: #{tpu_custom_call.1} parent=76 // pred_check
              _
            $region83: #{tpu_custom_call.1} parent=76 // pred_check_branch
              %900 = sbr.rel (0) target = $region85
            $region84: #{tpu_custom_call.1} parent=76 // pred_region
              loop: start=0, step=1, limit=1
              $region86: #{tpu_custom_call.1} parent=84 // loop_pre_header
                _
              $region87: #{tpu_custom_call.1} parent=84 // loop_header
                %s903 = sphi 0, %s907
                %p904 = scmp.ge.s32.totalorder %s903, 1
                %s908 = sphi %s894, %s894
                %s909 = sphi %s888, %s888
              $region88: #{tpu_custom_call.1} parent=84 // loop_header_branch
                %906 = sbr.rel (%p904) target = $region92
              $region89: #{tpu_custom_call.1} parent=84 // loop_body
                %v910 = vld [vmem:[%s908] sm:$0xf]
                %911 = vst [vmem:[%s909] sm:$0xf] %v910
                %v912 = vld [vmem:[%s908 + $0x4] sm:$0xf]
                %913 = vst [vmem:[%s909 + $0x4] sm:$0xf] %v912
                %v914 = vld [vmem:[%s908 + $0x8] sm:$0xf]
                %915 = vst [vmem:[%s909 + $0x8] sm:$0xf] %v914
                %v916 = vld [vmem:[%s908 + $0xc] sm:$0xf]
                %917 = vst [vmem:[%s909 + $0xc] sm:$0xf] %v916
                %v918 = vld [vmem:[%s908 + $0x10] sm:$0xf]
                %919 = vst [vmem:[%s909 + $0x10] sm:$0xf] %v918
                %v920 = vld [vmem:[%s908 + $0x14] sm:$0xf]
                %921 = vst [vmem:[%s909 + $0x14] sm:$0xf] %v920
                %v922 = vld [vmem:[%s908 + $0x18] sm:$0xf]
                %923 = vst [vmem:[%s909 + $0x18] sm:$0xf] %v922
                %v924 = vld [vmem:[%s908 + $0x1c] sm:$0xf]
                %925 = vst [vmem:[%s909 + $0x1c] sm:$0xf] %v924
                %v926 = vld [vmem:[%s908 + $0x20] sm:$0xf]
                %927 = vst [vmem:[%s909 + $0x20] sm:$0xf] %v926
                %v928 = vld [vmem:[%s908 + $0x24] sm:$0xf]
                %929 = vst [vmem:[%s909 + $0x24] sm:$0xf] %v928
                %v930 = vld [vmem:[%s908 + $0x28] sm:$0xf]
                %931 = vst [vmem:[%s909 + $0x28] sm:$0xf] %v930
                %v932 = vld [vmem:[%s908 + $0x2c] sm:$0xf]
                %933 = vst [vmem:[%s909 + $0x2c] sm:$0xf] %v932
                %v934 = vld [vmem:[%s908 + $0x30] sm:$0xf]
                %935 = vst [vmem:[%s909 + $0x30] sm:$0xf] %v934
                %v936 = vld [vmem:[%s908 + $0x34] sm:$0xf]
                %937 = vst [vmem:[%s909 + $0x34] sm:$0xf] %v936
                %v938 = vld [vmem:[%s908 + $0x38] sm:$0xf]
                %939 = vst [vmem:[%s909 + $0x38] sm:$0xf] %v938
                %v940 = vld [vmem:[%s908 + $0x3c] sm:$0xf]
                %941 = vst [vmem:[%s909 + $0x3c] sm:$0xf] %v940
                %v942 = vld [vmem:[%s908 + $0x80] sm:$0xf]
                %943 = vst [vmem:[%s909 + $0x40] sm:$0xf] %v942
                %v944 = vld [vmem:[%s908 + $0x84] sm:$0xf]
                %945 = vst [vmem:[%s909 + $0x44] sm:$0xf] %v944
                %v946 = vld [vmem:[%s908 + $0x88] sm:$0xf]
                %947 = vst [vmem:[%s909 + $0x48] sm:$0xf] %v946
                %v948 = vld [vmem:[%s908 + $0x8c] sm:$0xf]
                %949 = vst [vmem:[%s909 + $0x4c] sm:$0xf] %v948
                %v950 = vld [vmem:[%s908 + $0x90] sm:$0xf]
                %951 = vst [vmem:[%s909 + $0x50] sm:$0xf] %v950
                %v952 = vld [vmem:[%s908 + $0x94] sm:$0xf]
                %953 = vst [vmem:[%s909 + $0x54] sm:$0xf] %v952
                %v954 = vld [vmem:[%s908 + $0x98] sm:$0xf]
                %955 = vst [vmem:[%s909 + $0x58] sm:$0xf] %v954
                %v956 = vld [vmem:[%s908 + $0x9c] sm:$0xf]
                %957 = vst [vmem:[%s909 + $0x5c] sm:$0xf] %v956
                %v958 = vld [vmem:[%s908 + $0xa0] sm:$0xf]
                %959 = vst [vmem:[%s909 + $0x60] sm:$0xf] %v958
                %v960 = vld [vmem:[%s908 + $0xa4] sm:$0xf]
                %961 = vst [vmem:[%s909 + $0x64] sm:$0xf] %v960
                %v962 = vld [vmem:[%s908 + $0xa8] sm:$0xf]
                %963 = vst [vmem:[%s909 + $0x68] sm:$0xf] %v962
                %v964 = vld [vmem:[%s908 + $0xac] sm:$0xf]
                %965 = vst [vmem:[%s909 + $0x6c] sm:$0xf] %v964
                %v966 = vld [vmem:[%s908 + $0xb0] sm:$0xf]
                %967 = vst [vmem:[%s909 + $0x70] sm:$0xf] %v966
                %v968 = vld [vmem:[%s908 + $0xb4] sm:$0xf]
                %969 = vst [vmem:[%s909 + $0x74] sm:$0xf] %v968
                %v970 = vld [vmem:[%s908 + $0xb8] sm:$0xf]
                %971 = vst [vmem:[%s909 + $0x78] sm:$0xf] %v970
                %v972 = vld [vmem:[%s908 + $0xbc] sm:$0xf]
                %973 = vst [vmem:[%s909 + $0x7c] sm:$0xf] %v972
                %v974 = vld [vmem:[%s908 + $0x100] sm:$0xf]
                %975 = vst [vmem:[%s909 + $0x80] sm:$0xf] %v974
                %v976 = vld [vmem:[%s908 + $0x104] sm:$0xf]
                %977 = vst [vmem:[%s909 + $0x84] sm:$0xf] %v976
                %v978 = vld [vmem:[%s908 + $0x108] sm:$0xf]
                %979 = vst [vmem:[%s909 + $0x88] sm:$0xf] %v978
                %v980 = vld [vmem:[%s908 + $0x10c] sm:$0xf]
                %981 = vst [vmem:[%s909 + $0x8c] sm:$0xf] %v980
                %v982 = vld [vmem:[%s908 + $0x110] sm:$0xf]
                %983 = vst [vmem:[%s909 + $0x90] sm:$0xf] %v982
                %v984 = vld [vmem:[%s908 + $0x114] sm:$0xf]
                %985 = vst [vmem:[%s909 + $0x94] sm:$0xf] %v984
                %v986 = vld [vmem:[%s908 + $0x118] sm:$0xf]
                %987 = vst [vmem:[%s909 + $0x98] sm:$0xf] %v986
                %v988 = vld [vmem:[%s908 + $0x11c] sm:$0xf]
                %989 = vst [vmem:[%s909 + $0x9c] sm:$0xf] %v988
                %v990 = vld [vmem:[%s908 + $0x120] sm:$0xf]
                %991 = vst [vmem:[%s909 + $0xa0] sm:$0xf] %v990
                %v992 = vld [vmem:[%s908 + $0x124] sm:$0xf]
                %993 = vst [vmem:[%s909 + $0xa4] sm:$0xf] %v992
                %v994 = vld [vmem:[%s908 + $0x128] sm:$0xf]
                %995 = vst [vmem:[%s909 + $0xa8] sm:$0xf] %v994
                %v996 = vld [vmem:[%s908 + $0x12c] sm:$0xf]
                %997 = vst [vmem:[%s909 + $0xac] sm:$0xf] %v996
                %v998 = vld [vmem:[%s908 + $0x130] sm:$0xf]
                %999 = vst [vmem:[%s909 + $0xb0] sm:$0xf] %v998
                %v1000 = vld [vmem:[%s908 + $0x134] sm:$0xf]
                %1001 = vst [vmem:[%s909 + $0xb4] sm:$0xf] %v1000
                %v1002 = vld [vmem:[%s908 + $0x138] sm:$0xf]
                %1003 = vst [vmem:[%s909 + $0xb8] sm:$0xf] %v1002
                %v1004 = vld [vmem:[%s908 + $0x13c] sm:$0xf]
                %1005 = vst [vmem:[%s909 + $0xbc] sm:$0xf] %v1004
                %v1006 = vld [vmem:[%s908 + $0x180] sm:$0xf]
                %1007 = vst [vmem:[%s909 + $0xc0] sm:$0xf] %v1006
                %v1008 = vld [vmem:[%s908 + $0x184] sm:$0xf]
                %1009 = vst [vmem:[%s909 + $0xc4] sm:$0xf] %v1008
                %v1010 = vld [vmem:[%s908 + $0x188] sm:$0xf]
                %1011 = vst [vmem:[%s909 + $0xc8] sm:$0xf] %v1010
                %v1012 = vld [vmem:[%s908 + $0x18c] sm:$0xf]
                %1013 = vst [vmem:[%s909 + $0xcc] sm:$0xf] %v1012
                %v1014 = vld [vmem:[%s908 + $0x190] sm:$0xf]
                %1015 = vst [vmem:[%s909 + $0xd0] sm:$0xf] %v1014
                %v1016 = vld [vmem:[%s908 + $0x194] sm:$0xf]
                %1017 = vst [vmem:[%s909 + $0xd4] sm:$0xf] %v1016
                %v1018 = vld [vmem:[%s908 + $0x198] sm:$0xf]
                %1019 = vst [vmem:[%s909 + $0xd8] sm:$0xf] %v1018
                %v1020 = vld [vmem:[%s908 + $0x19c] sm:$0xf]
                %1021 = vst [vmem:[%s909 + $0xdc] sm:$0xf] %v1020
                %v1022 = vld [vmem:[%s908 + $0x1a0] sm:$0xf]
                %1023 = vst [vmem:[%s909 + $0xe0] sm:$0xf] %v1022
                %v1024 = vld [vmem:[%s908 + $0x1a4] sm:$0xf]
                %1025 = vst [vmem:[%s909 + $0xe4] sm:$0xf] %v1024
                %v1026 = vld [vmem:[%s908 + $0x1a8] sm:$0xf]
                %1027 = vst [vmem:[%s909 + $0xe8] sm:$0xf] %v1026
                %v1028 = vld [vmem:[%s908 + $0x1ac] sm:$0xf]
                %1029 = vst [vmem:[%s909 + $0xec] sm:$0xf] %v1028
                %v1030 = vld [vmem:[%s908 + $0x1b0] sm:$0xf]
                %1031 = vst [vmem:[%s909 + $0xf0] sm:$0xf] %v1030
                %v1032 = vld [vmem:[%s908 + $0x1b4] sm:$0xf]
                %1033 = vst [vmem:[%s909 + $0xf4] sm:$0xf] %v1032
                %v1034 = vld [vmem:[%s908 + $0x1b8] sm:$0xf]
                %1035 = vst [vmem:[%s909 + $0xf8] sm:$0xf] %v1034
                %v1036 = vld [vmem:[%s908 + $0x1bc] sm:$0xf]
                %1037 = vst [vmem:[%s909 + $0xfc] sm:$0xf] %v1036
                %v1038 = vld [vmem:[%s908 + $0x200] sm:$0xf]
                %1039 = vst [vmem:[%s909 + $0x100] sm:$0xf] %v1038
                %v1040 = vld [vmem:[%s908 + $0x204] sm:$0xf]
                %1041 = vst [vmem:[%s909 + $0x104] sm:$0xf] %v1040
                %v1042 = vld [vmem:[%s908 + $0x208] sm:$0xf]
                %1043 = vst [vmem:[%s909 + $0x108] sm:$0xf] %v1042
                %v1044 = vld [vmem:[%s908 + $0x20c] sm:$0xf]
                %1045 = vst [vmem:[%s909 + $0x10c] sm:$0xf] %v1044
                %v1046 = vld [vmem:[%s908 + $0x210] sm:$0xf]
                %1047 = vst [vmem:[%s909 + $0x110] sm:$0xf] %v1046
                %v1048 = vld [vmem:[%s908 + $0x214] sm:$0xf]
                %1049 = vst [vmem:[%s909 + $0x114] sm:$0xf] %v1048
                %v1050 = vld [vmem:[%s908 + $0x218] sm:$0xf]
                %1051 = vst [vmem:[%s909 + $0x118] sm:$0xf] %v1050
                %v1052 = vld [vmem:[%s908 + $0x21c] sm:$0xf]
                %1053 = vst [vmem:[%s909 + $0x11c] sm:$0xf] %v1052
                %v1054 = vld [vmem:[%s908 + $0x220] sm:$0xf]
                %1055 = vst [vmem:[%s909 + $0x120] sm:$0xf] %v1054
                %v1056 = vld [vmem:[%s908 + $0x224] sm:$0xf]
                %1057 = vst [vmem:[%s909 + $0x124] sm:$0xf] %v1056
                %v1058 = vld [vmem:[%s908 + $0x228] sm:$0xf]
                %1059 = vst [vmem:[%s909 + $0x128] sm:$0xf] %v1058
                %v1060 = vld [vmem:[%s908 + $0x22c] sm:$0xf]
                %1061 = vst [vmem:[%s909 + $0x12c] sm:$0xf] %v1060
                %v1062 = vld [vmem:[%s908 + $0x230] sm:$0xf]
                %1063 = vst [vmem:[%s909 + $0x130] sm:$0xf] %v1062
                %v1064 = vld [vmem:[%s908 + $0x234] sm:$0xf]
                %1065 = vst [vmem:[%s909 + $0x134] sm:$0xf] %v1064
                %v1066 = vld [vmem:[%s908 + $0x238] sm:$0xf]
                %1067 = vst [vmem:[%s909 + $0x138] sm:$0xf] %v1066
                %v1068 = vld [vmem:[%s908 + $0x23c] sm:$0xf]
                %1069 = vst [vmem:[%s909 + $0x13c] sm:$0xf] %v1068
                %v1070 = vld [vmem:[%s908 + $0x280] sm:$0xf]
                %1071 = vst [vmem:[%s909 + $0x140] sm:$0xf] %v1070
                %v1072 = vld [vmem:[%s908 + $0x284] sm:$0xf]
                %1073 = vst [vmem:[%s909 + $0x144] sm:$0xf] %v1072
                %v1074 = vld [vmem:[%s908 + $0x288] sm:$0xf]
                %1075 = vst [vmem:[%s909 + $0x148] sm:$0xf] %v1074
                %v1076 = vld [vmem:[%s908 + $0x28c] sm:$0xf]
                %1077 = vst [vmem:[%s909 + $0x14c] sm:$0xf] %v1076
                %v1078 = vld [vmem:[%s908 + $0x290] sm:$0xf]
                %1079 = vst [vmem:[%s909 + $0x150] sm:$0xf] %v1078
                %v1080 = vld [vmem:[%s908 + $0x294] sm:$0xf]
                %1081 = vst [vmem:[%s909 + $0x154] sm:$0xf] %v1080
                %v1082 = vld [vmem:[%s908 + $0x298] sm:$0xf]
                %1083 = vst [vmem:[%s909 + $0x158] sm:$0xf] %v1082
                %v1084 = vld [vmem:[%s908 + $0x29c] sm:$0xf]
                %1085 = vst [vmem:[%s909 + $0x15c] sm:$0xf] %v1084
                %v1086 = vld [vmem:[%s908 + $0x2a0] sm:$0xf]
                %1087 = vst [vmem:[%s909 + $0x160] sm:$0xf] %v1086
                %v1088 = vld [vmem:[%s908 + $0x2a4] sm:$0xf]
                %1089 = vst [vmem:[%s909 + $0x164] sm:$0xf] %v1088
                %v1090 = vld [vmem:[%s908 + $0x2a8] sm:$0xf]
                %1091 = vst [vmem:[%s909 + $0x168] sm:$0xf] %v1090
                %v1092 = vld [vmem:[%s908 + $0x2ac] sm:$0xf]
                %1093 = vst [vmem:[%s909 + $0x16c] sm:$0xf] %v1092
                %v1094 = vld [vmem:[%s908 + $0x2b0] sm:$0xf]
                %1095 = vst [vmem:[%s909 + $0x170] sm:$0xf] %v1094
                %v1096 = vld [vmem:[%s908 + $0x2b4] sm:$0xf]
                %1097 = vst [vmem:[%s909 + $0x174] sm:$0xf] %v1096
                %v1098 = vld [vmem:[%s908 + $0x2b8] sm:$0xf]
                %1099 = vst [vmem:[%s909 + $0x178] sm:$0xf] %v1098
                %v1100 = vld [vmem:[%s908 + $0x2bc] sm:$0xf]
                %1101 = vst [vmem:[%s909 + $0x17c] sm:$0xf] %v1100
                %v1102 = vld [vmem:[%s908 + $0x300] sm:$0xf]
                %1103 = vst [vmem:[%s909 + $0x180] sm:$0xf] %v1102
                %v1104 = vld [vmem:[%s908 + $0x304] sm:$0xf]
                %1105 = vst [vmem:[%s909 + $0x184] sm:$0xf] %v1104
                %v1106 = vld [vmem:[%s908 + $0x308] sm:$0xf]
                %1107 = vst [vmem:[%s909 + $0x188] sm:$0xf] %v1106
                %v1108 = vld [vmem:[%s908 + $0x30c] sm:$0xf]
                %1109 = vst [vmem:[%s909 + $0x18c] sm:$0xf] %v1108
                %v1110 = vld [vmem:[%s908 + $0x310] sm:$0xf]
                %1111 = vst [vmem:[%s909 + $0x190] sm:$0xf] %v1110
                %v1112 = vld [vmem:[%s908 + $0x314] sm:$0xf]
                %1113 = vst [vmem:[%s909 + $0x194] sm:$0xf] %v1112
                %v1114 = vld [vmem:[%s908 + $0x318] sm:$0xf]
                %1115 = vst [vmem:[%s909 + $0x198] sm:$0xf] %v1114
                %v1116 = vld [vmem:[%s908 + $0x31c] sm:$0xf]
                %1117 = vst [vmem:[%s909 + $0x19c] sm:$0xf] %v1116
                %v1118 = vld [vmem:[%s908 + $0x320] sm:$0xf]
                %1119 = vst [vmem:[%s909 + $0x1a0] sm:$0xf] %v1118
                %v1120 = vld [vmem:[%s908 + $0x324] sm:$0xf]
                %1121 = vst [vmem:[%s909 + $0x1a4] sm:$0xf] %v1120
                %v1122 = vld [vmem:[%s908 + $0x328] sm:$0xf]
                %1123 = vst [vmem:[%s909 + $0x1a8] sm:$0xf] %v1122
                %v1124 = vld [vmem:[%s908 + $0x32c] sm:$0xf]
                %1125 = vst [vmem:[%s909 + $0x1ac] sm:$0xf] %v1124
                %v1126 = vld [vmem:[%s908 + $0x330] sm:$0xf]
                %1127 = vst [vmem:[%s909 + $0x1b0] sm:$0xf] %v1126
                %v1128 = vld [vmem:[%s908 + $0x334] sm:$0xf]
                %1129 = vst [vmem:[%s909 + $0x1b4] sm:$0xf] %v1128
                %v1130 = vld [vmem:[%s908 + $0x338] sm:$0xf]
                %1131 = vst [vmem:[%s909 + $0x1b8] sm:$0xf] %v1130
                %v1132 = vld [vmem:[%s908 + $0x33c] sm:$0xf]
                %1133 = vst [vmem:[%s909 + $0x1bc] sm:$0xf] %v1132
                %v1134 = vld [vmem:[%s908 + $0x380] sm:$0xf]
                %1135 = vst [vmem:[%s909 + $0x1c0] sm:$0xf] %v1134
                %v1136 = vld [vmem:[%s908 + $0x384] sm:$0xf]
                %1137 = vst [vmem:[%s909 + $0x1c4] sm:$0xf] %v1136
                %v1138 = vld [vmem:[%s908 + $0x388] sm:$0xf]
                %1139 = vst [vmem:[%s909 + $0x1c8] sm:$0xf] %v1138
                %v1140 = vld [vmem:[%s908 + $0x38c] sm:$0xf]
                %1141 = vst [vmem:[%s909 + $0x1cc] sm:$0xf] %v1140
                %v1142 = vld [vmem:[%s908 + $0x390] sm:$0xf]
                %1143 = vst [vmem:[%s909 + $0x1d0] sm:$0xf] %v1142
                %v1144 = vld [vmem:[%s908 + $0x394] sm:$0xf]
                %1145 = vst [vmem:[%s909 + $0x1d4] sm:$0xf] %v1144
                %v1146 = vld [vmem:[%s908 + $0x398] sm:$0xf]
                %1147 = vst [vmem:[%s909 + $0x1d8] sm:$0xf] %v1146
                %v1148 = vld [vmem:[%s908 + $0x39c] sm:$0xf]
                %1149 = vst [vmem:[%s909 + $0x1dc] sm:$0xf] %v1148
                %v1150 = vld [vmem:[%s908 + $0x3a0] sm:$0xf]
                %1151 = vst [vmem:[%s909 + $0x1e0] sm:$0xf] %v1150
                %v1152 = vld [vmem:[%s908 + $0x3a4] sm:$0xf]
                %1153 = vst [vmem:[%s909 + $0x1e4] sm:$0xf] %v1152
                %v1154 = vld [vmem:[%s908 + $0x3a8] sm:$0xf]
                %1155 = vst [vmem:[%s909 + $0x1e8] sm:$0xf] %v1154
                %v1156 = vld [vmem:[%s908 + $0x3ac] sm:$0xf]
                %1157 = vst [vmem:[%s909 + $0x1ec] sm:$0xf] %v1156
                %v1158 = vld [vmem:[%s908 + $0x3b0] sm:$0xf]
                %1159 = vst [vmem:[%s909 + $0x1f0] sm:$0xf] %v1158
                %v1160 = vld [vmem:[%s908 + $0x3b4] sm:$0xf]
                %1161 = vst [vmem:[%s909 + $0x1f4] sm:$0xf] %v1160
                %v1162 = vld [vmem:[%s908 + $0x3b8] sm:$0xf]
                %1163 = vst [vmem:[%s909 + $0x1f8] sm:$0xf] %v1162
                %v1164 = vld [vmem:[%s908 + $0x3bc] sm:$0xf]
                %1165 = vst [vmem:[%s909 + $0x1fc] sm:$0xf] %v1164
              $region90: #{tpu_custom_call.1} parent=84 // loop_footer
                %s907 = sadd.s32 1, %s903
              $region91: #{tpu_custom_call.1} parent=84 // loop_footer_branch
                %902 = sbr.rel target = $region87
              $region92: #{tpu_custom_call.1} parent=84 // loop_exit
                _
            $region85: #{tpu_custom_call.1} parent=76 // pred_fallthru
              _
          $region77: #{tpu_custom_call.1} parent=72 // pred_fallthru
            _
          %1441 = vnop
        $region73: #{tpu_custom_call.1} parent=27 // pred_fallthru
          _
        // Predicated region
        $region111: #{tpu_custom_call.1} parent=27 // pred_check
          %p1442 = pneg %p136
        $region112: #{tpu_custom_call.1} parent=27 // pred_check_branch
          %1444 = sbr.rel (%p1442) target = $region114
        $region113: #{tpu_custom_call.1} parent=27 // pred_region
          %p1445 = scmp.lt.s32.totalorder %s27, 0
          %s1446 = scalar_select %p1445, %s27, 0
          %p1447 = scmp.lt.s32.totalorder %s28, 1
          %s1448 = scalar_select %p1447, %s28, 1
          %s1449 = smul.addr %s1446, 2
          %s1450 = sadd.s32 %s1448, %s1449
          %s1451 = smul.addr %s1450, 8
          %s1452 = scalar_lea.vmem %s3, %s1451
        $region114: #{tpu_custom_call.1} parent=27 // pred_fallthru
          _
      $region28: #{tpu_custom_call.1} parent=5 // pred_fallthru
        _
      %p1453 = scmp.le.s32.totalorder 1, %s20
      %p1454 = scmp.lt.s32.totalorder %s20, 3
      %p1455 = pnand %p1453, %p1454
      %p1456 = pneg %p1455
      // Predicated region
      $region115: #{tpu_custom_call.1} parent=5 // pred_check
        _
      $region116: #{tpu_custom_call.1} parent=5 // pred_check_branch
        %1458 = sbr.rel (%p1455) target = $region118
      $region117: #{tpu_custom_call.1} parent=5 // pred_region
        %s1459 = ssub.s32 %s20, 1
        %s1460 = sand.u32 %s73, 1
        %s1461 = sand.u32 %s73, 1
        %s1462 = smul.addr %s1461, 512
        %s1463 = scalar_lea.vmem [#allocation6], %s1462
        // Predicated region
        $region119: #{tpu_custom_call.1} parent=117 // pred_check
          %p1464 = pneg %p86
        $region120: #{tpu_custom_call.1} parent=117 // pred_check_branch
          %1466 = sbr.rel (%p1464) target = $region122
        $region121: #{tpu_custom_call.1} parent=117 // pred_region
          _
        $region122: #{tpu_custom_call.1} parent=117 // pred_fallthru
          _
        %s1467 = sand.u32 %s101, 1
        %s1468 = sand.u32 %s101, 1
        %s1469 = smul.addr %s1468, 512
        %s1470 = scalar_lea.vmem [#allocation7], %s1469
        // Predicated region
        $region123: #{tpu_custom_call.1} parent=117 // pred_check
          %p1471 = pneg %p114
        $region124: #{tpu_custom_call.1} parent=117 // pred_check_branch
          %1473 = sbr.rel (%p1471) target = $region126
        $region125: #{tpu_custom_call.1} parent=117 // pred_region
          _
        $region126: #{tpu_custom_call.1} parent=117 // pred_fallthru
          _
        %p1474 = scmp.lt.s32.totalorder %s29, 0
        %s1475 = scalar_select %p1474, %s29, 0
        %s1476 = smul.addr %s1475, 8
        %s1477 = scalar_lea.vmem %s0, %s1476
        %p1478 = pneg %p58
        %p1479 = pneg %p55
        %s1480 = sand.u32 %s73, 1
        %s1481 = sand.u32 %s73, 1
        %s1482 = smul.addr %s1481, 512
        %s1483 = scalar_lea.vmem [#allocation6], %s1482
        %p1484 = pneg %p86
        %p1485 = pneg %p83
        %s1486 = sand.u32 %s101, 1
        %s1487 = sand.u32 %s101, 1
        %s1488 = smul.addr %s1487, 512
        %s1489 = scalar_lea.vmem [#allocation7], %s1488
        %p1490 = pneg %p114
        %p1491 = pneg %p111
        %p1492 = scmp.lt.s32.totalorder %s29, 0
        %s1493 = scalar_select %p1492, %s29, 0
        %p1494 = scmp.lt.s32.totalorder %s30, 1
        %s1495 = scalar_select %p1494, %s30, 1
        %s1496 = smul.addr %s1493, 2
        %s1497 = sadd.s32 %s1495, %s1496
        %s1498 = smul.addr %s1497, 8
        %s1499 = scalar_lea.vmem %s3, %s1498
        %p1500 = pneg %p142
        %p1501 = pneg %p139
        %p1502 = pneg %p163
        %p1503 = pneg %p160
        %p1504 = pneg %p184
        %p1505 = pneg %p181
        %p1506 = pneg %p212
        %p1507 = pneg %p209
        %s1508 = sand.u32 %s199, 1
        %s1509 = scalar_lea.sflag [#allocation9], %s1508
        %s1510 = sand.u32 %s199, 1
        %s1511 = smul.addr %s1510, 8
        %s1512 = scalar_lea.vmem [#allocation8], %s1511
        %p1513 = pneg %p238
        %p1514 = pneg %p235
        %p1515 = scmp.lt.s32.totalorder %s29, 0
        %s1516 = scalar_select %p1515, %s29, 0
        %s1517 = smul.addr %s1516, 8
        %s1518 = scalar_lea.vmem %s7, %s1517
        %p1519 = pneg %p264
        %p1520 = pneg %p261
        %p1521 = scmp.lt.s32.totalorder %s29, 0
        %s1522 = scalar_select %p1521, %s29, 0
        %s1523 = smul.addr %s1522, 8
        %s1524 = scalar_lea.vmem %s8, %s1523
        %p1525 = pneg %p290
        %p1526 = pneg %p287
        %p1527 = scmp.lt.s32.totalorder %s29, 0
        %s1528 = scalar_select %p1527, %s29, 0
        %s1529 = smul.addr %s1528, 8
        %s1530 = scalar_lea.vmem %s0, %s1529
        %s1531 = smul.u32 8, %s29
        %s1532 = smul.u32 16, %s30
        %s1533 = smul.u32 8, %s29
        %s1534 = smul.u32 16, %s30
        %p1535 = scmp.lt.s32.totalorder %s29, 0
        %s1536 = scalar_select %p1535, %s29, 0
        %p1537 = scmp.lt.s32.totalorder %s30, 1
        %s1538 = scalar_select %p1537, %s30, 1
        %s1539 = smul.addr %s1536, 2
        %s1540 = sadd.s32 %s1538, %s1539
        %s1541 = smul.addr %s1540, 8
        %s1542 = scalar_lea.vmem %s3, %s1541
        %p1543 = scmp.lt.s32.totalorder %s29, 0
        %s1544 = scalar_select %p1543, %s29, 0
        %s1545 = smul.addr %s1544, 8
        %s1546 = scalar_lea.vmem %s7, %s1545
        %p1547 = scmp.lt.s32.totalorder %s29, 0
        %s1548 = scalar_select %p1547, %s29, 0
        %s1549 = smul.addr %s1548, 8
        %s1550 = scalar_lea.vmem %s8, %s1549
        %p1552 = scmp.eq.s32.totalorder %s30, 0
        // Predicated region
        $region127: #{tpu_custom_call.1} parent=117 // pred_check
          %p1553 = pneg %p1552
        $region128: #{tpu_custom_call.1} parent=117 // pred_check_branch
          %1555 = sbr.rel (%p1553) target = $region130
        $region129: #{tpu_custom_call.1} parent=117 // pred_region
          %v1556 = vld [vmem:[%s5] sm:$0x1]
          %v1557 = vld [vmem:[%s1530] sm:$0xff]
          %v1558 = vpack.c.bf16 %v1557, %v1557
          %v1559 = vld [vmem:[%s4] sm:$0xf]
          %v1560 = vld [vmem:[%s4 + $0x4] sm:$0xf]
          %v1561 = vld [vmem:[%s4 + $0x8] sm:$0xf]
          %v1562 = vld [vmem:[%s4 + $0xc] sm:$0xf]
          %v1563 = vld [vmem:[%s4 + $0x10] sm:$0xf]
          %v1564 = vld [vmem:[%s4 + $0x14] sm:$0xf]
          %v1565 = vld [vmem:[%s4 + $0x18] sm:$0xf]
          %v1566 = vld [vmem:[%s4 + $0x1c] sm:$0xf]
          %v1567 = vlaneseq
          %v1568 = vshrl.u32 %v1567, 7
          %v1569 = vsub.s32 0, %v1568
          %v1570 = vrot.slane %v1556, %v1569
          %v1579 = vunpack.c.l.b16 %v1559
          %v1580 = vunpack.c.l.b16 %v1560
          %v1581 = vunpack.c.l.b16 %v1561
          %v1582 = vunpack.c.l.b16 %v1562
          %v1583 = vunpack.c.l.b16 %v1563
          %v1584 = vunpack.c.l.b16 %v1564
          %v1585 = vunpack.c.l.b16 %v1565
          %v1586 = vunpack.c.l.b16 %v1566
          %v1587 = vpack.c.b16 %v1580, %v1579
          %v1588 = vpack.c.b16 %v1582, %v1581
          %v1589 = vpack.c.b16 %v1584, %v1583
          %v1590 = vpack.c.b16 %v1586, %v1585
          %vm1595 = vcmask 523264
          %v1597 = vsel %vm1595, %v1558, 0
          %1599 = vmatprep.subr.bf16.mxu0 0
          %1600 = vmatpush1.bf16.msra.mxu0 %v1587
          %1601 = vmatprep.subr.bf16.mxu0 0
          %1602 = vmatpush1.bf16.msra.mxu0 %v1588
          %1603 = vmatprep.subr.bf16.mxu0 0
          %1604 = vmatpush1.bf16.msra.mxu0 %v1589
          %1605 = vmatprep.subr.bf16.mxu0 0
          %1606 = vmatpush1.bf16.msra.mxu0 %v1590
          %1607 = vmatprep.subr.bf16.mxu0 0
          %1608 = vmatpush1.bf16.msra.mxu0 0
          %1609 = vmatprep.subr.bf16.mxu0 0
          %1610 = vmatpush1.bf16.msra.mxu0 0
          %1611 = vmatprep.subr.bf16.mxu0 0
          %1612 = vmatpush1.bf16.msra.mxu0 0
          %1613 = vmatprep.subr.bf16.mxu0 0
          %1614 = vmatpush1.bf16.msra.mxu0 0
          %1615 = vmatprep.subr.bf16.mxu0 0
          %1616 = vmatpush1.bf16.msra.mxu0 0
          %1617 = vmatprep.subr.bf16.mxu0 0
          %1618 = vmatpush1.bf16.msra.mxu0 0
          %1619 = vmatprep.subr.bf16.mxu0 0
          %1620 = vmatpush1.bf16.msra.mxu0 0
          %1621 = vmatprep.subr.bf16.mxu0 0
          %1622 = vmatpush1.bf16.msra.mxu0 0
          %1623 = vmatprep.subr.bf16.mxu0 0
          %1624 = vmatpush1.bf16.msra.mxu0 0
          %1625 = vmatprep.subr.bf16.mxu0 0
          %1626 = vmatpush1.bf16.msra.mxu0 0
          %1627 = vmatprep.subr.bf16.mxu0 0
          %1628 = vmatpush1.bf16.msra.mxu0 0
          %1629 = vmatprep.subr.bf16.mxu0 0
          %1630 = vmatpush1.bf16.msra.mxu0 0
          %1631 = vmatprep.mubr.bf16.mxu0 0
          %1632 = vmatmul.mubr.bf16.gmra.mrb[0].mxu0 %v1597
          %v1633 = vpop.f32.mrb[0].mxu0
          %v1634 = vadd.f32 %v1570, %v1633
          %v1635 = vpop.f32.mrb[0].mxu0
          %v1636 = vpop.f32.mrb[0].mxu0
          %v1637 = vpop.f32.mrb[0].mxu0
          %1638 = vdwg.mxu0
          %1639 = vst.msk [vmem:[#allocation2] sm:$0xff] %vm1595, %v1634
          %vm1640 = vcmask 7168
          %1641 = vst.msk [vmem:[#allocation3] sm:$0xff] %vm1640, -3e+38
          %1642 = vst.msk [vmem:[#allocation4] sm:$0xff] %vm1640, 0.0
          %1643 = vst.msk [vmem:[#allocation5] sm:$0xff] %vm1595, 0.0
        $region130: #{tpu_custom_call.1} parent=117 // pred_fallthru
          _
        %v1644 = vld [vmem:[%s5 + $0x1] sm:$0x1]
        %v1645 = vld [vmem:[%s1470] sm:$0xf]
        %v1646 = vld [vmem:[%s1470 + $0x4] sm:$0xf]
        %v1647 = vld [vmem:[%s1470 + $0x8] sm:$0xf]
        %v1648 = vld [vmem:[%s1470 + $0xc] sm:$0xf]
        %v1649 = vld [vmem:[%s1470 + $0x10] sm:$0xf]
        %v1650 = vld [vmem:[%s1470 + $0x14] sm:$0xf]
        %v1651 = vld [vmem:[%s1470 + $0x18] sm:$0xf]
        %v1652 = vld [vmem:[%s1470 + $0x1c] sm:$0xf]
        %v1653 = vld [vmem:[%s1470 + $0x20] sm:$0xf]
        %v1654 = vld [vmem:[%s1470 + $0x24] sm:$0xf]
        %v1655 = vld [vmem:[%s1470 + $0x28] sm:$0xf]
        %v1656 = vld [vmem:[%s1470 + $0x2c] sm:$0xf]
        %v1657 = vld [vmem:[%s1470 + $0x30] sm:$0xf]
        %v1658 = vld [vmem:[%s1470 + $0x34] sm:$0xf]
        %v1659 = vld [vmem:[%s1470 + $0x38] sm:$0xf]
        %v1660 = vld [vmem:[%s1470 + $0x3c] sm:$0xf]
        %v1661 = vld [vmem:[%s1470 + $0x40] sm:$0xf]
        %v1662 = vld [vmem:[%s1470 + $0x44] sm:$0xf]
        %v1663 = vld [vmem:[%s1470 + $0x48] sm:$0xf]
        %v1664 = vld [vmem:[%s1470 + $0x4c] sm:$0xf]
        %v1665 = vld [vmem:[%s1470 + $0x50] sm:$0xf]
        %v1666 = vld [vmem:[%s1470 + $0x54] sm:$0xf]
        %v1667 = vld [vmem:[%s1470 + $0x58] sm:$0xf]
        %v1668 = vld [vmem:[%s1470 + $0x5c] sm:$0xf]
        %v1669 = vld [vmem:[%s1470 + $0x60] sm:$0xf]
        %v1670 = vld [vmem:[%s1470 + $0x64] sm:$0xf]
        %v1671 = vld [vmem:[%s1470 + $0x68] sm:$0xf]
        %v1672 = vld [vmem:[%s1470 + $0x6c] sm:$0xf]
        %v1673 = vld [vmem:[%s1470 + $0x70] sm:$0xf]
        %v1674 = vld [vmem:[%s1470 + $0x74] sm:$0xf]
        %v1675 = vld [vmem:[%s1470 + $0x78] sm:$0xf]
        %v1676 = vld [vmem:[%s1470 + $0x7c] sm:$0xf]
        %v1677 = vld [vmem:[%s1470 + $0x80] sm:$0xf]
        %v1678 = vld [vmem:[%s1470 + $0x84] sm:$0xf]
        %v1679 = vld [vmem:[%s1470 + $0x88] sm:$0xf]
        %v1680 = vld [vmem:[%s1470 + $0x8c] sm:$0xf]
        %v1681 = vld [vmem:[%s1470 + $0x90] sm:$0xf]
        %v1682 = vld [vmem:[%s1470 + $0x94] sm:$0xf]
        %v1683 = vld [vmem:[%s1470 + $0x98] sm:$0xf]
        %v1684 = vld [vmem:[%s1470 + $0x9c] sm:$0xf]
        %v1685 = vld [vmem:[%s1470 + $0xa0] sm:$0xf]
        %v1686 = vld [vmem:[%s1470 + $0xa4] sm:$0xf]
        %v1687 = vld [vmem:[%s1470 + $0xa8] sm:$0xf]
        %v1688 = vld [vmem:[%s1470 + $0xac] sm:$0xf]
        %v1689 = vld [vmem:[%s1470 + $0xb0] sm:$0xf]
        %v1690 = vld [vmem:[%s1470 + $0xb4] sm:$0xf]
        %v1691 = vld [vmem:[%s1470 + $0xb8] sm:$0xf]
        %v1692 = vld [vmem:[%s1470 + $0xbc] sm:$0xf]
        %v1693 = vld [vmem:[%s1470 + $0xc0] sm:$0xf]
        %v1694 = vld [vmem:[%s1470 + $0xc4] sm:$0xf]
        %v1695 = vld [vmem:[%s1470 + $0xc8] sm:$0xf]
        %v1696 = vld [vmem:[%s1470 + $0xcc] sm:$0xf]
        %v1697 = vld [vmem:[%s1470 + $0xd0] sm:$0xf]
        %v1698 = vld [vmem:[%s1470 + $0xd4] sm:$0xf]
        %v1699 = vld [vmem:[%s1470 + $0xd8] sm:$0xf]
        %v1700 = vld [vmem:[%s1470 + $0xdc] sm:$0xf]
        %v1701 = vld [vmem:[%s1470 + $0xe0] sm:$0xf]
        %v1702 = vld [vmem:[%s1470 + $0xe4] sm:$0xf]
        %v1703 = vld [vmem:[%s1470 + $0xe8] sm:$0xf]
        %v1704 = vld [vmem:[%s1470 + $0xec] sm:$0xf]
        %v1705 = vld [vmem:[%s1470 + $0xf0] sm:$0xf]
        %v1706 = vld [vmem:[%s1470 + $0xf4] sm:$0xf]
        %v1707 = vld [vmem:[%s1470 + $0xf8] sm:$0xf]
        %v1708 = vld [vmem:[%s1470 + $0xfc] sm:$0xf]
        %v1709 = vld [vmem:[%s1470 + $0x100] sm:$0xf]
        %v1710 = vld [vmem:[%s1470 + $0x104] sm:$0xf]
        %v1711 = vld [vmem:[%s1470 + $0x108] sm:$0xf]
        %v1712 = vld [vmem:[%s1470 + $0x10c] sm:$0xf]
        %v1713 = vld [vmem:[%s1470 + $0x110] sm:$0xf]
        %v1714 = vld [vmem:[%s1470 + $0x114] sm:$0xf]
        %v1715 = vld [vmem:[%s1470 + $0x118] sm:$0xf]
        %v1716 = vld [vmem:[%s1470 + $0x11c] sm:$0xf]
        %v1717 = vld [vmem:[%s1470 + $0x120] sm:$0xf]
        %v1718 = vld [vmem:[%s1470 + $0x124] sm:$0xf]
        %v1719 = vld [vmem:[%s1470 + $0x128] sm:$0xf]
        %v1720 = vld [vmem:[%s1470 + $0x12c] sm:$0xf]
        %v1721 = vld [vmem:[%s1470 + $0x130] sm:$0xf]
        %v1722 = vld [vmem:[%s1470 + $0x134] sm:$0xf]
        %v1723 = vld [vmem:[%s1470 + $0x138] sm:$0xf]
        %v1724 = vld [vmem:[%s1470 + $0x13c] sm:$0xf]
        %v1725 = vld [vmem:[%s1470 + $0x140] sm:$0xf]
        %v1726 = vld [vmem:[%s1470 + $0x144] sm:$0xf]
        %v1727 = vld [vmem:[%s1470 + $0x148] sm:$0xf]
        %v1728 = vld [vmem:[%s1470 + $0x14c] sm:$0xf]
        %v1729 = vld [vmem:[%s1470 + $0x150] sm:$0xf]
        %v1730 = vld [vmem:[%s1470 + $0x154] sm:$0xf]
        %v1731 = vld [vmem:[%s1470 + $0x158] sm:$0xf]
        %v1732 = vld [vmem:[%s1470 + $0x15c] sm:$0xf]
        %v1733 = vld [vmem:[%s1470 + $0x160] sm:$0xf]
        %v1734 = vld [vmem:[%s1470 + $0x164] sm:$0xf]
        %v1735 = vld [vmem:[%s1470 + $0x168] sm:$0xf]
        %v1736 = vld [vmem:[%s1470 + $0x16c] sm:$0xf]
        %v1737 = vld [vmem:[%s1470 + $0x170] sm:$0xf]
        %v1738 = vld [vmem:[%s1470 + $0x174] sm:$0xf]
        %v1739 = vld [vmem:[%s1470 + $0x178] sm:$0xf]
        %v1740 = vld [vmem:[%s1470 + $0x17c] sm:$0xf]
        %v1741 = vld [vmem:[%s1470 + $0x180] sm:$0xf]
        %v1742 = vld [vmem:[%s1470 + $0x184] sm:$0xf]
        %v1743 = vld [vmem:[%s1470 + $0x188] sm:$0xf]
        %v1744 = vld [vmem:[%s1470 + $0x18c] sm:$0xf]
        %v1745 = vld [vmem:[%s1470 + $0x190] sm:$0xf]
        %v1746 = vld [vmem:[%s1470 + $0x194] sm:$0xf]
        %v1747 = vld [vmem:[%s1470 + $0x198] sm:$0xf]
        %v1748 = vld [vmem:[%s1470 + $0x19c] sm:$0xf]
        %v1749 = vld [vmem:[%s1470 + $0x1a0] sm:$0xf]
        %v1750 = vld [vmem:[%s1470 + $0x1a4] sm:$0xf]
        %v1751 = vld [vmem:[%s1470 + $0x1a8] sm:$0xf]
        %v1752 = vld [vmem:[%s1470 + $0x1ac] sm:$0xf]
        %v1753 = vld [vmem:[%s1470 + $0x1b0] sm:$0xf]
        %v1754 = vld [vmem:[%s1470 + $0x1b4] sm:$0xf]
        %v1755 = vld [vmem:[%s1470 + $0x1b8] sm:$0xf]
        %v1756 = vld [vmem:[%s1470 + $0x1bc] sm:$0xf]
        %v1757 = vld [vmem:[%s1470 + $0x1c0] sm:$0xf]
        %v1758 = vld [vmem:[%s1470 + $0x1c4] sm:$0xf]
        %v1759 = vld [vmem:[%s1470 + $0x1c8] sm:$0xf]
        %v1760 = vld [vmem:[%s1470 + $0x1cc] sm:$0xf]
        %v1761 = vld [vmem:[%s1470 + $0x1d0] sm:$0xf]
        %v1762 = vld [vmem:[%s1470 + $0x1d4] sm:$0xf]
        %v1763 = vld [vmem:[%s1470 + $0x1d8] sm:$0xf]
        %v1764 = vld [vmem:[%s1470 + $0x1dc] sm:$0xf]
        %v1765 = vld [vmem:[%s1470 + $0x1e0] sm:$0xf]
        %v1766 = vld [vmem:[%s1470 + $0x1e4] sm:$0xf]
        %v1767 = vld [vmem:[%s1470 + $0x1e8] sm:$0xf]
        %v1768 = vld [vmem:[%s1470 + $0x1ec] sm:$0xf]
        %v1769 = vld [vmem:[%s1470 + $0x1f0] sm:$0xf]
        %v1770 = vld [vmem:[%s1470 + $0x1f4] sm:$0xf]
        %v1771 = vld [vmem:[%s1470 + $0x1f8] sm:$0xf]
        %v1772 = vld [vmem:[%s1470 + $0x1fc] sm:$0xf]
        %v1773 = vunpack.c.l.bf16 %v1645
        %v1774 = vunpack.c.l.bf16 %v1646
        %v1775 = vunpack.c.l.bf16 %v1647
        %v1776 = vunpack.c.l.bf16 %v1648
        %v1777 = vunpack.c.l.bf16 %v1649
        %v1778 = vunpack.c.l.bf16 %v1650
        %v1779 = vunpack.c.l.bf16 %v1651
        %v1780 = vunpack.c.l.bf16 %v1652
        %v1781 = vunpack.c.l.bf16 %v1653
        %v1782 = vunpack.c.l.bf16 %v1654
        %v1783 = vunpack.c.l.bf16 %v1655
        %v1784 = vunpack.c.l.bf16 %v1656
        %v1785 = vunpack.c.l.bf16 %v1657
        %v1786 = vunpack.c.l.bf16 %v1658
        %v1787 = vunpack.c.l.bf16 %v1659
        %v1788 = vunpack.c.l.bf16 %v1660
        %v1789 = vunpack.c.l.bf16 %v1661
        %v1790 = vunpack.c.l.bf16 %v1662
        %v1791 = vunpack.c.l.bf16 %v1663
        %v1792 = vunpack.c.l.bf16 %v1664
        %v1793 = vunpack.c.l.bf16 %v1665
        %v1794 = vunpack.c.l.bf16 %v1666
        %v1795 = vunpack.c.l.bf16 %v1667
        %v1796 = vunpack.c.l.bf16 %v1668
        %v1797 = vunpack.c.l.bf16 %v1669
        %v1798 = vunpack.c.l.bf16 %v1670
        %v1799 = vunpack.c.l.bf16 %v1671
        %v1800 = vunpack.c.l.bf16 %v1672
        %v1801 = vunpack.c.l.bf16 %v1673
        %v1802 = vunpack.c.l.bf16 %v1674
        %v1803 = vunpack.c.l.bf16 %v1675
        %v1804 = vunpack.c.l.bf16 %v1676
        %v1805 = vunpack.c.l.bf16 %v1677
        %v1806 = vunpack.c.l.bf16 %v1678
        %v1807 = vunpack.c.l.bf16 %v1679
        %v1808 = vunpack.c.l.bf16 %v1680
        %v1809 = vunpack.c.l.bf16 %v1681
        %v1810 = vunpack.c.l.bf16 %v1682
        %v1811 = vunpack.c.l.bf16 %v1683
        %v1812 = vunpack.c.l.bf16 %v1684
        %v1813 = vunpack.c.l.bf16 %v1685
        %v1814 = vunpack.c.l.bf16 %v1686
        %v1815 = vunpack.c.l.bf16 %v1687
        %v1816 = vunpack.c.l.bf16 %v1688
        %v1817 = vunpack.c.l.bf16 %v1689
        %v1818 = vunpack.c.l.bf16 %v1690
        %v1819 = vunpack.c.l.bf16 %v1691
        %v1820 = vunpack.c.l.bf16 %v1692
        %v1821 = vunpack.c.l.bf16 %v1693
        %v1822 = vunpack.c.l.bf16 %v1694
        %v1823 = vunpack.c.l.bf16 %v1695
        %v1824 = vunpack.c.l.bf16 %v1696
        %v1825 = vunpack.c.l.bf16 %v1697
        %v1826 = vunpack.c.l.bf16 %v1698
        %v1827 = vunpack.c.l.bf16 %v1699
        %v1828 = vunpack.c.l.bf16 %v1700
        %v1829 = vunpack.c.l.bf16 %v1701
        %v1830 = vunpack.c.l.bf16 %v1702
        %v1831 = vunpack.c.l.bf16 %v1703
        %v1832 = vunpack.c.l.bf16 %v1704
        %v1833 = vunpack.c.l.bf16 %v1705
        %v1834 = vunpack.c.l.bf16 %v1706
        %v1835 = vunpack.c.l.bf16 %v1707
        %v1836 = vunpack.c.l.bf16 %v1708
        %v1837 = vunpack.c.l.bf16 %v1709
        %v1838 = vunpack.c.l.bf16 %v1710
        %v1839 = vunpack.c.l.bf16 %v1711
        %v1840 = vunpack.c.l.bf16 %v1712
        %v1841 = vunpack.c.l.bf16 %v1713
        %v1842 = vunpack.c.l.bf16 %v1714
        %v1843 = vunpack.c.l.bf16 %v1715
        %v1844 = vunpack.c.l.bf16 %v1716
        %v1845 = vunpack.c.l.bf16 %v1717
        %v1846 = vunpack.c.l.bf16 %v1718
        %v1847 = vunpack.c.l.bf16 %v1719
        %v1848 = vunpack.c.l.bf16 %v1720
        %v1849 = vunpack.c.l.bf16 %v1721
        %v1850 = vunpack.c.l.bf16 %v1722
        %v1851 = vunpack.c.l.bf16 %v1723
        %v1852 = vunpack.c.l.bf16 %v1724
        %v1853 = vunpack.c.l.bf16 %v1725
        %v1854 = vunpack.c.l.bf16 %v1726
        %v1855 = vunpack.c.l.bf16 %v1727
        %v1856 = vunpack.c.l.bf16 %v1728
        %v1857 = vunpack.c.l.bf16 %v1729
        %v1858 = vunpack.c.l.bf16 %v1730
        %v1859 = vunpack.c.l.bf16 %v1731
        %v1860 = vunpack.c.l.bf16 %v1732
        %v1861 = vunpack.c.l.bf16 %v1733
        %v1862 = vunpack.c.l.bf16 %v1734
        %v1863 = vunpack.c.l.bf16 %v1735
        %v1864 = vunpack.c.l.bf16 %v1736
        %v1865 = vunpack.c.l.bf16 %v1737
        %v1866 = vunpack.c.l.bf16 %v1738
        %v1867 = vunpack.c.l.bf16 %v1739
        %v1868 = vunpack.c.l.bf16 %v1740
        %v1869 = vunpack.c.l.bf16 %v1741
        %v1870 = vunpack.c.l.bf16 %v1742
        %v1871 = vunpack.c.l.bf16 %v1743
        %v1872 = vunpack.c.l.bf16 %v1744
        %v1873 = vunpack.c.l.bf16 %v1745
        %v1874 = vunpack.c.l.bf16 %v1746
        %v1875 = vunpack.c.l.bf16 %v1747
        %v1876 = vunpack.c.l.bf16 %v1748
        %v1877 = vunpack.c.l.bf16 %v1749
        %v1878 = vunpack.c.l.bf16 %v1750
        %v1879 = vunpack.c.l.bf16 %v1751
        %v1880 = vunpack.c.l.bf16 %v1752
        %v1881 = vunpack.c.l.bf16 %v1753
        %v1882 = vunpack.c.l.bf16 %v1754
        %v1883 = vunpack.c.l.bf16 %v1755
        %v1884 = vunpack.c.l.bf16 %v1756
        %v1885 = vunpack.c.l.bf16 %v1757
        %v1886 = vunpack.c.l.bf16 %v1758
        %v1887 = vunpack.c.l.bf16 %v1759
        %v1888 = vunpack.c.l.bf16 %v1760
        %v1889 = vunpack.c.l.bf16 %v1761
        %v1890 = vunpack.c.l.bf16 %v1762
        %v1891 = vunpack.c.l.bf16 %v1763
        %v1892 = vunpack.c.l.bf16 %v1764
        %v1893 = vunpack.c.l.bf16 %v1765
        %v1894 = vunpack.c.l.bf16 %v1766
        %v1895 = vunpack.c.l.bf16 %v1767
        %v1896 = vunpack.c.l.bf16 %v1768
        %v1897 = vunpack.c.l.bf16 %v1769
        %v1898 = vunpack.c.l.bf16 %v1770
        %v1899 = vunpack.c.l.bf16 %v1771
        %v1900 = vunpack.c.l.bf16 %v1772
        %v1901 = vld [vmem:[#allocation2] sm:$0xff]
        %v1903 = vcombine.high %v1901, %v1901
        %v1905 = vunpack.c.l.s4 1966171168
        %v1906 = vunpack.c.0.s8 %v1905
        %v1907 = vlaneseq
        %v1908 = vshrl.u32 %v1907, 7
        %v1909 = vsub.s32 %v1906, %v1908
        %v1910 = vrot.slane %v1901, %v1909
        %v1912 = vunpack.c.l.s4 1966171168
        %v1913 = vunpack.c.0.s8 %v1912
        %v1914 = vlaneseq
        %v1915 = vshrl.u32 %v1914, 7
        %v1916 = vsub.s32 %v1913, %v1915
        %v1917 = vrot.slane %v1903, %v1916
        %v1918 = vcombine.high %v1910, %v1910
        %v1919 = vcombine.high %v1917, %v1917
        %v1921 = vunpack.c.l.s4 1966171168
        %v1922 = vunpack.c.0.s8 %v1921
        %v1923 = vlaneseq
        %v1924 = vshrl.u32 %v1923, 7
        %v1925 = vsub.s32 %v1922, %v1924
        %v1926 = vrot.slane %v1910, %v1925
        %v1928 = vunpack.c.l.s4 1966171168
        %v1929 = vunpack.c.0.s8 %v1928
        %v1930 = vlaneseq
        %v1931 = vshrl.u32 %v1930, 7
        %v1932 = vsub.s32 %v1929, %v1931
        %v1933 = vrot.slane %v1917, %v1932
        %v1935 = vunpack.c.l.s4 1966171168
        %v1936 = vunpack.c.0.s8 %v1935
        %v1937 = vlaneseq
        %v1938 = vshrl.u32 %v1937, 7
        %v1939 = vsub.s32 %v1936, %v1938
        %v1940 = vrot.slane %v1918, %v1939
        %v1942 = vunpack.c.l.s4 1966171168
        %v1943 = vunpack.c.0.s8 %v1942
        %v1944 = vlaneseq
        %v1945 = vshrl.u32 %v1944, 7
        %v1946 = vsub.s32 %v1943, %v1945
        %v1947 = vrot.slane %v1919, %v1946
        %v1948 = vcombine.high %v1926, %v1926
        %v1949 = vcombine.high %v1933, %v1933
        %v1950 = vcombine.high %v1940, %v1940
        %v1951 = vcombine.high %v1947, %v1947
        %v1952 = vlaneseq
        %v1953 = vshrl.u32 %v1952, 7
        %v1954 = vsub.s32 0, %v1953
        %v1955 = vrot.slane %v1926, %v1954
        %v1956 = vlaneseq
        %v1957 = vshrl.u32 %v1956, 7
        %v1958 = vsub.s32 0, %v1957
        %v1959 = vrot.slane %v1940, %v1958
        %v1960 = vlaneseq
        %v1961 = vshrl.u32 %v1960, 7
        %v1962 = vsub.s32 0, %v1961
        %v1963 = vrot.slane %v1948, %v1962
        %v1964 = vlaneseq
        %v1965 = vshrl.u32 %v1964, 7
        %v1966 = vsub.s32 0, %v1965
        %v1967 = vrot.slane %v1950, %v1966
        %v1968 = vlaneseq
        %v1969 = vshrl.u32 %v1968, 7
        %v1970 = vsub.s32 0, %v1969
        %v1971 = vrot.slane %v1933, %v1970
        %v1972 = vlaneseq
        %v1973 = vshrl.u32 %v1972, 7
        %v1974 = vsub.s32 0, %v1973
        %v1975 = vrot.slane %v1947, %v1974
        %v1976 = vlaneseq
        %v1977 = vshrl.u32 %v1976, 7
        %v1978 = vsub.s32 0, %v1977
        %v1979 = vrot.slane %v1949, %v1978
        %v1980 = vlaneseq
        %v1981 = vshrl.u32 %v1980, 7
        %v1982 = vsub.s32 0, %v1981
        %v1983 = vrot.slane %v1951, %v1982
        %v1992 = vadd.f32 %v1773, %v1955
        %v1993 = vadd.f32 %v1774, %v1955
        %v1994 = vadd.f32 %v1775, %v1955
        %v1995 = vadd.f32 %v1776, %v1955
        %v1996 = vadd.f32 %v1777, %v1955
        %v1997 = vadd.f32 %v1778, %v1955
        %v1998 = vadd.f32 %v1779, %v1955
        %v1999 = vadd.f32 %v1780, %v1955
        %v2000 = vadd.f32 %v1781, %v1955
        %v2001 = vadd.f32 %v1782, %v1955
        %v2002 = vadd.f32 %v1783, %v1955
        %v2003 = vadd.f32 %v1784, %v1955
        %v2004 = vadd.f32 %v1785, %v1955
        %v2005 = vadd.f32 %v1786, %v1955
        %v2006 = vadd.f32 %v1787, %v1955
        %v2007 = vadd.f32 %v1788, %v1955
        %v2008 = vadd.f32 %v1789, %v1959
        %v2009 = vadd.f32 %v1790, %v1959
        %v2010 = vadd.f32 %v1791, %v1959
        %v2011 = vadd.f32 %v1792, %v1959
        %v2012 = vadd.f32 %v1793, %v1959
        %v2013 = vadd.f32 %v1794, %v1959
        %v2014 = vadd.f32 %v1795, %v1959
        %v2015 = vadd.f32 %v1796, %v1959
        %v2016 = vadd.f32 %v1797, %v1959
        %v2017 = vadd.f32 %v1798, %v1959
        %v2018 = vadd.f32 %v1799, %v1959
        %v2019 = vadd.f32 %v1800, %v1959
        %v2020 = vadd.f32 %v1801, %v1959
        %v2021 = vadd.f32 %v1802, %v1959
        %v2022 = vadd.f32 %v1803, %v1959
        %v2023 = vadd.f32 %v1804, %v1959
        %v2024 = vadd.f32 %v1805, %v1963
        %v2025 = vadd.f32 %v1806, %v1963
        %v2026 = vadd.f32 %v1807, %v1963
        %v2027 = vadd.f32 %v1808, %v1963
        %v2028 = vadd.f32 %v1809, %v1963
        %v2029 = vadd.f32 %v1810, %v1963
        %v2030 = vadd.f32 %v1811, %v1963
        %v2031 = vadd.f32 %v1812, %v1963
        %v2032 = vadd.f32 %v1813, %v1963
        %v2033 = vadd.f32 %v1814, %v1963
        %v2034 = vadd.f32 %v1815, %v1963
        %v2035 = vadd.f32 %v1816, %v1963
        %v2036 = vadd.f32 %v1817, %v1963
        %v2037 = vadd.f32 %v1818, %v1963
        %v2038 = vadd.f32 %v1819, %v1963
        %v2039 = vadd.f32 %v1820, %v1963
        %v2040 = vadd.f32 %v1821, %v1967
        %v2041 = vadd.f32 %v1822, %v1967
        %v2042 = vadd.f32 %v1823, %v1967
        %v2043 = vadd.f32 %v1824, %v1967
        %v2044 = vadd.f32 %v1825, %v1967
        %v2045 = vadd.f32 %v1826, %v1967
        %v2046 = vadd.f32 %v1827, %v1967
        %v2047 = vadd.f32 %v1828, %v1967
        %v2048 = vadd.f32 %v1829, %v1967
        %v2049 = vadd.f32 %v1830, %v1967
        %v2050 = vadd.f32 %v1831, %v1967
        %v2051 = vadd.f32 %v1832, %v1967
        %v2052 = vadd.f32 %v1833, %v1967
        %v2053 = vadd.f32 %v1834, %v1967
        %v2054 = vadd.f32 %v1835, %v1967
        %v2055 = vadd.f32 %v1836, %v1967
        %v2056 = vadd.f32 %v1837, %v1971
        %v2057 = vadd.f32 %v1838, %v1971
        %v2058 = vadd.f32 %v1839, %v1971
        %v2059 = vadd.f32 %v1840, %v1971
        %v2060 = vadd.f32 %v1841, %v1971
        %v2061 = vadd.f32 %v1842, %v1971
        %v2062 = vadd.f32 %v1843, %v1971
        %v2063 = vadd.f32 %v1844, %v1971
        %v2064 = vadd.f32 %v1845, %v1971
        %v2065 = vadd.f32 %v1846, %v1971
        %v2066 = vadd.f32 %v1847, %v1971
        %v2067 = vadd.f32 %v1848, %v1971
        %v2068 = vadd.f32 %v1849, %v1971
        %v2069 = vadd.f32 %v1850, %v1971
        %v2070 = vadd.f32 %v1851, %v1971
        %v2071 = vadd.f32 %v1852, %v1971
        %v2072 = vadd.f32 %v1853, %v1975
        %v2073 = vadd.f32 %v1854, %v1975
        %v2074 = vadd.f32 %v1855, %v1975
        %v2075 = vadd.f32 %v1856, %v1975
        %v2076 = vadd.f32 %v1857, %v1975
        %v2077 = vadd.f32 %v1858, %v1975
        %v2078 = vadd.f32 %v1859, %v1975
        %v2079 = vadd.f32 %v1860, %v1975
        %v2080 = vadd.f32 %v1861, %v1975
        %v2081 = vadd.f32 %v1862, %v1975
        %v2082 = vadd.f32 %v1863, %v1975
        %v2083 = vadd.f32 %v1864, %v1975
        %v2084 = vadd.f32 %v1865, %v1975
        %v2085 = vadd.f32 %v1866, %v1975
        %v2086 = vadd.f32 %v1867, %v1975
        %v2087 = vadd.f32 %v1868, %v1975
        %v2088 = vadd.f32 %v1869, %v1979
        %v2089 = vadd.f32 %v1870, %v1979
        %v2090 = vadd.f32 %v1871, %v1979
        %v2091 = vadd.f32 %v1872, %v1979
        %v2092 = vadd.f32 %v1873, %v1979
        %v2093 = vadd.f32 %v1874, %v1979
        %v2094 = vadd.f32 %v1875, %v1979
        %v2095 = vadd.f32 %v1876, %v1979
        %v2096 = vadd.f32 %v1877, %v1979
        %v2097 = vadd.f32 %v1878, %v1979
        %v2098 = vadd.f32 %v1879, %v1979
        %v2099 = vadd.f32 %v1880, %v1979
        %v2100 = vadd.f32 %v1881, %v1979
        %v2101 = vadd.f32 %v1882, %v1979
        %v2102 = vadd.f32 %v1883, %v1979
        %v2103 = vadd.f32 %v1884, %v1979
        %v2104 = vadd.f32 %v1885, %v1983
        %v2105 = vadd.f32 %v1886, %v1983
        %v2106 = vadd.f32 %v1887, %v1983
        %v2107 = vadd.f32 %v1888, %v1983
        %v2108 = vadd.f32 %v1889, %v1983
        %v2109 = vadd.f32 %v1890, %v1983
        %v2110 = vadd.f32 %v1891, %v1983
        %v2111 = vadd.f32 %v1892, %v1983
        %v2112 = vadd.f32 %v1893, %v1983
        %v2113 = vadd.f32 %v1894, %v1983
        %v2114 = vadd.f32 %v1895, %v1983
        %v2115 = vadd.f32 %v1896, %v1983
        %v2116 = vadd.f32 %v1897, %v1983
        %v2117 = vadd.f32 %v1898, %v1983
        %v2118 = vadd.f32 %v1899, %v1983
        %v2119 = vadd.f32 %v1900, %v1983
        %v2120 = vtanh.pop %v1992
        %v2121 = vtanh.pop %v1993
        %v2122 = vtanh.pop %v1994
        %v2123 = vtanh.pop %v1995
        %v2124 = vtanh.pop %v1996
        %v2125 = vtanh.pop %v1997
        %v2126 = vtanh.pop %v1998
        %v2127 = vtanh.pop %v1999
        %v2128 = vtanh.pop %v2000
        %v2129 = vtanh.pop %v2001
        %v2130 = vtanh.pop %v2002
        %v2131 = vtanh.pop %v2003
        %v2132 = vtanh.pop %v2004
        %v2133 = vtanh.pop %v2005
        %v2134 = vtanh.pop %v2006
        %v2135 = vtanh.pop %v2007
        %v2136 = vtanh.pop %v2008
        %v2137 = vtanh.pop %v2009
        %v2138 = vtanh.pop %v2010
        %v2139 = vtanh.pop %v2011
        %v2140 = vtanh.pop %v2012
        %v2141 = vtanh.pop %v2013
        %v2142 = vtanh.pop %v2014
        %v2143 = vtanh.pop %v2015
        %v2144 = vtanh.pop %v2016
        %v2145 = vtanh.pop %v2017
        %v2146 = vtanh.pop %v2018
        %v2147 = vtanh.pop %v2019
        %v2148 = vtanh.pop %v2020
        %v2149 = vtanh.pop %v2021
        %v2150 = vtanh.pop %v2022
        %v2151 = vtanh.pop %v2023
        %v2152 = vtanh.pop %v2024
        %v2153 = vtanh.pop %v2025
        %v2154 = vtanh.pop %v2026
        %v2155 = vtanh.pop %v2027
        %v2156 = vtanh.pop %v2028
        %v2157 = vtanh.pop %v2029
        %v2158 = vtanh.pop %v2030
        %v2159 = vtanh.pop %v2031
        %v2160 = vtanh.pop %v2032
        %v2161 = vtanh.pop %v2033
        %v2162 = vtanh.pop %v2034
        %v2163 = vtanh.pop %v2035
        %v2164 = vtanh.pop %v2036
        %v2165 = vtanh.pop %v2037
        %v2166 = vtanh.pop %v2038
        %v2167 = vtanh.pop %v2039
        %v2168 = vtanh.pop %v2040
        %v2169 = vtanh.pop %v2041
        %v2170 = vtanh.pop %v2042
        %v2171 = vtanh.pop %v2043
        %v2172 = vtanh.pop %v2044
        %v2173 = vtanh.pop %v2045
        %v2174 = vtanh.pop %v2046
        %v2175 = vtanh.pop %v2047
        %v2176 = vtanh.pop %v2048
        %v2177 = vtanh.pop %v2049
        %v2178 = vtanh.pop %v2050
        %v2179 = vtanh.pop %v2051
        %v2180 = vtanh.pop %v2052
        %v2181 = vtanh.pop %v2053
        %v2182 = vtanh.pop %v2054
        %v2183 = vtanh.pop %v2055
        %v2184 = vtanh.pop %v2056
        %v2185 = vtanh.pop %v2057
        %v2186 = vtanh.pop %v2058
        %v2187 = vtanh.pop %v2059
        %v2188 = vtanh.pop %v2060
        %v2189 = vtanh.pop %v2061
        %v2190 = vtanh.pop %v2062
        %v2191 = vtanh.pop %v2063
        %v2192 = vtanh.pop %v2064
        %v2193 = vtanh.pop %v2065
        %v2194 = vtanh.pop %v2066
        %v2195 = vtanh.pop %v2067
        %v2196 = vtanh.pop %v2068
        %v2197 = vtanh.pop %v2069
        %v2198 = vtanh.pop %v2070
        %v2199 = vtanh.pop %v2071
        %v2200 = vtanh.pop %v2072
        %v2201 = vtanh.pop %v2073
        %v2202 = vtanh.pop %v2074
        %v2203 = vtanh.pop %v2075
        %v2204 = vtanh.pop %v2076
        %v2205 = vtanh.pop %v2077
        %v2206 = vtanh.pop %v2078
        %v2207 = vtanh.pop %v2079
        %v2208 = vtanh.pop %v2080
        %v2209 = vtanh.pop %v2081
        %v2210 = vtanh.pop %v2082
        %v2211 = vtanh.pop %v2083
        %v2212 = vtanh.pop %v2084
        %v2213 = vtanh.pop %v2085
        %v2214 = vtanh.pop %v2086
        %v2215 = vtanh.pop %v2087
        %v2216 = vtanh.pop %v2088
        %v2217 = vtanh.pop %v2089
        %v2218 = vtanh.pop %v2090
        %v2219 = vtanh.pop %v2091
        %v2220 = vtanh.pop %v2092
        %v2221 = vtanh.pop %v2093
        %v2222 = vtanh.pop %v2094
        %v2223 = vtanh.pop %v2095
        %v2224 = vtanh.pop %v2096
        %v2225 = vtanh.pop %v2097
        %v2226 = vtanh.pop %v2098
        %v2227 = vtanh.pop %v2099
        %v2228 = vtanh.pop %v2100
        %v2229 = vtanh.pop %v2101
        %v2230 = vtanh.pop %v2102
        %v2231 = vtanh.pop %v2103
        %v2232 = vtanh.pop %v2104
        %v2233 = vtanh.pop %v2105
        %v2234 = vtanh.pop %v2106
        %v2235 = vtanh.pop %v2107
        %v2236 = vtanh.pop %v2108
        %v2237 = vtanh.pop %v2109
        %v2238 = vtanh.pop %v2110
        %v2239 = vtanh.pop %v2111
        %v2240 = vtanh.pop %v2112
        %v2241 = vtanh.pop %v2113
        %v2242 = vtanh.pop %v2114
        %v2243 = vtanh.pop %v2115
        %v2244 = vtanh.pop %v2116
        %v2245 = vtanh.pop %v2117
        %v2246 = vtanh.pop %v2118
        %v2247 = vtanh.pop %v2119
        %v2248 = vlaneseq
        %v2249 = vshrl.u32 %v2248, 7
        %v2250 = vsub.s32 0, %v2249
        %v2251 = vrot.slane %v1644, %v2250
        %v2252 = vmul.f32 %v2120, %v2251
        %v2253 = vmul.f32 %v2121, %v2251
        %v2254 = vmul.f32 %v2122, %v2251
        %v2255 = vmul.f32 %v2123, %v2251
        %v2256 = vmul.f32 %v2124, %v2251
        %v2257 = vmul.f32 %v2125, %v2251
        %v2258 = vmul.f32 %v2126, %v2251
        %v2259 = vmul.f32 %v2127, %v2251
        %v2260 = vmul.f32 %v2128, %v2251
        %v2261 = vmul.f32 %v2129, %v2251
        %v2262 = vmul.f32 %v2130, %v2251
        %v2263 = vmul.f32 %v2131, %v2251
        %v2264 = vmul.f32 %v2132, %v2251
        %v2265 = vmul.f32 %v2133, %v2251
        %v2266 = vmul.f32 %v2134, %v2251
        %v2267 = vmul.f32 %v2135, %v2251
        %v2268 = vmul.f32 %v2136, %v2251
        %v2269 = vmul.f32 %v2137, %v2251
        %v2270 = vmul.f32 %v2138, %v2251
        %v2271 = vmul.f32 %v2139, %v2251
        %v2272 = vmul.f32 %v2140, %v2251
        %v2273 = vmul.f32 %v2141, %v2251
        %v2274 = vmul.f32 %v2142, %v2251
        %v2275 = vmul.f32 %v2143, %v2251
        %v2276 = vmul.f32 %v2144, %v2251
        %v2277 = vmul.f32 %v2145, %v2251
        %v2278 = vmul.f32 %v2146, %v2251
        %v2279 = vmul.f32 %v2147, %v2251
        %v2280 = vmul.f32 %v2148, %v2251
        %v2281 = vmul.f32 %v2149, %v2251
        %v2282 = vmul.f32 %v2150, %v2251
        %v2283 = vmul.f32 %v2151, %v2251
        %v2284 = vmul.f32 %v2152, %v2251
        %v2285 = vmul.f32 %v2153, %v2251
        %v2286 = vmul.f32 %v2154, %v2251
        %v2287 = vmul.f32 %v2155, %v2251
        %v2288 = vmul.f32 %v2156, %v2251
        %v2289 = vmul.f32 %v2157, %v2251
        %v2290 = vmul.f32 %v2158, %v2251
        %v2291 = vmul.f32 %v2159, %v2251
        %v2292 = vmul.f32 %v2160, %v2251
        %v2293 = vmul.f32 %v2161, %v2251
        %v2294 = vmul.f32 %v2162, %v2251
        %v2295 = vmul.f32 %v2163, %v2251
        %v2296 = vmul.f32 %v2164, %v2251
        %v2297 = vmul.f32 %v2165, %v2251
        %v2298 = vmul.f32 %v2166, %v2251
        %v2299 = vmul.f32 %v2167, %v2251
        %v2300 = vmul.f32 %v2168, %v2251
        %v2301 = vmul.f32 %v2169, %v2251
        %v2302 = vmul.f32 %v2170, %v2251
        %v2303 = vmul.f32 %v2171, %v2251
        %v2304 = vmul.f32 %v2172, %v2251
        %v2305 = vmul.f32 %v2173, %v2251
        %v2306 = vmul.f32 %v2174, %v2251
        %v2307 = vmul.f32 %v2175, %v2251
        %v2308 = vmul.f32 %v2176, %v2251
        %v2309 = vmul.f32 %v2177, %v2251
        %v2310 = vmul.f32 %v2178, %v2251
        %v2311 = vmul.f32 %v2179, %v2251
        %v2312 = vmul.f32 %v2180, %v2251
        %v2313 = vmul.f32 %v2181, %v2251
        %v2314 = vmul.f32 %v2182, %v2251
        %v2315 = vmul.f32 %v2183, %v2251
        %v2316 = vmul.f32 %v2184, %v2251
        %v2317 = vmul.f32 %v2185, %v2251
        %v2318 = vmul.f32 %v2186, %v2251
        %v2319 = vmul.f32 %v2187, %v2251
        %v2320 = vmul.f32 %v2188, %v2251
        %v2321 = vmul.f32 %v2189, %v2251
        %v2322 = vmul.f32 %v2190, %v2251
        %v2323 = vmul.f32 %v2191, %v2251
        %v2324 = vmul.f32 %v2192, %v2251
        %v2325 = vmul.f32 %v2193, %v2251
        %v2326 = vmul.f32 %v2194, %v2251
        %v2327 = vmul.f32 %v2195, %v2251
        %v2328 = vmul.f32 %v2196, %v2251
        %v2329 = vmul.f32 %v2197, %v2251
        %v2330 = vmul.f32 %v2198, %v2251
        %v2331 = vmul.f32 %v2199, %v2251
        %v2332 = vmul.f32 %v2200, %v2251
        %v2333 = vmul.f32 %v2201, %v2251
        %v2334 = vmul.f32 %v2202, %v2251
        %v2335 = vmul.f32 %v2203, %v2251
        %v2336 = vmul.f32 %v2204, %v2251
        %v2337 = vmul.f32 %v2205, %v2251
        %v2338 = vmul.f32 %v2206, %v2251
        %v2339 = vmul.f32 %v2207, %v2251
        %v2340 = vmul.f32 %v2208, %v2251
        %v2341 = vmul.f32 %v2209, %v2251
        %v2342 = vmul.f32 %v2210, %v2251
        %v2343 = vmul.f32 %v2211, %v2251
        %v2344 = vmul.f32 %v2212, %v2251
        %v2345 = vmul.f32 %v2213, %v2251
        %v2346 = vmul.f32 %v2214, %v2251
        %v2347 = vmul.f32 %v2215, %v2251
        %v2348 = vmul.f32 %v2216, %v2251
        %v2349 = vmul.f32 %v2217, %v2251
        %v2350 = vmul.f32 %v2218, %v2251
        %v2351 = vmul.f32 %v2219, %v2251
        %v2352 = vmul.f32 %v2220, %v2251
        %v2353 = vmul.f32 %v2221, %v2251
        %v2354 = vmul.f32 %v2222, %v2251
        %v2355 = vmul.f32 %v2223, %v2251
        %v2356 = vmul.f32 %v2224, %v2251
        %v2357 = vmul.f32 %v2225, %v2251
        %v2358 = vmul.f32 %v2226, %v2251
        %v2359 = vmul.f32 %v2227, %v2251
        %v2360 = vmul.f32 %v2228, %v2251
        %v2361 = vmul.f32 %v2229, %v2251
        %v2362 = vmul.f32 %v2230, %v2251
        %v2363 = vmul.f32 %v2231, %v2251
        %v2364 = vmul.f32 %v2232, %v2251
        %v2365 = vmul.f32 %v2233, %v2251
        %v2366 = vmul.f32 %v2234, %v2251
        %v2367 = vmul.f32 %v2235, %v2251
        %v2368 = vmul.f32 %v2236, %v2251
        %v2369 = vmul.f32 %v2237, %v2251
        %v2370 = vmul.f32 %v2238, %v2251
        %v2371 = vmul.f32 %v2239, %v2251
        %v2372 = vmul.f32 %v2240, %v2251
        %v2373 = vmul.f32 %v2241, %v2251
        %v2374 = vmul.f32 %v2242, %v2251
        %v2375 = vmul.f32 %v2243, %v2251
        %v2376 = vmul.f32 %v2244, %v2251
        %v2377 = vmul.f32 %v2245, %v2251
        %v2378 = vmul.f32 %v2246, %v2251
        %v2379 = vmul.f32 %v2247, %v2251
        %vm2380 = vcmask 523264
        %v2381 = vsel %vm2380, %v2252, 0.0
        %2382 = vadd.xlane.f32.xlu0 %v2381
        %v2383 = vpop.xlane.xlu0 %2382
        %v2384 = vsel %vm2380, %v2253, 0.0
        %2385 = vadd.xlane.f32.xlu0 %v2384
        %v2386 = vpop.xlane.xlu0 %2385
        %v2387 = vsel %vm2380, %v2254, 0.0
        %2388 = vadd.xlane.f32.xlu0 %v2387
        %v2389 = vpop.xlane.xlu0 %2388
        %v2390 = vsel %vm2380, %v2255, 0.0
        %2391 = vadd.xlane.f32.xlu0 %v2390
        %v2392 = vpop.xlane.xlu0 %2391
        %v2393 = vsel %vm2380, %v2256, 0.0
        %2394 = vadd.xlane.f32.xlu0 %v2393
        %v2395 = vpop.xlane.xlu0 %2394
        %v2396 = vsel %vm2380, %v2257, 0.0
        %2397 = vadd.xlane.f32.xlu0 %v2396
        %v2398 = vpop.xlane.xlu0 %2397
        %v2399 = vsel %vm2380, %v2258, 0.0
        %2400 = vadd.xlane.f32.xlu0 %v2399
        %v2401 = vpop.xlane.xlu0 %2400
        %v2402 = vsel %vm2380, %v2259, 0.0
        %2403 = vadd.xlane.f32.xlu0 %v2402
        %v2404 = vpop.xlane.xlu0 %2403
        %v2405 = vsel %vm2380, %v2260, 0.0
        %2406 = vadd.xlane.f32.xlu0 %v2405
        %v2407 = vpop.xlane.xlu0 %2406
        %v2408 = vsel %vm2380, %v2261, 0.0
        %2409 = vadd.xlane.f32.xlu0 %v2408
        %v2410 = vpop.xlane.xlu0 %2409
        %v2411 = vsel %vm2380, %v2262, 0.0
        %2412 = vadd.xlane.f32.xlu0 %v2411
        %v2413 = vpop.xlane.xlu0 %2412
        %v2414 = vsel %vm2380, %v2263, 0.0
        %2415 = vadd.xlane.f32.xlu0 %v2414
        %v2416 = vpop.xlane.xlu0 %2415
        %v2417 = vsel %vm2380, %v2264, 0.0
        %2418 = vadd.xlane.f32.xlu0 %v2417
        %v2419 = vpop.xlane.xlu0 %2418
        %v2420 = vsel %vm2380, %v2265, 0.0
        %2421 = vadd.xlane.f32.xlu0 %v2420
        %v2422 = vpop.xlane.xlu0 %2421
        %v2423 = vsel %vm2380, %v2266, 0.0
        %2424 = vadd.xlane.f32.xlu0 %v2423
        %v2425 = vpop.xlane.xlu0 %2424
        %v2426 = vsel %vm2380, %v2267, 0.0
        %2427 = vadd.xlane.f32.xlu0 %v2426
        %v2428 = vpop.xlane.xlu0 %2427
        %v2429 = vsel %vm2380, %v2268, 0.0
        %2430 = vadd.xlane.f32.xlu0 %v2429
        %v2431 = vpop.xlane.xlu0 %2430
        %v2432 = vsel %vm2380, %v2269, 0.0
        %2433 = vadd.xlane.f32.xlu0 %v2432
        %v2434 = vpop.xlane.xlu0 %2433
        %v2435 = vsel %vm2380, %v2270, 0.0
        %2436 = vadd.xlane.f32.xlu0 %v2435
        %v2437 = vpop.xlane.xlu0 %2436
        %v2438 = vsel %vm2380, %v2271, 0.0
        %2439 = vadd.xlane.f32.xlu0 %v2438
        %v2440 = vpop.xlane.xlu0 %2439
        %v2441 = vsel %vm2380, %v2272, 0.0
        %2442 = vadd.xlane.f32.xlu0 %v2441
        %v2443 = vpop.xlane.xlu0 %2442
        %v2444 = vsel %vm2380, %v2273, 0.0
        %2445 = vadd.xlane.f32.xlu0 %v2444
        %v2446 = vpop.xlane.xlu0 %2445
        %v2447 = vsel %vm2380, %v2274, 0.0
        %2448 = vadd.xlane.f32.xlu0 %v2447
        %v2449 = vpop.xlane.xlu0 %2448
        %v2450 = vsel %vm2380, %v2275, 0.0
        %2451 = vadd.xlane.f32.xlu0 %v2450
        %v2452 = vpop.xlane.xlu0 %2451
        %v2453 = vsel %vm2380, %v2276, 0.0
        %2454 = vadd.xlane.f32.xlu0 %v2453
        %v2455 = vpop.xlane.xlu0 %2454
        %v2456 = vsel %vm2380, %v2277, 0.0
        %2457 = vadd.xlane.f32.xlu0 %v2456
        %v2458 = vpop.xlane.xlu0 %2457
        %v2459 = vsel %vm2380, %v2278, 0.0
        %2460 = vadd.xlane.f32.xlu0 %v2459
        %v2461 = vpop.xlane.xlu0 %2460
        %v2462 = vsel %vm2380, %v2279, 0.0
        %2463 = vadd.xlane.f32.xlu0 %v2462
        %v2464 = vpop.xlane.xlu0 %2463
        %v2465 = vsel %vm2380, %v2280, 0.0
        %2466 = vadd.xlane.f32.xlu0 %v2465
        %v2467 = vpop.xlane.xlu0 %2466
        %v2468 = vsel %vm2380, %v2281, 0.0
        %2469 = vadd.xlane.f32.xlu0 %v2468
        %v2470 = vpop.xlane.xlu0 %2469
        %v2471 = vsel %vm2380, %v2282, 0.0
        %2472 = vadd.xlane.f32.xlu0 %v2471
        %v2473 = vpop.xlane.xlu0 %2472
        %v2474 = vsel %vm2380, %v2283, 0.0
        %2475 = vadd.xlane.f32.xlu0 %v2474
        %v2476 = vpop.xlane.xlu0 %2475
        %v2477 = vsel %vm2380, %v2284, 0.0
        %2478 = vadd.xlane.f32.xlu0 %v2477
        %v2479 = vpop.xlane.xlu0 %2478
        %v2480 = vsel %vm2380, %v2285, 0.0
        %2481 = vadd.xlane.f32.xlu0 %v2480
        %v2482 = vpop.xlane.xlu0 %2481
        %v2483 = vsel %vm2380, %v2286, 0.0
        %2484 = vadd.xlane.f32.xlu0 %v2483
        %v2485 = vpop.xlane.xlu0 %2484
        %v2486 = vsel %vm2380, %v2287, 0.0
        %2487 = vadd.xlane.f32.xlu0 %v2486
        %v2488 = vpop.xlane.xlu0 %2487
        %v2489 = vsel %vm2380, %v2288, 0.0
        %2490 = vadd.xlane.f32.xlu0 %v2489
        %v2491 = vpop.xlane.xlu0 %2490
        %v2492 = vsel %vm2380, %v2289, 0.0
        %2493 = vadd.xlane.f32.xlu0 %v2492
        %v2494 = vpop.xlane.xlu0 %2493
        %v2495 = vsel %vm2380, %v2290, 0.0
        %2496 = vadd.xlane.f32.xlu0 %v2495
        %v2497 = vpop.xlane.xlu0 %2496
        %v2498 = vsel %vm2380, %v2291, 0.0
        %2499 = vadd.xlane.f32.xlu0 %v2498
        %v2500 = vpop.xlane.xlu0 %2499
        %v2501 = vsel %vm2380, %v2292, 0.0
        %2502 = vadd.xlane.f32.xlu0 %v2501
        %v2503 = vpop.xlane.xlu0 %2502
        %v2504 = vsel %vm2380, %v2293, 0.0
        %2505 = vadd.xlane.f32.xlu0 %v2504
        %v2506 = vpop.xlane.xlu0 %2505
        %v2507 = vsel %vm2380, %v2294, 0.0
        %2508 = vadd.xlane.f32.xlu0 %v2507
        %v2509 = vpop.xlane.xlu0 %2508
        %v2510 = vsel %vm2380, %v2295, 0.0
        %2511 = vadd.xlane.f32.xlu0 %v2510
        %v2512 = vpop.xlane.xlu0 %2511
        %v2513 = vsel %vm2380, %v2296, 0.0
        %2514 = vadd.xlane.f32.xlu0 %v2513
        %v2515 = vpop.xlane.xlu0 %2514
        %v2516 = vsel %vm2380, %v2297, 0.0
        %2517 = vadd.xlane.f32.xlu0 %v2516
        %v2518 = vpop.xlane.xlu0 %2517
        %v2519 = vsel %vm2380, %v2298, 0.0
        %2520 = vadd.xlane.f32.xlu0 %v2519
        %v2521 = vpop.xlane.xlu0 %2520
        %v2522 = vsel %vm2380, %v2299, 0.0
        %2523 = vadd.xlane.f32.xlu0 %v2522
        %v2524 = vpop.xlane.xlu0 %2523
        %v2525 = vsel %vm2380, %v2300, 0.0
        %2526 = vadd.xlane.f32.xlu0 %v2525
        %v2527 = vpop.xlane.xlu0 %2526
        %v2528 = vsel %vm2380, %v2301, 0.0
        %2529 = vadd.xlane.f32.xlu0 %v2528
        %v2530 = vpop.xlane.xlu0 %2529
        %v2531 = vsel %vm2380, %v2302, 0.0
        %2532 = vadd.xlane.f32.xlu0 %v2531
        %v2533 = vpop.xlane.xlu0 %2532
        %v2534 = vsel %vm2380, %v2303, 0.0
        %2535 = vadd.xlane.f32.xlu0 %v2534
        %v2536 = vpop.xlane.xlu0 %2535
        %v2537 = vsel %vm2380, %v2304, 0.0
        %2538 = vadd.xlane.f32.xlu0 %v2537
        %v2539 = vpop.xlane.xlu0 %2538
        %v2540 = vsel %vm2380, %v2305, 0.0
        %2541 = vadd.xlane.f32.xlu0 %v2540
        %v2542 = vpop.xlane.xlu0 %2541
        %v2543 = vsel %vm2380, %v2306, 0.0
        %2544 = vadd.xlane.f32.xlu0 %v2543
        %v2545 = vpop.xlane.xlu0 %2544
        %v2546 = vsel %vm2380, %v2307, 0.0
        %2547 = vadd.xlane.f32.xlu0 %v2546
        %v2548 = vpop.xlane.xlu0 %2547
        %v2549 = vsel %vm2380, %v2308, 0.0
        %2550 = vadd.xlane.f32.xlu0 %v2549
        %v2551 = vpop.xlane.xlu0 %2550
        %v2552 = vsel %vm2380, %v2309, 0.0
        %2553 = vadd.xlane.f32.xlu0 %v2552
        %v2554 = vpop.xlane.xlu0 %2553
        %v2555 = vsel %vm2380, %v2310, 0.0
        %2556 = vadd.xlane.f32.xlu0 %v2555
        %v2557 = vpop.xlane.xlu0 %2556
        %v2558 = vsel %vm2380, %v2311, 0.0
        %2559 = vadd.xlane.f32.xlu0 %v2558
        %v2560 = vpop.xlane.xlu0 %2559
        %v2561 = vsel %vm2380, %v2312, 0.0
        %2562 = vadd.xlane.f32.xlu0 %v2561
        %v2563 = vpop.xlane.xlu0 %2562
        %v2564 = vsel %vm2380, %v2313, 0.0
        %2565 = vadd.xlane.f32.xlu0 %v2564
        %v2566 = vpop.xlane.xlu0 %2565
        %v2567 = vsel %vm2380, %v2314, 0.0
        %2568 = vadd.xlane.f32.xlu0 %v2567
        %v2569 = vpop.xlane.xlu0 %2568
        %v2570 = vsel %vm2380, %v2315, 0.0
        %2571 = vadd.xlane.f32.xlu0 %v2570
        %v2572 = vpop.xlane.xlu0 %2571
        %v2573 = vsel %vm2380, %v2316, 0.0
        %2574 = vadd.xlane.f32.xlu0 %v2573
        %v2575 = vpop.xlane.xlu0 %2574
        %v2576 = vsel %vm2380, %v2317, 0.0
        %2577 = vadd.xlane.f32.xlu0 %v2576
        %v2578 = vpop.xlane.xlu0 %2577
        %v2579 = vsel %vm2380, %v2318, 0.0
        %2580 = vadd.xlane.f32.xlu0 %v2579
        %v2581 = vpop.xlane.xlu0 %2580
        %v2582 = vsel %vm2380, %v2319, 0.0
        %2583 = vadd.xlane.f32.xlu0 %v2582
        %v2584 = vpop.xlane.xlu0 %2583
        %v2585 = vsel %vm2380, %v2320, 0.0
        %2586 = vadd.xlane.f32.xlu0 %v2585
        %v2587 = vpop.xlane.xlu0 %2586
        %v2588 = vsel %vm2380, %v2321, 0.0
        %2589 = vadd.xlane.f32.xlu0 %v2588
        %v2590 = vpop.xlane.xlu0 %2589
        %v2591 = vsel %vm2380, %v2322, 0.0
        %2592 = vadd.xlane.f32.xlu0 %v2591
        %v2593 = vpop.xlane.xlu0 %2592
        %v2594 = vsel %vm2380, %v2323, 0.0
        %2595 = vadd.xlane.f32.xlu0 %v2594
        %v2596 = vpop.xlane.xlu0 %2595
        %v2597 = vsel %vm2380, %v2324, 0.0
        %2598 = vadd.xlane.f32.xlu0 %v2597
        %v2599 = vpop.xlane.xlu0 %2598
        %v2600 = vsel %vm2380, %v2325, 0.0
        %2601 = vadd.xlane.f32.xlu0 %v2600
        %v2602 = vpop.xlane.xlu0 %2601
        %v2603 = vsel %vm2380, %v2326, 0.0
        %2604 = vadd.xlane.f32.xlu0 %v2603
        %v2605 = vpop.xlane.xlu0 %2604
        %v2606 = vsel %vm2380, %v2327, 0.0
        %2607 = vadd.xlane.f32.xlu0 %v2606
        %v2608 = vpop.xlane.xlu0 %2607
        %v2609 = vsel %vm2380, %v2328, 0.0
        %2610 = vadd.xlane.f32.xlu0 %v2609
        %v2611 = vpop.xlane.xlu0 %2610
        %v2612 = vsel %vm2380, %v2329, 0.0
        %2613 = vadd.xlane.f32.xlu0 %v2612
        %v2614 = vpop.xlane.xlu0 %2613
        %v2615 = vsel %vm2380, %v2330, 0.0
        %2616 = vadd.xlane.f32.xlu0 %v2615
        %v2617 = vpop.xlane.xlu0 %2616
        %v2618 = vsel %vm2380, %v2331, 0.0
        %2619 = vadd.xlane.f32.xlu0 %v2618
        %v2620 = vpop.xlane.xlu0 %2619
        %v2621 = vsel %vm2380, %v2332, 0.0
        %2622 = vadd.xlane.f32.xlu0 %v2621
        %v2623 = vpop.xlane.xlu0 %2622
        %v2624 = vsel %vm2380, %v2333, 0.0
        %2625 = vadd.xlane.f32.xlu0 %v2624
        %v2626 = vpop.xlane.xlu0 %2625
        %v2627 = vsel %vm2380, %v2334, 0.0
        %2628 = vadd.xlane.f32.xlu0 %v2627
        %v2629 = vpop.xlane.xlu0 %2628
        %v2630 = vsel %vm2380, %v2335, 0.0
        %2631 = vadd.xlane.f32.xlu0 %v2630
        %v2632 = vpop.xlane.xlu0 %2631
        %v2633 = vsel %vm2380, %v2336, 0.0
        %2634 = vadd.xlane.f32.xlu0 %v2633
        %v2635 = vpop.xlane.xlu0 %2634
        %v2636 = vsel %vm2380, %v2337, 0.0
        %2637 = vadd.xlane.f32.xlu0 %v2636
        %v2638 = vpop.xlane.xlu0 %2637
        %v2639 = vsel %vm2380, %v2338, 0.0
        %2640 = vadd.xlane.f32.xlu0 %v2639
        %v2641 = vpop.xlane.xlu0 %2640
        %v2642 = vsel %vm2380, %v2339, 0.0
        %2643 = vadd.xlane.f32.xlu0 %v2642
        %v2644 = vpop.xlane.xlu0 %2643
        %v2645 = vsel %vm2380, %v2340, 0.0
        %2646 = vadd.xlane.f32.xlu0 %v2645
        %v2647 = vpop.xlane.xlu0 %2646
        %v2648 = vsel %vm2380, %v2341, 0.0
        %2649 = vadd.xlane.f32.xlu0 %v2648
        %v2650 = vpop.xlane.xlu0 %2649
        %v2651 = vsel %vm2380, %v2342, 0.0
        %2652 = vadd.xlane.f32.xlu0 %v2651
        %v2653 = vpop.xlane.xlu0 %2652
        %v2654 = vsel %vm2380, %v2343, 0.0
        %2655 = vadd.xlane.f32.xlu0 %v2654
        %v2656 = vpop.xlane.xlu0 %2655
        %v2657 = vsel %vm2380, %v2344, 0.0
        %2658 = vadd.xlane.f32.xlu0 %v2657
        %v2659 = vpop.xlane.xlu0 %2658
        %v2660 = vsel %vm2380, %v2345, 0.0
        %2661 = vadd.xlane.f32.xlu0 %v2660
        %v2662 = vpop.xlane.xlu0 %2661
        %v2663 = vsel %vm2380, %v2346, 0.0
        %2664 = vadd.xlane.f32.xlu0 %v2663
        %v2665 = vpop.xlane.xlu0 %2664
        %v2666 = vsel %vm2380, %v2347, 0.0
        %2667 = vadd.xlane.f32.xlu0 %v2666
        %v2668 = vpop.xlane.xlu0 %2667
        %v2669 = vsel %vm2380, %v2348, 0.0
        %2670 = vadd.xlane.f32.xlu0 %v2669
        %v2671 = vpop.xlane.xlu0 %2670
        %v2672 = vsel %vm2380, %v2349, 0.0
        %2673 = vadd.xlane.f32.xlu0 %v2672
        %v2674 = vpop.xlane.xlu0 %2673
        %v2675 = vsel %vm2380, %v2350, 0.0
        %2676 = vadd.xlane.f32.xlu0 %v2675
        %v2677 = vpop.xlane.xlu0 %2676
        %v2678 = vsel %vm2380, %v2351, 0.0
        %2679 = vadd.xlane.f32.xlu0 %v2678
        %v2680 = vpop.xlane.xlu0 %2679
        %v2681 = vsel %vm2380, %v2352, 0.0
        %2682 = vadd.xlane.f32.xlu0 %v2681
        %v2683 = vpop.xlane.xlu0 %2682
        %v2684 = vsel %vm2380, %v2353, 0.0
        %2685 = vadd.xlane.f32.xlu0 %v2684
        %v2686 = vpop.xlane.xlu0 %2685
        %v2687 = vsel %vm2380, %v2354, 0.0
        %2688 = vadd.xlane.f32.xlu0 %v2687
        %v2689 = vpop.xlane.xlu0 %2688
        %v2690 = vsel %vm2380, %v2355, 0.0
        %2691 = vadd.xlane.f32.xlu0 %v2690
        %v2692 = vpop.xlane.xlu0 %2691
        %v2693 = vsel %vm2380, %v2356, 0.0
        %2694 = vadd.xlane.f32.xlu0 %v2693
        %v2695 = vpop.xlane.xlu0 %2694
        %v2696 = vsel %vm2380, %v2357, 0.0
        %2697 = vadd.xlane.f32.xlu0 %v2696
        %v2698 = vpop.xlane.xlu0 %2697
        %v2699 = vsel %vm2380, %v2358, 0.0
        %2700 = vadd.xlane.f32.xlu0 %v2699
        %v2701 = vpop.xlane.xlu0 %2700
        %v2702 = vsel %vm2380, %v2359, 0.0
        %2703 = vadd.xlane.f32.xlu0 %v2702
        %v2704 = vpop.xlane.xlu0 %2703
        %v2705 = vsel %vm2380, %v2360, 0.0
        %2706 = vadd.xlane.f32.xlu0 %v2705
        %v2707 = vpop.xlane.xlu0 %2706
        %v2708 = vsel %vm2380, %v2361, 0.0
        %2709 = vadd.xlane.f32.xlu0 %v2708
        %v2710 = vpop.xlane.xlu0 %2709
        %v2711 = vsel %vm2380, %v2362, 0.0
        %2712 = vadd.xlane.f32.xlu0 %v2711
        %v2713 = vpop.xlane.xlu0 %2712
        %v2714 = vsel %vm2380, %v2363, 0.0
        %2715 = vadd.xlane.f32.xlu0 %v2714
        %v2716 = vpop.xlane.xlu0 %2715
        %v2717 = vsel %vm2380, %v2364, 0.0
        %2718 = vadd.xlane.f32.xlu0 %v2717
        %v2719 = vpop.xlane.xlu0 %2718
        %v2720 = vsel %vm2380, %v2365, 0.0
        %2721 = vadd.xlane.f32.xlu0 %v2720
        %v2722 = vpop.xlane.xlu0 %2721
        %v2723 = vsel %vm2380, %v2366, 0.0
        %2724 = vadd.xlane.f32.xlu0 %v2723
        %v2725 = vpop.xlane.xlu0 %2724
        %v2726 = vsel %vm2380, %v2367, 0.0
        %2727 = vadd.xlane.f32.xlu0 %v2726
        %v2728 = vpop.xlane.xlu0 %2727
        %v2729 = vsel %vm2380, %v2368, 0.0
        %2730 = vadd.xlane.f32.xlu0 %v2729
        %v2731 = vpop.xlane.xlu0 %2730
        %v2732 = vsel %vm2380, %v2369, 0.0
        %2733 = vadd.xlane.f32.xlu0 %v2732
        %v2734 = vpop.xlane.xlu0 %2733
        %v2735 = vsel %vm2380, %v2370, 0.0
        %2736 = vadd.xlane.f32.xlu0 %v2735
        %v2737 = vpop.xlane.xlu0 %2736
        %v2738 = vsel %vm2380, %v2371, 0.0
        %2739 = vadd.xlane.f32.xlu0 %v2738
        %v2740 = vpop.xlane.xlu0 %2739
        %v2741 = vsel %vm2380, %v2372, 0.0
        %2742 = vadd.xlane.f32.xlu0 %v2741
        %v2743 = vpop.xlane.xlu0 %2742
        %v2744 = vsel %vm2380, %v2373, 0.0
        %2745 = vadd.xlane.f32.xlu0 %v2744
        %v2746 = vpop.xlane.xlu0 %2745
        %v2747 = vsel %vm2380, %v2374, 0.0
        %2748 = vadd.xlane.f32.xlu0 %v2747
        %v2749 = vpop.xlane.xlu0 %2748
        %v2750 = vsel %vm2380, %v2375, 0.0
        %2751 = vadd.xlane.f32.xlu0 %v2750
        %v2752 = vpop.xlane.xlu0 %2751
        %v2753 = vsel %vm2380, %v2376, 0.0
        %2754 = vadd.xlane.f32.xlu0 %v2753
        %v2755 = vpop.xlane.xlu0 %2754
        %v2756 = vsel %vm2380, %v2377, 0.0
        %2757 = vadd.xlane.f32.xlu0 %v2756
        %v2758 = vpop.xlane.xlu0 %2757
        %v2759 = vsel %vm2380, %v2378, 0.0
        %2760 = vadd.xlane.f32.xlu0 %v2759
        %v2761 = vpop.xlane.xlu0 %2760
        %v2762 = vsel %vm2380, %v2379, 0.0
        %2763 = vadd.xlane.f32.xlu0 %v2762
        %v2764 = vpop.xlane.xlu0 %2763
        %v2765 = vld [vmem:[%s1542] sm:$0xff]
        %vm2766 = vcmp.ne.s32.totalorder %v2765, 0
        %v2895 = vlaneseq
        %v2896 = vand.u32 %v2895, 127
        %v2897 = vlaneseq
        %v2898 = vshrl.u32 %v2897, 7
        %v2899 = vsub.s32 %v2896, %v2898
        %v2900 = vrot.slane %v2383, %v2899
        %v2901 = vadd.s32 %v2896, 4294967288
        %v2902 = vlaneseq
        %v2903 = vshrl.u32 %v2902, 7
        %v2904 = vsub.s32 %v2901, %v2903
        %v2905 = vrot.slane %v2386, %v2904
        %vm2906 = vcmask 130112
        %v2907 = vsel %vm2906, %v2905, %v2900
        %v2908 = vadd.s32 %v2896, 4294967280
        %v2909 = vlaneseq
        %v2910 = vshrl.u32 %v2909, 7
        %v2911 = vsub.s32 %v2908, %v2910
        %v2912 = vrot.slane %v2389, %v2911
        %vm2913 = vcmask 195712
        %v2914 = vsel %vm2913, %v2912, %v2907
        %v2915 = vadd.s32 %v2896, 4294967272
        %v2916 = vlaneseq
        %v2917 = vshrl.u32 %v2916, 7
        %v2918 = vsub.s32 %v2915, %v2917
        %v2919 = vrot.slane %v2392, %v2918
        %vm2920 = vcmask 261312
        %v2921 = vsel %vm2920, %v2919, %v2914
        %v2922 = vadd.s32 %v2896, 4294967264
        %v2923 = vlaneseq
        %v2924 = vshrl.u32 %v2923, 7
        %v2925 = vsub.s32 %v2922, %v2924
        %v2926 = vrot.slane %v2395, %v2925
        %vm2927 = vcmask 326912
        %v2928 = vsel %vm2927, %v2926, %v2921
        %v2929 = vadd.s32 %v2896, 4294967256
        %v2930 = vlaneseq
        %v2931 = vshrl.u32 %v2930, 7
        %v2932 = vsub.s32 %v2929, %v2931
        %v2933 = vrot.slane %v2398, %v2932
        %vm2934 = vcmask 392512
        %v2935 = vsel %vm2934, %v2933, %v2928
        %v2936 = vadd.s32 %v2896, 4294967248
        %v2937 = vlaneseq
        %v2938 = vshrl.u32 %v2937, 7
        %v2939 = vsub.s32 %v2936, %v2938
        %v2940 = vrot.slane %v2401, %v2939
        %vm2941 = vcmask 458112
        %v2942 = vsel %vm2941, %v2940, %v2935
        %v2943 = vadd.s32 %v2896, 4294967240
        %v2944 = vlaneseq
        %v2945 = vshrl.u32 %v2944, 7
        %v2946 = vsub.s32 %v2943, %v2945
        %v2947 = vrot.slane %v2404, %v2946
        %vm2948 = vcmask 523712
        %v2949 = vsel %vm2948, %v2947, %v2942
        %v2950 = vadd.s32 %v2896, 4294967232
        %v2951 = vlaneseq
        %v2952 = vshrl.u32 %v2951, 7
        %v2953 = vsub.s32 %v2950, %v2952
        %v2954 = vrot.slane %v2407, %v2953
        %vm2955 = vcmask 589312
        %v2956 = vsel %vm2955, %v2954, %v2949
        %v2957 = vadd.s32 %v2896, 4294967224
        %v2958 = vlaneseq
        %v2959 = vshrl.u32 %v2958, 7
        %v2960 = vsub.s32 %v2957, %v2959
        %v2961 = vrot.slane %v2410, %v2960
        %vm2962 = vcmask 654912
        %v2963 = vsel %vm2962, %v2961, %v2956
        %v2964 = vadd.s32 %v2896, 4294967216
        %v2965 = vlaneseq
        %v2966 = vshrl.u32 %v2965, 7
        %v2967 = vsub.s32 %v2964, %v2966
        %v2968 = vrot.slane %v2413, %v2967
        %vm2969 = vcmask 720512
        %v2970 = vsel %vm2969, %v2968, %v2963
        %v2971 = vadd.s32 %v2896, 4294967208
        %v2972 = vlaneseq
        %v2973 = vshrl.u32 %v2972, 7
        %v2974 = vsub.s32 %v2971, %v2973
        %v2975 = vrot.slane %v2416, %v2974
        %vm2976 = vcmask 786112
        %v2977 = vsel %vm2976, %v2975, %v2970
        %v2978 = vadd.s32 %v2896, 4294967200
        %v2979 = vlaneseq
        %v2980 = vshrl.u32 %v2979, 7
        %v2981 = vsub.s32 %v2978, %v2980
        %v2982 = vrot.slane %v2419, %v2981
        %vm2983 = vcmask 851712
        %v2984 = vsel %vm2983, %v2982, %v2977
        %v2985 = vadd.s32 %v2896, 4294967192
        %v2986 = vlaneseq
        %v2987 = vshrl.u32 %v2986, 7
        %v2988 = vsub.s32 %v2985, %v2987
        %v2989 = vrot.slane %v2422, %v2988
        %vm2990 = vcmask 917312
        %v2991 = vsel %vm2990, %v2989, %v2984
        %v2992 = vadd.s32 %v2896, 4294967184
        %v2993 = vlaneseq
        %v2994 = vshrl.u32 %v2993, 7
        %v2995 = vsub.s32 %v2992, %v2994
        %v2996 = vrot.slane %v2425, %v2995
        %vm2997 = vcmask 982912
        %v2998 = vsel %vm2997, %v2996, %v2991
        %v2999 = vadd.s32 %v2896, 4294967176
        %v3000 = vlaneseq
        %v3001 = vshrl.u32 %v3000, 7
        %v3002 = vsub.s32 %v2999, %v3001
        %v3003 = vrot.slane %v2428, %v3002
        %vm3004 = vcmask 1048512
        %v3005 = vsel %vm3004, %v3003, %v2998
        %v3006 = vlaneseq
        %v3007 = vshrl.u32 %v3006, 7
        %v3008 = vsub.s32 %v2896, %v3007
        %v3009 = vrot.slane %v2431, %v3008
        %v3010 = vlaneseq
        %v3011 = vshrl.u32 %v3010, 7
        %v3012 = vsub.s32 %v2901, %v3011
        %v3013 = vrot.slane %v2434, %v3012
        %v3014 = vsel %vm2906, %v3013, %v3009
        %v3015 = vlaneseq
        %v3016 = vshrl.u32 %v3015, 7
        %v3017 = vsub.s32 %v2908, %v3016
        %v3018 = vrot.slane %v2437, %v3017
        %v3019 = vsel %vm2913, %v3018, %v3014
        %v3020 = vlaneseq
        %v3021 = vshrl.u32 %v3020, 7
        %v3022 = vsub.s32 %v2915, %v3021
        %v3023 = vrot.slane %v2440, %v3022
        %v3024 = vsel %vm2920, %v3023, %v3019
        %v3025 = vlaneseq
        %v3026 = vshrl.u32 %v3025, 7
        %v3027 = vsub.s32 %v2922, %v3026
        %v3028 = vrot.slane %v2443, %v3027
        %v3029 = vsel %vm2927, %v3028, %v3024
        %v3030 = vlaneseq
        %v3031 = vshrl.u32 %v3030, 7
        %v3032 = vsub.s32 %v2929, %v3031
        %v3033 = vrot.slane %v2446, %v3032
        %v3034 = vsel %vm2934, %v3033, %v3029
        %v3035 = vlaneseq
        %v3036 = vshrl.u32 %v3035, 7
        %v3037 = vsub.s32 %v2936, %v3036
        %v3038 = vrot.slane %v2449, %v3037
        %v3039 = vsel %vm2941, %v3038, %v3034
        %v3040 = vlaneseq
        %v3041 = vshrl.u32 %v3040, 7
        %v3042 = vsub.s32 %v2943, %v3041
        %v3043 = vrot.slane %v2452, %v3042
        %v3044 = vsel %vm2948, %v3043, %v3039
        %v3045 = vlaneseq
        %v3046 = vshrl.u32 %v3045, 7
        %v3047 = vsub.s32 %v2950, %v3046
        %v3048 = vrot.slane %v2455, %v3047
        %v3049 = vsel %vm2955, %v3048, %v3044
        %v3050 = vlaneseq
        %v3051 = vshrl.u32 %v3050, 7
        %v3052 = vsub.s32 %v2957, %v3051
        %v3053 = vrot.slane %v2458, %v3052
        %v3054 = vsel %vm2962, %v3053, %v3049
        %v3055 = vlaneseq
        %v3056 = vshrl.u32 %v3055, 7
        %v3057 = vsub.s32 %v2964, %v3056
        %v3058 = vrot.slane %v2461, %v3057
        %v3059 = vsel %vm2969, %v3058, %v3054
        %v3060 = vlaneseq
        %v3061 = vshrl.u32 %v3060, 7
        %v3062 = vsub.s32 %v2971, %v3061
        %v3063 = vrot.slane %v2464, %v3062
        %v3064 = vsel %vm2976, %v3063, %v3059
        %v3065 = vlaneseq
        %v3066 = vshrl.u32 %v3065, 7
        %v3067 = vsub.s32 %v2978, %v3066
        %v3068 = vrot.slane %v2467, %v3067
        %v3069 = vsel %vm2983, %v3068, %v3064
        %v3070 = vlaneseq
        %v3071 = vshrl.u32 %v3070, 7
        %v3072 = vsub.s32 %v2985, %v3071
        %v3073 = vrot.slane %v2470, %v3072
        %v3074 = vsel %vm2990, %v3073, %v3069
        %v3075 = vlaneseq
        %v3076 = vshrl.u32 %v3075, 7
        %v3077 = vsub.s32 %v2992, %v3076
        %v3078 = vrot.slane %v2473, %v3077
        %v3079 = vsel %vm2997, %v3078, %v3074
        %v3080 = vlaneseq
        %v3081 = vshrl.u32 %v3080, 7
        %v3082 = vsub.s32 %v2999, %v3081
        %v3083 = vrot.slane %v2476, %v3082
        %v3084 = vsel %vm3004, %v3083, %v3079
        %v3085 = vlaneseq
        %v3086 = vshrl.u32 %v3085, 7
        %v3087 = vsub.s32 %v2896, %v3086
        %v3088 = vrot.slane %v2479, %v3087
        %v3089 = vlaneseq
        %v3090 = vshrl.u32 %v3089, 7
        %v3091 = vsub.s32 %v2901, %v3090
        %v3092 = vrot.slane %v2482, %v3091
        %v3093 = vsel %vm2906, %v3092, %v3088
        %v3094 = vlaneseq
        %v3095 = vshrl.u32 %v3094, 7
        %v3096 = vsub.s32 %v2908, %v3095
        %v3097 = vrot.slane %v2485, %v3096
        %v3098 = vsel %vm2913, %v3097, %v3093
        %v3099 = vlaneseq
        %v3100 = vshrl.u32 %v3099, 7
        %v3101 = vsub.s32 %v2915, %v3100
        %v3102 = vrot.slane %v2488, %v3101
        %v3103 = vsel %vm2920, %v3102, %v3098
        %v3104 = vlaneseq
        %v3105 = vshrl.u32 %v3104, 7
        %v3106 = vsub.s32 %v2922, %v3105
        %v3107 = vrot.slane %v2491, %v3106
        %v3108 = vsel %vm2927, %v3107, %v3103
        %v3109 = vlaneseq
        %v3110 = vshrl.u32 %v3109, 7
        %v3111 = vsub.s32 %v2929, %v3110
        %v3112 = vrot.slane %v2494, %v3111
        %v3113 = vsel %vm2934, %v3112, %v3108
        %v3114 = vlaneseq
        %v3115 = vshrl.u32 %v3114, 7
        %v3116 = vsub.s32 %v2936, %v3115
        %v3117 = vrot.slane %v2497, %v3116
        %v3118 = vsel %vm2941, %v3117, %v3113
        %v3119 = vlaneseq
        %v3120 = vshrl.u32 %v3119, 7
        %v3121 = vsub.s32 %v2943, %v3120
        %v3122 = vrot.slane %v2500, %v3121
        %v3123 = vsel %vm2948, %v3122, %v3118
        %v3124 = vlaneseq
        %v3125 = vshrl.u32 %v3124, 7
        %v3126 = vsub.s32 %v2950, %v3125
        %v3127 = vrot.slane %v2503, %v3126
        %v3128 = vsel %vm2955, %v3127, %v3123
        %v3129 = vlaneseq
        %v3130 = vshrl.u32 %v3129, 7
        %v3131 = vsub.s32 %v2957, %v3130
        %v3132 = vrot.slane %v2506, %v3131
        %v3133 = vsel %vm2962, %v3132, %v3128
        %v3134 = vlaneseq
        %v3135 = vshrl.u32 %v3134, 7
        %v3136 = vsub.s32 %v2964, %v3135
        %v3137 = vrot.slane %v2509, %v3136
        %v3138 = vsel %vm2969, %v3137, %v3133
        %v3139 = vlaneseq
        %v3140 = vshrl.u32 %v3139, 7
        %v3141 = vsub.s32 %v2971, %v3140
        %v3142 = vrot.slane %v2512, %v3141
        %v3143 = vsel %vm2976, %v3142, %v3138
        %v3144 = vlaneseq
        %v3145 = vshrl.u32 %v3144, 7
        %v3146 = vsub.s32 %v2978, %v3145
        %v3147 = vrot.slane %v2515, %v3146
        %v3148 = vsel %vm2983, %v3147, %v3143
        %v3149 = vlaneseq
        %v3150 = vshrl.u32 %v3149, 7
        %v3151 = vsub.s32 %v2985, %v3150
        %v3152 = vrot.slane %v2518, %v3151
        %v3153 = vsel %vm2990, %v3152, %v3148
        %v3154 = vlaneseq
        %v3155 = vshrl.u32 %v3154, 7
        %v3156 = vsub.s32 %v2992, %v3155
        %v3157 = vrot.slane %v2521, %v3156
        %v3158 = vsel %vm2997, %v3157, %v3153
        %v3159 = vlaneseq
        %v3160 = vshrl.u32 %v3159, 7
        %v3161 = vsub.s32 %v2999, %v3160
        %v3162 = vrot.slane %v2524, %v3161
        %v3163 = vsel %vm3004, %v3162, %v3158
        %v3164 = vlaneseq
        %v3165 = vshrl.u32 %v3164, 7
        %v3166 = vsub.s32 %v2896, %v3165
        %v3167 = vrot.slane %v2527, %v3166
        %v3168 = vlaneseq
        %v3169 = vshrl.u32 %v3168, 7
        %v3170 = vsub.s32 %v2901, %v3169
        %v3171 = vrot.slane %v2530, %v3170
        %v3172 = vsel %vm2906, %v3171, %v3167
        %v3173 = vlaneseq
        %v3174 = vshrl.u32 %v3173, 7
        %v3175 = vsub.s32 %v2908, %v3174
        %v3176 = vrot.slane %v2533, %v3175
        %v3177 = vsel %vm2913, %v3176, %v3172
        %v3178 = vlaneseq
        %v3179 = vshrl.u32 %v3178, 7
        %v3180 = vsub.s32 %v2915, %v3179
        %v3181 = vrot.slane %v2536, %v3180
        %v3182 = vsel %vm2920, %v3181, %v3177
        %v3183 = vlaneseq
        %v3184 = vshrl.u32 %v3183, 7
        %v3185 = vsub.s32 %v2922, %v3184
        %v3186 = vrot.slane %v2539, %v3185
        %v3187 = vsel %vm2927, %v3186, %v3182
        %v3188 = vlaneseq
        %v3189 = vshrl.u32 %v3188, 7
        %v3190 = vsub.s32 %v2929, %v3189
        %v3191 = vrot.slane %v2542, %v3190
        %v3192 = vsel %vm2934, %v3191, %v3187
        %v3193 = vlaneseq
        %v3194 = vshrl.u32 %v3193, 7
        %v3195 = vsub.s32 %v2936, %v3194
        %v3196 = vrot.slane %v2545, %v3195
        %v3197 = vsel %vm2941, %v3196, %v3192
        %v3198 = vlaneseq
        %v3199 = vshrl.u32 %v3198, 7
        %v3200 = vsub.s32 %v2943, %v3199
        %v3201 = vrot.slane %v2548, %v3200
        %v3202 = vsel %vm2948, %v3201, %v3197
        %v3203 = vlaneseq
        %v3204 = vshrl.u32 %v3203, 7
        %v3205 = vsub.s32 %v2950, %v3204
        %v3206 = vrot.slane %v2551, %v3205
        %v3207 = vsel %vm2955, %v3206, %v3202
        %v3208 = vlaneseq
        %v3209 = vshrl.u32 %v3208, 7
        %v3210 = vsub.s32 %v2957, %v3209
        %v3211 = vrot.slane %v2554, %v3210
        %v3212 = vsel %vm2962, %v3211, %v3207
        %v3213 = vlaneseq
        %v3214 = vshrl.u32 %v3213, 7
        %v3215 = vsub.s32 %v2964, %v3214
        %v3216 = vrot.slane %v2557, %v3215
        %v3217 = vsel %vm2969, %v3216, %v3212
        %v3218 = vlaneseq
        %v3219 = vshrl.u32 %v3218, 7
        %v3220 = vsub.s32 %v2971, %v3219
        %v3221 = vrot.slane %v2560, %v3220
        %v3222 = vsel %vm2976, %v3221, %v3217
        %v3223 = vlaneseq
        %v3224 = vshrl.u32 %v3223, 7
        %v3225 = vsub.s32 %v2978, %v3224
        %v3226 = vrot.slane %v2563, %v3225
        %v3227 = vsel %vm2983, %v3226, %v3222
        %v3228 = vlaneseq
        %v3229 = vshrl.u32 %v3228, 7
        %v3230 = vsub.s32 %v2985, %v3229
        %v3231 = vrot.slane %v2566, %v3230
        %v3232 = vsel %vm2990, %v3231, %v3227
        %v3233 = vlaneseq
        %v3234 = vshrl.u32 %v3233, 7
        %v3235 = vsub.s32 %v2992, %v3234
        %v3236 = vrot.slane %v2569, %v3235
        %v3237 = vsel %vm2997, %v3236, %v3232
        %v3238 = vlaneseq
        %v3239 = vshrl.u32 %v3238, 7
        %v3240 = vsub.s32 %v2999, %v3239
        %v3241 = vrot.slane %v2572, %v3240
        %v3242 = vsel %vm3004, %v3241, %v3237
        %v3243 = vlaneseq
        %v3244 = vshrl.u32 %v3243, 7
        %v3245 = vsub.s32 %v2896, %v3244
        %v3246 = vrot.slane %v2575, %v3245
        %v3247 = vlaneseq
        %v3248 = vshrl.u32 %v3247, 7
        %v3249 = vsub.s32 %v2901, %v3248
        %v3250 = vrot.slane %v2578, %v3249
        %v3251 = vsel %vm2906, %v3250, %v3246
        %v3252 = vlaneseq
        %v3253 = vshrl.u32 %v3252, 7
        %v3254 = vsub.s32 %v2908, %v3253
        %v3255 = vrot.slane %v2581, %v3254
        %v3256 = vsel %vm2913, %v3255, %v3251
        %v3257 = vlaneseq
        %v3258 = vshrl.u32 %v3257, 7
        %v3259 = vsub.s32 %v2915, %v3258
        %v3260 = vrot.slane %v2584, %v3259
        %v3261 = vsel %vm2920, %v3260, %v3256
        %v3262 = vlaneseq
        %v3263 = vshrl.u32 %v3262, 7
        %v3264 = vsub.s32 %v2922, %v3263
        %v3265 = vrot.slane %v2587, %v3264
        %v3266 = vsel %vm2927, %v3265, %v3261
        %v3267 = vlaneseq
        %v3268 = vshrl.u32 %v3267, 7
        %v3269 = vsub.s32 %v2929, %v3268
        %v3270 = vrot.slane %v2590, %v3269
        %v3271 = vsel %vm2934, %v3270, %v3266
        %v3272 = vlaneseq
        %v3273 = vshrl.u32 %v3272, 7
        %v3274 = vsub.s32 %v2936, %v3273
        %v3275 = vrot.slane %v2593, %v3274
        %v3276 = vsel %vm2941, %v3275, %v3271
        %v3277 = vlaneseq
        %v3278 = vshrl.u32 %v3277, 7
        %v3279 = vsub.s32 %v2943, %v3278
        %v3280 = vrot.slane %v2596, %v3279
        %v3281 = vsel %vm2948, %v3280, %v3276
        %v3282 = vlaneseq
        %v3283 = vshrl.u32 %v3282, 7
        %v3284 = vsub.s32 %v2950, %v3283
        %v3285 = vrot.slane %v2599, %v3284
        %v3286 = vsel %vm2955, %v3285, %v3281
        %v3287 = vlaneseq
        %v3288 = vshrl.u32 %v3287, 7
        %v3289 = vsub.s32 %v2957, %v3288
        %v3290 = vrot.slane %v2602, %v3289
        %v3291 = vsel %vm2962, %v3290, %v3286
        %v3292 = vlaneseq
        %v3293 = vshrl.u32 %v3292, 7
        %v3294 = vsub.s32 %v2964, %v3293
        %v3295 = vrot.slane %v2605, %v3294
        %v3296 = vsel %vm2969, %v3295, %v3291
        %v3297 = vlaneseq
        %v3298 = vshrl.u32 %v3297, 7
        %v3299 = vsub.s32 %v2971, %v3298
        %v3300 = vrot.slane %v2608, %v3299
        %v3301 = vsel %vm2976, %v3300, %v3296
        %v3302 = vlaneseq
        %v3303 = vshrl.u32 %v3302, 7
        %v3304 = vsub.s32 %v2978, %v3303
        %v3305 = vrot.slane %v2611, %v3304
        %v3306 = vsel %vm2983, %v3305, %v3301
        %v3307 = vlaneseq
        %v3308 = vshrl.u32 %v3307, 7
        %v3309 = vsub.s32 %v2985, %v3308
        %v3310 = vrot.slane %v2614, %v3309
        %v3311 = vsel %vm2990, %v3310, %v3306
        %v3312 = vlaneseq
        %v3313 = vshrl.u32 %v3312, 7
        %v3314 = vsub.s32 %v2992, %v3313
        %v3315 = vrot.slane %v2617, %v3314
        %v3316 = vsel %vm2997, %v3315, %v3311
        %v3317 = vlaneseq
        %v3318 = vshrl.u32 %v3317, 7
        %v3319 = vsub.s32 %v2999, %v3318
        %v3320 = vrot.slane %v2620, %v3319
        %v3321 = vsel %vm3004, %v3320, %v3316
        %v3322 = vlaneseq
        %v3323 = vshrl.u32 %v3322, 7
        %v3324 = vsub.s32 %v2896, %v3323
        %v3325 = vrot.slane %v2623, %v3324
        %v3326 = vlaneseq
        %v3327 = vshrl.u32 %v3326, 7
        %v3328 = vsub.s32 %v2901, %v3327
        %v3329 = vrot.slane %v2626, %v3328
        %v3330 = vsel %vm2906, %v3329, %v3325
        %v3331 = vlaneseq
        %v3332 = vshrl.u32 %v3331, 7
        %v3333 = vsub.s32 %v2908, %v3332
        %v3334 = vrot.slane %v2629, %v3333
        %v3335 = vsel %vm2913, %v3334, %v3330
        %v3336 = vlaneseq
        %v3337 = vshrl.u32 %v3336, 7
        %v3338 = vsub.s32 %v2915, %v3337
        %v3339 = vrot.slane %v2632, %v3338
        %v3340 = vsel %vm2920, %v3339, %v3335
        %v3341 = vlaneseq
        %v3342 = vshrl.u32 %v3341, 7
        %v3343 = vsub.s32 %v2922, %v3342
        %v3344 = vrot.slane %v2635, %v3343
        %v3345 = vsel %vm2927, %v3344, %v3340
        %v3346 = vlaneseq
        %v3347 = vshrl.u32 %v3346, 7
        %v3348 = vsub.s32 %v2929, %v3347
        %v3349 = vrot.slane %v2638, %v3348
        %v3350 = vsel %vm2934, %v3349, %v3345
        %v3351 = vlaneseq
        %v3352 = vshrl.u32 %v3351, 7
        %v3353 = vsub.s32 %v2936, %v3352
        %v3354 = vrot.slane %v2641, %v3353
        %v3355 = vsel %vm2941, %v3354, %v3350
        %v3356 = vlaneseq
        %v3357 = vshrl.u32 %v3356, 7
        %v3358 = vsub.s32 %v2943, %v3357
        %v3359 = vrot.slane %v2644, %v3358
        %v3360 = vsel %vm2948, %v3359, %v3355
        %v3361 = vlaneseq
        %v3362 = vshrl.u32 %v3361, 7
        %v3363 = vsub.s32 %v2950, %v3362
        %v3364 = vrot.slane %v2647, %v3363
        %v3365 = vsel %vm2955, %v3364, %v3360
        %v3366 = vlaneseq
        %v3367 = vshrl.u32 %v3366, 7
        %v3368 = vsub.s32 %v2957, %v3367
        %v3369 = vrot.slane %v2650, %v3368
        %v3370 = vsel %vm2962, %v3369, %v3365
        %v3371 = vlaneseq
        %v3372 = vshrl.u32 %v3371, 7
        %v3373 = vsub.s32 %v2964, %v3372
        %v3374 = vrot.slane %v2653, %v3373
        %v3375 = vsel %vm2969, %v3374, %v3370
        %v3376 = vlaneseq
        %v3377 = vshrl.u32 %v3376, 7
        %v3378 = vsub.s32 %v2971, %v3377
        %v3379 = vrot.slane %v2656, %v3378
        %v3380 = vsel %vm2976, %v3379, %v3375
        %v3381 = vlaneseq
        %v3382 = vshrl.u32 %v3381, 7
        %v3383 = vsub.s32 %v2978, %v3382
        %v3384 = vrot.slane %v2659, %v3383
        %v3385 = vsel %vm2983, %v3384, %v3380
        %v3386 = vlaneseq
        %v3387 = vshrl.u32 %v3386, 7
        %v3388 = vsub.s32 %v2985, %v3387
        %v3389 = vrot.slane %v2662, %v3388
        %v3390 = vsel %vm2990, %v3389, %v3385
        %v3391 = vlaneseq
        %v3392 = vshrl.u32 %v3391, 7
        %v3393 = vsub.s32 %v2992, %v3392
        %v3394 = vrot.slane %v2665, %v3393
        %v3395 = vsel %vm2997, %v3394, %v3390
        %v3396 = vlaneseq
        %v3397 = vshrl.u32 %v3396, 7
        %v3398 = vsub.s32 %v2999, %v3397
        %v3399 = vrot.slane %v2668, %v3398
        %v3400 = vsel %vm3004, %v3399, %v3395
        %v3401 = vlaneseq
        %v3402 = vshrl.u32 %v3401, 7
        %v3403 = vsub.s32 %v2896, %v3402
        %v3404 = vrot.slane %v2671, %v3403
        %v3405 = vlaneseq
        %v3406 = vshrl.u32 %v3405, 7
        %v3407 = vsub.s32 %v2901, %v3406
        %v3408 = vrot.slane %v2674, %v3407
        %v3409 = vsel %vm2906, %v3408, %v3404
        %v3410 = vlaneseq
        %v3411 = vshrl.u32 %v3410, 7
        %v3412 = vsub.s32 %v2908, %v3411
        %v3413 = vrot.slane %v2677, %v3412
        %v3414 = vsel %vm2913, %v3413, %v3409
        %v3415 = vlaneseq
        %v3416 = vshrl.u32 %v3415, 7
        %v3417 = vsub.s32 %v2915, %v3416
        %v3418 = vrot.slane %v2680, %v3417
        %v3419 = vsel %vm2920, %v3418, %v3414
        %v3420 = vlaneseq
        %v3421 = vshrl.u32 %v3420, 7
        %v3422 = vsub.s32 %v2922, %v3421
        %v3423 = vrot.slane %v2683, %v3422
        %v3424 = vsel %vm2927, %v3423, %v3419
        %v3425 = vlaneseq
        %v3426 = vshrl.u32 %v3425, 7
        %v3427 = vsub.s32 %v2929, %v3426
        %v3428 = vrot.slane %v2686, %v3427
        %v3429 = vsel %vm2934, %v3428, %v3424
        %v3430 = vlaneseq
        %v3431 = vshrl.u32 %v3430, 7
        %v3432 = vsub.s32 %v2936, %v3431
        %v3433 = vrot.slane %v2689, %v3432
        %v3434 = vsel %vm2941, %v3433, %v3429
        %v3435 = vlaneseq
        %v3436 = vshrl.u32 %v3435, 7
        %v3437 = vsub.s32 %v2943, %v3436
        %v3438 = vrot.slane %v2692, %v3437
        %v3439 = vsel %vm2948, %v3438, %v3434
        %v3440 = vlaneseq
        %v3441 = vshrl.u32 %v3440, 7
        %v3442 = vsub.s32 %v2950, %v3441
        %v3443 = vrot.slane %v2695, %v3442
        %v3444 = vsel %vm2955, %v3443, %v3439
        %v3445 = vlaneseq
        %v3446 = vshrl.u32 %v3445, 7
        %v3447 = vsub.s32 %v2957, %v3446
        %v3448 = vrot.slane %v2698, %v3447
        %v3449 = vsel %vm2962, %v3448, %v3444
        %v3450 = vlaneseq
        %v3451 = vshrl.u32 %v3450, 7
        %v3452 = vsub.s32 %v2964, %v3451
        %v3453 = vrot.slane %v2701, %v3452
        %v3454 = vsel %vm2969, %v3453, %v3449
        %v3455 = vlaneseq
        %v3456 = vshrl.u32 %v3455, 7
        %v3457 = vsub.s32 %v2971, %v3456
        %v3458 = vrot.slane %v2704, %v3457
        %v3459 = vsel %vm2976, %v3458, %v3454
        %v3460 = vlaneseq
        %v3461 = vshrl.u32 %v3460, 7
        %v3462 = vsub.s32 %v2978, %v3461
        %v3463 = vrot.slane %v2707, %v3462
        %v3464 = vsel %vm2983, %v3463, %v3459
        %v3465 = vlaneseq
        %v3466 = vshrl.u32 %v3465, 7
        %v3467 = vsub.s32 %v2985, %v3466
        %v3468 = vrot.slane %v2710, %v3467
        %v3469 = vsel %vm2990, %v3468, %v3464
        %v3470 = vlaneseq
        %v3471 = vshrl.u32 %v3470, 7
        %v3472 = vsub.s32 %v2992, %v3471
        %v3473 = vrot.slane %v2713, %v3472
        %v3474 = vsel %vm2997, %v3473, %v3469
        %v3475 = vlaneseq
        %v3476 = vshrl.u32 %v3475, 7
        %v3477 = vsub.s32 %v2999, %v3476
        %v3478 = vrot.slane %v2716, %v3477
        %v3479 = vsel %vm3004, %v3478, %v3474
        %v3480 = vlaneseq
        %v3481 = vshrl.u32 %v3480, 7
        %v3482 = vsub.s32 %v2896, %v3481
        %v3483 = vrot.slane %v2719, %v3482
        %v3484 = vlaneseq
        %v3485 = vshrl.u32 %v3484, 7
        %v3486 = vsub.s32 %v2901, %v3485
        %v3487 = vrot.slane %v2722, %v3486
        %v3488 = vsel %vm2906, %v3487, %v3483
        %v3489 = vlaneseq
        %v3490 = vshrl.u32 %v3489, 7
        %v3491 = vsub.s32 %v2908, %v3490
        %v3492 = vrot.slane %v2725, %v3491
        %v3493 = vsel %vm2913, %v3492, %v3488
        %v3494 = vlaneseq
        %v3495 = vshrl.u32 %v3494, 7
        %v3496 = vsub.s32 %v2915, %v3495
        %v3497 = vrot.slane %v2728, %v3496
        %v3498 = vsel %vm2920, %v3497, %v3493
        %v3499 = vlaneseq
        %v3500 = vshrl.u32 %v3499, 7
        %v3501 = vsub.s32 %v2922, %v3500
        %v3502 = vrot.slane %v2731, %v3501
        %v3503 = vsel %vm2927, %v3502, %v3498
        %v3504 = vlaneseq
        %v3505 = vshrl.u32 %v3504, 7
        %v3506 = vsub.s32 %v2929, %v3505
        %v3507 = vrot.slane %v2734, %v3506
        %v3508 = vsel %vm2934, %v3507, %v3503
        %v3509 = vlaneseq
        %v3510 = vshrl.u32 %v3509, 7
        %v3511 = vsub.s32 %v2936, %v3510
        %v3512 = vrot.slane %v2737, %v3511
        %v3513 = vsel %vm2941, %v3512, %v3508
        %v3514 = vlaneseq
        %v3515 = vshrl.u32 %v3514, 7
        %v3516 = vsub.s32 %v2943, %v3515
        %v3517 = vrot.slane %v2740, %v3516
        %v3518 = vsel %vm2948, %v3517, %v3513
        %v3519 = vlaneseq
        %v3520 = vshrl.u32 %v3519, 7
        %v3521 = vsub.s32 %v2950, %v3520
        %v3522 = vrot.slane %v2743, %v3521
        %v3523 = vsel %vm2955, %v3522, %v3518
        %v3524 = vlaneseq
        %v3525 = vshrl.u32 %v3524, 7
        %v3526 = vsub.s32 %v2957, %v3525
        %v3527 = vrot.slane %v2746, %v3526
        %v3528 = vsel %vm2962, %v3527, %v3523
        %v3529 = vlaneseq
        %v3530 = vshrl.u32 %v3529, 7
        %v3531 = vsub.s32 %v2964, %v3530
        %v3532 = vrot.slane %v2749, %v3531
        %v3533 = vsel %vm2969, %v3532, %v3528
        %v3534 = vlaneseq
        %v3535 = vshrl.u32 %v3534, 7
        %v3536 = vsub.s32 %v2971, %v3535
        %v3537 = vrot.slane %v2752, %v3536
        %v3538 = vsel %vm2976, %v3537, %v3533
        %v3539 = vlaneseq
        %v3540 = vshrl.u32 %v3539, 7
        %v3541 = vsub.s32 %v2978, %v3540
        %v3542 = vrot.slane %v2755, %v3541
        %v3543 = vsel %vm2983, %v3542, %v3538
        %v3544 = vlaneseq
        %v3545 = vshrl.u32 %v3544, 7
        %v3546 = vsub.s32 %v2985, %v3545
        %v3547 = vrot.slane %v2758, %v3546
        %v3548 = vsel %vm2990, %v3547, %v3543
        %v3549 = vlaneseq
        %v3550 = vshrl.u32 %v3549, 7
        %v3551 = vsub.s32 %v2992, %v3550
        %v3552 = vrot.slane %v2761, %v3551
        %v3553 = vsel %vm2997, %v3552, %v3548
        %v3554 = vlaneseq
        %v3555 = vshrl.u32 %v3554, 7
        %v3556 = vsub.s32 %v2999, %v3555
        %v3557 = vrot.slane %v2764, %v3556
        %v3558 = vsel %vm3004, %v3557, %v3553
        %vm3559 = vcmask 1041409
        %v3560 = vsel %vm3559, %v3084, %v3005
        %vm3561 = vcmask 1042434
        %v3562 = vsel %vm3561, %v3163, %v3560
        %vm3563 = vcmask 1043459
        %v3564 = vsel %vm3563, %v3242, %v3562
        %vm3565 = vcmask 1044484
        %v3566 = vsel %vm3565, %v3321, %v3564
        %vm3567 = vcmask 1045509
        %v3568 = vsel %vm3567, %v3400, %v3566
        %vm3569 = vcmask 1046534
        %v3570 = vsel %vm3569, %v3479, %v3568
        %vm3571 = vcmask 1047559
        %v3572 = vsel %vm3571, %v3558, %v3570
        %v3574 = vsel %vm2766, %v3572, -1e+30
        %3575 = vst [vmem:[%s1512] sm:$0xff] %v3574
        %v3576 = vld [vmem:[#allocation3] sm:$0xff]
        %3577 = vmax.xlane.f32.xlu0 %v3574
        %v3578 = vpop.xlane.xlu0 %3577
        %v3579 = vmax.f32 %v3576, %v3578
        %v3580 = vsub.f32 %v3576, %v3579
        %v3581 = vmul.f32 %v3580, 1.442695
        %v3582 = vpow.pop %v3581
        %3584 = vset.pattern.permute.xlu0 0
        %3585 = vperm.xlu0 %3584, %v3579
        %v3586 = vpop.permute.xlu0 %3585
        %v3588 = vsub.f32 %v3574, %v3586
        %v3589 = vmul.f32 %v3588, 1.442695
        %v3590 = vpow.pop %v3589
        %v3591 = vld [vmem:[#allocation4] sm:$0xff]
        %v3592 = vmul.f32 %v3582, %v3591
        %3593 = vadd.xlane.f32.xlu0 %v3590
        %v3594 = vpop.xlane.xlu0 %3593
        %v3595 = vadd.f32 %v3592, %v3594
        %vm3596 = vcmask 7168
        %3597 = vst.msk [vmem:[#allocation4] sm:$0xff] %vm3596, %v3595
        %v3598 = vld [vmem:[#allocation5] sm:$0xff]
        %3600 = vset.pattern.permute.xlu0 0
        %3601 = vperm.xlu0 %3600, %v3582
        %v3602 = vpop.permute.xlu0 %3601
        %v3604 = vmul.f32 %v3602, %v3598
        %v3606 = vcombine.high %v3590, %v3590
        %v3608 = vunpack.c.l.s4 1966171168
        %v3609 = vunpack.c.0.s8 %v3608
        %v3610 = vlaneseq
        %v3611 = vshrl.u32 %v3610, 7
        %v3612 = vsub.s32 %v3609, %v3611
        %v3613 = vrot.slane %v3590, %v3612
        %v3615 = vunpack.c.l.s4 1966171168
        %v3616 = vunpack.c.0.s8 %v3615
        %v3617 = vlaneseq
        %v3618 = vshrl.u32 %v3617, 7
        %v3619 = vsub.s32 %v3616, %v3618
        %v3620 = vrot.slane %v3606, %v3619
        %v3621 = vcombine.high %v3613, %v3613
        %v3622 = vcombine.high %v3620, %v3620
        %v3624 = vunpack.c.l.s4 1966171168
        %v3625 = vunpack.c.0.s8 %v3624
        %v3626 = vlaneseq
        %v3627 = vshrl.u32 %v3626, 7
        %v3628 = vsub.s32 %v3625, %v3627
        %v3629 = vrot.slane %v3613, %v3628
        %v3631 = vunpack.c.l.s4 1966171168
        %v3632 = vunpack.c.0.s8 %v3631
        %v3633 = vlaneseq
        %v3634 = vshrl.u32 %v3633, 7
        %v3635 = vsub.s32 %v3632, %v3634
        %v3636 = vrot.slane %v3620, %v3635
        %v3638 = vunpack.c.l.s4 1966171168
        %v3639 = vunpack.c.0.s8 %v3638
        %v3640 = vlaneseq
        %v3641 = vshrl.u32 %v3640, 7
        %v3642 = vsub.s32 %v3639, %v3641
        %v3643 = vrot.slane %v3621, %v3642
        %v3645 = vunpack.c.l.s4 1966171168
        %v3646 = vunpack.c.0.s8 %v3645
        %v3647 = vlaneseq
        %v3648 = vshrl.u32 %v3647, 7
        %v3649 = vsub.s32 %v3646, %v3648
        %v3650 = vrot.slane %v3622, %v3649
        %v3651 = vcombine.high %v3629, %v3629
        %v3652 = vcombine.high %v3636, %v3636
        %v3653 = vcombine.high %v3643, %v3643
        %v3654 = vcombine.high %v3650, %v3650
        %v3663 = vpack.c.bf16 %v3629, %v3629
        %v3664 = vpack.c.bf16 %v3643, %v3643
        %v3665 = vpack.c.bf16 %v3651, %v3651
        %v3666 = vpack.c.bf16 %v3653, %v3653
        %v3667 = vpack.c.bf16 %v3636, %v3636
        %v3668 = vpack.c.bf16 %v3650, %v3650
        %v3669 = vpack.c.bf16 %v3652, %v3652
        %v3670 = vpack.c.bf16 %v3654, %v3654
        %v3671 = vld [vmem:[%s1463] sm:$0xf]
        %v3672 = vld [vmem:[%s1463 + $0x4] sm:$0xf]
        %v3673 = vld [vmem:[%s1463 + $0x8] sm:$0xf]
        %v3674 = vld [vmem:[%s1463 + $0xc] sm:$0xf]
        %v3675 = vld [vmem:[%s1463 + $0x10] sm:$0xf]
        %v3676 = vld [vmem:[%s1463 + $0x14] sm:$0xf]
        %v3677 = vld [vmem:[%s1463 + $0x18] sm:$0xf]
        %v3678 = vld [vmem:[%s1463 + $0x1c] sm:$0xf]
        %v3679 = vld [vmem:[%s1463 + $0x20] sm:$0xf]
        %v3680 = vld [vmem:[%s1463 + $0x24] sm:$0xf]
        %v3681 = vld [vmem:[%s1463 + $0x28] sm:$0xf]
        %v3682 = vld [vmem:[%s1463 + $0x2c] sm:$0xf]
        %v3683 = vld [vmem:[%s1463 + $0x30] sm:$0xf]
        %v3684 = vld [vmem:[%s1463 + $0x34] sm:$0xf]
        %v3685 = vld [vmem:[%s1463 + $0x38] sm:$0xf]
        %v3686 = vld [vmem:[%s1463 + $0x3c] sm:$0xf]
        %v3687 = vld [vmem:[%s1463 + $0x40] sm:$0xf]
        %v3688 = vld [vmem:[%s1463 + $0x44] sm:$0xf]
        %v3689 = vld [vmem:[%s1463 + $0x48] sm:$0xf]
        %v3690 = vld [vmem:[%s1463 + $0x4c] sm:$0xf]
        %v3691 = vld [vmem:[%s1463 + $0x50] sm:$0xf]
        %v3692 = vld [vmem:[%s1463 + $0x54] sm:$0xf]
        %v3693 = vld [vmem:[%s1463 + $0x58] sm:$0xf]
        %v3694 = vld [vmem:[%s1463 + $0x5c] sm:$0xf]
        %v3695 = vld [vmem:[%s1463 + $0x60] sm:$0xf]
        %v3696 = vld [vmem:[%s1463 + $0x64] sm:$0xf]
        %v3697 = vld [vmem:[%s1463 + $0x68] sm:$0xf]
        %v3698 = vld [vmem:[%s1463 + $0x6c] sm:$0xf]
        %v3699 = vld [vmem:[%s1463 + $0x70] sm:$0xf]
        %v3700 = vld [vmem:[%s1463 + $0x74] sm:$0xf]
        %v3701 = vld [vmem:[%s1463 + $0x78] sm:$0xf]
        %v3702 = vld [vmem:[%s1463 + $0x7c] sm:$0xf]
        %v3703 = vld [vmem:[%s1463 + $0x80] sm:$0xf]
        %v3704 = vld [vmem:[%s1463 + $0x84] sm:$0xf]
        %v3705 = vld [vmem:[%s1463 + $0x88] sm:$0xf]
        %v3706 = vld [vmem:[%s1463 + $0x8c] sm:$0xf]
        %v3707 = vld [vmem:[%s1463 + $0x90] sm:$0xf]
        %v3708 = vld [vmem:[%s1463 + $0x94] sm:$0xf]
        %v3709 = vld [vmem:[%s1463 + $0x98] sm:$0xf]
        %v3710 = vld [vmem:[%s1463 + $0x9c] sm:$0xf]
        %v3711 = vld [vmem:[%s1463 + $0xa0] sm:$0xf]
        %v3712 = vld [vmem:[%s1463 + $0xa4] sm:$0xf]
        %v3713 = vld [vmem:[%s1463 + $0xa8] sm:$0xf]
        %v3714 = vld [vmem:[%s1463 + $0xac] sm:$0xf]
        %v3715 = vld [vmem:[%s1463 + $0xb0] sm:$0xf]
        %v3716 = vld [vmem:[%s1463 + $0xb4] sm:$0xf]
        %v3717 = vld [vmem:[%s1463 + $0xb8] sm:$0xf]
        %v3718 = vld [vmem:[%s1463 + $0xbc] sm:$0xf]
        %v3719 = vld [vmem:[%s1463 + $0xc0] sm:$0xf]
        %v3720 = vld [vmem:[%s1463 + $0xc4] sm:$0xf]
        %v3721 = vld [vmem:[%s1463 + $0xc8] sm:$0xf]
        %v3722 = vld [vmem:[%s1463 + $0xcc] sm:$0xf]
        %v3723 = vld [vmem:[%s1463 + $0xd0] sm:$0xf]
        %v3724 = vld [vmem:[%s1463 + $0xd4] sm:$0xf]
        %v3725 = vld [vmem:[%s1463 + $0xd8] sm:$0xf]
        %v3726 = vld [vmem:[%s1463 + $0xdc] sm:$0xf]
        %v3727 = vld [vmem:[%s1463 + $0xe0] sm:$0xf]
        %v3728 = vld [vmem:[%s1463 + $0xe4] sm:$0xf]
        %v3729 = vld [vmem:[%s1463 + $0xe8] sm:$0xf]
        %v3730 = vld [vmem:[%s1463 + $0xec] sm:$0xf]
        %v3731 = vld [vmem:[%s1463 + $0xf0] sm:$0xf]
        %v3732 = vld [vmem:[%s1463 + $0xf4] sm:$0xf]
        %v3733 = vld [vmem:[%s1463 + $0xf8] sm:$0xf]
        %v3734 = vld [vmem:[%s1463 + $0xfc] sm:$0xf]
        %v3735 = vld [vmem:[%s1463 + $0x100] sm:$0xf]
        %v3736 = vld [vmem:[%s1463 + $0x104] sm:$0xf]
        %v3737 = vld [vmem:[%s1463 + $0x108] sm:$0xf]
        %v3738 = vld [vmem:[%s1463 + $0x10c] sm:$0xf]
        %v3739 = vld [vmem:[%s1463 + $0x110] sm:$0xf]
        %v3740 = vld [vmem:[%s1463 + $0x114] sm:$0xf]
        %v3741 = vld [vmem:[%s1463 + $0x118] sm:$0xf]
        %v3742 = vld [vmem:[%s1463 + $0x11c] sm:$0xf]
        %v3743 = vld [vmem:[%s1463 + $0x120] sm:$0xf]
        %v3744 = vld [vmem:[%s1463 + $0x124] sm:$0xf]
        %v3745 = vld [vmem:[%s1463 + $0x128] sm:$0xf]
        %v3746 = vld [vmem:[%s1463 + $0x12c] sm:$0xf]
        %v3747 = vld [vmem:[%s1463 + $0x130] sm:$0xf]
        %v3748 = vld [vmem:[%s1463 + $0x134] sm:$0xf]
        %v3749 = vld [vmem:[%s1463 + $0x138] sm:$0xf]
        %v3750 = vld [vmem:[%s1463 + $0x13c] sm:$0xf]
        %v3751 = vld [vmem:[%s1463 + $0x140] sm:$0xf]
        %v3752 = vld [vmem:[%s1463 + $0x144] sm:$0xf]
        %v3753 = vld [vmem:[%s1463 + $0x148] sm:$0xf]
        %v3754 = vld [vmem:[%s1463 + $0x14c] sm:$0xf]
        %v3755 = vld [vmem:[%s1463 + $0x150] sm:$0xf]
        %v3756 = vld [vmem:[%s1463 + $0x154] sm:$0xf]
        %v3757 = vld [vmem:[%s1463 + $0x158] sm:$0xf]
        %v3758 = vld [vmem:[%s1463 + $0x15c] sm:$0xf]
        %v3759 = vld [vmem:[%s1463 + $0x160] sm:$0xf]
        %v3760 = vld [vmem:[%s1463 + $0x164] sm:$0xf]
        %v3761 = vld [vmem:[%s1463 + $0x168] sm:$0xf]
        %v3762 = vld [vmem:[%s1463 + $0x16c] sm:$0xf]
        %v3763 = vld [vmem:[%s1463 + $0x170] sm:$0xf]
        %v3764 = vld [vmem:[%s1463 + $0x174] sm:$0xf]
        %v3765 = vld [vmem:[%s1463 + $0x178] sm:$0xf]
        %v3766 = vld [vmem:[%s1463 + $0x17c] sm:$0xf]
        %v3767 = vld [vmem:[%s1463 + $0x180] sm:$0xf]
        %v3768 = vld [vmem:[%s1463 + $0x184] sm:$0xf]
        %v3769 = vld [vmem:[%s1463 + $0x188] sm:$0xf]
        %v3770 = vld [vmem:[%s1463 + $0x18c] sm:$0xf]
        %v3771 = vld [vmem:[%s1463 + $0x190] sm:$0xf]
        %v3772 = vld [vmem:[%s1463 + $0x194] sm:$0xf]
        %v3773 = vld [vmem:[%s1463 + $0x198] sm:$0xf]
        %v3774 = vld [vmem:[%s1463 + $0x19c] sm:$0xf]
        %v3775 = vld [vmem:[%s1463 + $0x1a0] sm:$0xf]
        %v3776 = vld [vmem:[%s1463 + $0x1a4] sm:$0xf]
        %v3777 = vld [vmem:[%s1463 + $0x1a8] sm:$0xf]
        %v3778 = vld [vmem:[%s1463 + $0x1ac] sm:$0xf]
        %v3779 = vld [vmem:[%s1463 + $0x1b0] sm:$0xf]
        %v3780 = vld [vmem:[%s1463 + $0x1b4] sm:$0xf]
        %v3781 = vld [vmem:[%s1463 + $0x1b8] sm:$0xf]
        %v3782 = vld [vmem:[%s1463 + $0x1bc] sm:$0xf]
        %v3783 = vld [vmem:[%s1463 + $0x1c0] sm:$0xf]
        %v3784 = vld [vmem:[%s1463 + $0x1c4] sm:$0xf]
        %v3785 = vld [vmem:[%s1463 + $0x1c8] sm:$0xf]
        %v3786 = vld [vmem:[%s1463 + $0x1cc] sm:$0xf]
        %v3787 = vld [vmem:[%s1463 + $0x1d0] sm:$0xf]
        %v3788 = vld [vmem:[%s1463 + $0x1d4] sm:$0xf]
        %v3789 = vld [vmem:[%s1463 + $0x1d8] sm:$0xf]
        %v3790 = vld [vmem:[%s1463 + $0x1dc] sm:$0xf]
        %v3791 = vld [vmem:[%s1463 + $0x1e0] sm:$0xf]
        %v3792 = vld [vmem:[%s1463 + $0x1e4] sm:$0xf]
        %v3793 = vld [vmem:[%s1463 + $0x1e8] sm:$0xf]
        %v3794 = vld [vmem:[%s1463 + $0x1ec] sm:$0xf]
        %v3795 = vld [vmem:[%s1463 + $0x1f0] sm:$0xf]
        %v3796 = vld [vmem:[%s1463 + $0x1f4] sm:$0xf]
        %v3797 = vld [vmem:[%s1463 + $0x1f8] sm:$0xf]
        %v3798 = vld [vmem:[%s1463 + $0x1fc] sm:$0xf]
        %v3815 = vunpack.c.l.b16 %v3671
        %v3816 = vunpack.c.l.b16 %v3672
        %v3817 = vunpack.c.l.b16 %v3673
        %v3818 = vunpack.c.l.b16 %v3674
        %v3819 = vunpack.c.l.b16 %v3675
        %v3820 = vunpack.c.l.b16 %v3676
        %v3821 = vunpack.c.l.b16 %v3677
        %v3822 = vunpack.c.l.b16 %v3678
        %v3823 = vunpack.c.l.b16 %v3679
        %v3824 = vunpack.c.l.b16 %v3680
        %v3825 = vunpack.c.l.b16 %v3681
        %v3826 = vunpack.c.l.b16 %v3682
        %v3827 = vunpack.c.l.b16 %v3683
        %v3828 = vunpack.c.l.b16 %v3684
        %v3829 = vunpack.c.l.b16 %v3685
        %v3830 = vunpack.c.l.b16 %v3686
        %v3831 = vpack.c.b16 %v3816, %v3815
        %v3832 = vpack.c.b16 %v3818, %v3817
        %v3833 = vpack.c.b16 %v3820, %v3819
        %v3834 = vpack.c.b16 %v3822, %v3821
        %v3835 = vpack.c.b16 %v3824, %v3823
        %v3836 = vpack.c.b16 %v3826, %v3825
        %v3837 = vpack.c.b16 %v3828, %v3827
        %v3838 = vpack.c.b16 %v3830, %v3829
        %3847 = vmatprep.subr.bf16.mxu0 0
        %3848 = vmatpush1.bf16.msra.mxu0 %v3831
        %3849 = vmatprep.subr.bf16.mxu0 0
        %3850 = vmatpush1.bf16.msra.mxu0 %v3832
        %3851 = vmatprep.subr.bf16.mxu0 0
        %3852 = vmatpush1.bf16.msra.mxu0 %v3833
        %3853 = vmatprep.subr.bf16.mxu0 0
        %3854 = vmatpush1.bf16.msra.mxu0 %v3834
        %3855 = vmatprep.subr.bf16.mxu0 0
        %3856 = vmatpush1.bf16.msra.mxu0 %v3835
        %3857 = vmatprep.subr.bf16.mxu0 0
        %3858 = vmatpush1.bf16.msra.mxu0 %v3836
        %3859 = vmatprep.subr.bf16.mxu0 0
        %3860 = vmatpush1.bf16.msra.mxu0 %v3837
        %3861 = vmatprep.subr.bf16.mxu0 0
        %3862 = vmatpush1.bf16.msra.mxu0 %v3838
        %3863 = vmatprep.subr.bf16.mxu0 0
        %3864 = vmatpush1.bf16.msra.mxu0 0
        %3865 = vmatprep.subr.bf16.mxu0 0
        %3866 = vmatpush1.bf16.msra.mxu0 0
        %3867 = vmatprep.subr.bf16.mxu0 0
        %3868 = vmatpush1.bf16.msra.mxu0 0
        %3869 = vmatprep.subr.bf16.mxu0 0
        %3870 = vmatpush1.bf16.msra.mxu0 0
        %3871 = vmatprep.subr.bf16.mxu0 0
        %3872 = vmatpush1.bf16.msra.mxu0 0
        %3873 = vmatprep.subr.bf16.mxu0 0
        %3874 = vmatpush1.bf16.msra.mxu0 0
        %3875 = vmatprep.subr.bf16.mxu0 0
        %3876 = vmatpush1.bf16.msra.mxu0 0
        %3877 = vmatprep.subr.bf16.mxu0 0
        %3878 = vmatpush1.bf16.msra.mxu0 0
        %3879 = vmatprep.mubr.bf16.mxu0 0
        %3880 = vmatmul.mubr.bf16.gmra.mrb[0].mxu0 %v3663
        %v3881 = vpop.f32.mrb[0].mxu0
        %v3882 = vadd.f32 0.0, %v3881
        %v3883 = vpop.f32.mrb[0].mxu0
        %v3884 = vpop.f32.mrb[0].mxu0
        %v3885 = vpop.f32.mrb[0].mxu0
        %3886 = vdwg.mxu0
        %v3903 = vunpack.c.l.b16 %v3687
        %v3904 = vunpack.c.l.b16 %v3688
        %v3905 = vunpack.c.l.b16 %v3689
        %v3906 = vunpack.c.l.b16 %v3690
        %v3907 = vunpack.c.l.b16 %v3691
        %v3908 = vunpack.c.l.b16 %v3692
        %v3909 = vunpack.c.l.b16 %v3693
        %v3910 = vunpack.c.l.b16 %v3694
        %v3911 = vunpack.c.l.b16 %v3695
        %v3912 = vunpack.c.l.b16 %v3696
        %v3913 = vunpack.c.l.b16 %v3697
        %v3914 = vunpack.c.l.b16 %v3698
        %v3915 = vunpack.c.l.b16 %v3699
        %v3916 = vunpack.c.l.b16 %v3700
        %v3917 = vunpack.c.l.b16 %v3701
        %v3918 = vunpack.c.l.b16 %v3702
        %v3919 = vpack.c.b16 %v3904, %v3903
        %v3920 = vpack.c.b16 %v3906, %v3905
        %v3921 = vpack.c.b16 %v3908, %v3907
        %v3922 = vpack.c.b16 %v3910, %v3909
        %v3923 = vpack.c.b16 %v3912, %v3911
        %v3924 = vpack.c.b16 %v3914, %v3913
        %v3925 = vpack.c.b16 %v3916, %v3915
        %v3926 = vpack.c.b16 %v3918, %v3917
        %3935 = vmatprep.subr.bf16.mxu0 0
        %3936 = vmatpush1.bf16.msra.mxu0 %v3919
        %3937 = vmatprep.subr.bf16.mxu0 0
        %3938 = vmatpush1.bf16.msra.mxu0 %v3920
        %3939 = vmatprep.subr.bf16.mxu0 0
        %3940 = vmatpush1.bf16.msra.mxu0 %v3921
        %3941 = vmatprep.subr.bf16.mxu0 0
        %3942 = vmatpush1.bf16.msra.mxu0 %v3922
        %3943 = vmatprep.subr.bf16.mxu0 0
        %3944 = vmatpush1.bf16.msra.mxu0 %v3923
        %3945 = vmatprep.subr.bf16.mxu0 0
        %3946 = vmatpush1.bf16.msra.mxu0 %v3924
        %3947 = vmatprep.subr.bf16.mxu0 0
        %3948 = vmatpush1.bf16.msra.mxu0 %v3925
        %3949 = vmatprep.subr.bf16.mxu0 0
        %3950 = vmatpush1.bf16.msra.mxu0 %v3926
        %3951 = vmatprep.subr.bf16.mxu0 0
        %3952 = vmatpush1.bf16.msra.mxu0 0
        %3953 = vmatprep.subr.bf16.mxu0 0
        %3954 = vmatpush1.bf16.msra.mxu0 0
        %3955 = vmatprep.subr.bf16.mxu0 0
        %3956 = vmatpush1.bf16.msra.mxu0 0
        %3957 = vmatprep.subr.bf16.mxu0 0
        %3958 = vmatpush1.bf16.msra.mxu0 0
        %3959 = vmatprep.subr.bf16.mxu0 0
        %3960 = vmatpush1.bf16.msra.mxu0 0
        %3961 = vmatprep.subr.bf16.mxu0 0
        %3962 = vmatpush1.bf16.msra.mxu0 0
        %3963 = vmatprep.subr.bf16.mxu0 0
        %3964 = vmatpush1.bf16.msra.mxu0 0
        %3965 = vmatprep.subr.bf16.mxu0 0
        %3966 = vmatpush1.bf16.msra.mxu0 0
        %3967 = vmatprep.mubr.bf16.mxu0 0
        %3968 = vmatmul.mubr.bf16.gmra.mrb[0].mxu0 %v3664
        %v3969 = vpop.f32.mrb[0].mxu0
        %v3970 = vadd.f32 0.0, %v3969
        %v3971 = vpop.f32.mrb[0].mxu0
        %v3972 = vpop.f32.mrb[0].mxu0
        %v3973 = vpop.f32.mrb[0].mxu0
        %3974 = vdwg.mxu0
        %v3991 = vunpack.c.l.b16 %v3703
        %v3992 = vunpack.c.l.b16 %v3704
        %v3993 = vunpack.c.l.b16 %v3705
        %v3994 = vunpack.c.l.b16 %v3706
        %v3995 = vunpack.c.l.b16 %v3707
        %v3996 = vunpack.c.l.b16 %v3708
        %v3997 = vunpack.c.l.b16 %v3709
        %v3998 = vunpack.c.l.b16 %v3710
        %v3999 = vunpack.c.l.b16 %v3711
        %v4000 = vunpack.c.l.b16 %v3712
        %v4001 = vunpack.c.l.b16 %v3713
        %v4002 = vunpack.c.l.b16 %v3714
        %v4003 = vunpack.c.l.b16 %v3715
        %v4004 = vunpack.c.l.b16 %v3716
        %v4005 = vunpack.c.l.b16 %v3717
        %v4006 = vunpack.c.l.b16 %v3718
        %v4007 = vpack.c.b16 %v3992, %v3991
        %v4008 = vpack.c.b16 %v3994, %v3993
        %v4009 = vpack.c.b16 %v3996, %v3995
        %v4010 = vpack.c.b16 %v3998, %v3997
        %v4011 = vpack.c.b16 %v4000, %v3999
        %v4012 = vpack.c.b16 %v4002, %v4001
        %v4013 = vpack.c.b16 %v4004, %v4003
        %v4014 = vpack.c.b16 %v4006, %v4005
        %4023 = vmatprep.subr.bf16.mxu0 0
        %4024 = vmatpush1.bf16.msra.mxu0 %v4007
        %4025 = vmatprep.subr.bf16.mxu0 0
        %4026 = vmatpush1.bf16.msra.mxu0 %v4008
        %4027 = vmatprep.subr.bf16.mxu0 0
        %4028 = vmatpush1.bf16.msra.mxu0 %v4009
        %4029 = vmatprep.subr.bf16.mxu0 0
        %4030 = vmatpush1.bf16.msra.mxu0 %v4010
        %4031 = vmatprep.subr.bf16.mxu0 0
        %4032 = vmatpush1.bf16.msra.mxu0 %v4011
        %4033 = vmatprep.subr.bf16.mxu0 0
        %4034 = vmatpush1.bf16.msra.mxu0 %v4012
        %4035 = vmatprep.subr.bf16.mxu0 0
        %4036 = vmatpush1.bf16.msra.mxu0 %v4013
        %4037 = vmatprep.subr.bf16.mxu0 0
        %4038 = vmatpush1.bf16.msra.mxu0 %v4014
        %4039 = vmatprep.subr.bf16.mxu0 0
        %4040 = vmatpush1.bf16.msra.mxu0 0
        %4041 = vmatprep.subr.bf16.mxu0 0
        %4042 = vmatpush1.bf16.msra.mxu0 0
        %4043 = vmatprep.subr.bf16.mxu0 0
        %4044 = vmatpush1.bf16.msra.mxu0 0
        %4045 = vmatprep.subr.bf16.mxu0 0
        %4046 = vmatpush1.bf16.msra.mxu0 0
        %4047 = vmatprep.subr.bf16.mxu0 0
        %4048 = vmatpush1.bf16.msra.mxu0 0
        %4049 = vmatprep.subr.bf16.mxu0 0
        %4050 = vmatpush1.bf16.msra.mxu0 0
        %4051 = vmatprep.subr.bf16.mxu0 0
        %4052 = vmatpush1.bf16.msra.mxu0 0
        %4053 = vmatprep.subr.bf16.mxu0 0
        %4054 = vmatpush1.bf16.msra.mxu0 0
        %4055 = vmatprep.mubr.bf16.mxu0 0
        %4056 = vmatmul.mubr.bf16.gmra.mrb[0].mxu0 %v3665
        %v4057 = vpop.f32.mrb[0].mxu0
        %v4058 = vadd.f32 0.0, %v4057
        %v4059 = vpop.f32.mrb[0].mxu0
        %v4060 = vpop.f32.mrb[0].mxu0
        %v4061 = vpop.f32.mrb[0].mxu0
        %4062 = vdwg.mxu0
        %v4079 = vunpack.c.l.b16 %v3719
        %v4080 = vunpack.c.l.b16 %v3720
        %v4081 = vunpack.c.l.b16 %v3721
        %v4082 = vunpack.c.l.b16 %v3722
        %v4083 = vunpack.c.l.b16 %v3723
        %v4084 = vunpack.c.l.b16 %v3724
        %v4085 = vunpack.c.l.b16 %v3725
        %v4086 = vunpack.c.l.b16 %v3726
        %v4087 = vunpack.c.l.b16 %v3727
        %v4088 = vunpack.c.l.b16 %v3728
        %v4089 = vunpack.c.l.b16 %v3729
        %v4090 = vunpack.c.l.b16 %v3730
        %v4091 = vunpack.c.l.b16 %v3731
        %v4092 = vunpack.c.l.b16 %v3732
        %v4093 = vunpack.c.l.b16 %v3733
        %v4094 = vunpack.c.l.b16 %v3734
        %v4095 = vpack.c.b16 %v4080, %v4079
        %v4096 = vpack.c.b16 %v4082, %v4081
        %v4097 = vpack.c.b16 %v4084, %v4083
        %v4098 = vpack.c.b16 %v4086, %v4085
        %v4099 = vpack.c.b16 %v4088, %v4087
        %v4100 = vpack.c.b16 %v4090, %v4089
        %v4101 = vpack.c.b16 %v4092, %v4091
        %v4102 = vpack.c.b16 %v4094, %v4093
        %4111 = vmatprep.subr.bf16.mxu0 0
        %4112 = vmatpush1.bf16.msra.mxu0 %v4095
        %4113 = vmatprep.subr.bf16.mxu0 0
        %4114 = vmatpush1.bf16.msra.mxu0 %v4096
        %4115 = vmatprep.subr.bf16.mxu0 0
        %4116 = vmatpush1.bf16.msra.mxu0 %v4097
        %4117 = vmatprep.subr.bf16.mxu0 0
        %4118 = vmatpush1.bf16.msra.mxu0 %v4098
        %4119 = vmatprep.subr.bf16.mxu0 0
        %4120 = vmatpush1.bf16.msra.mxu0 %v4099
        %4121 = vmatprep.subr.bf16.mxu0 0
        %4122 = vmatpush1.bf16.msra.mxu0 %v4100
        %4123 = vmatprep.subr.bf16.mxu0 0
        %4124 = vmatpush1.bf16.msra.mxu0 %v4101
        %4125 = vmatprep.subr.bf16.mxu0 0
        %4126 = vmatpush1.bf16.msra.mxu0 %v4102
        %4127 = vmatprep.subr.bf16.mxu0 0
        %4128 = vmatpush1.bf16.msra.mxu0 0
        %4129 = vmatprep.subr.bf16.mxu0 0
        %4130 = vmatpush1.bf16.msra.mxu0 0
        %4131 = vmatprep.subr.bf16.mxu0 0
        %4132 = vmatpush1.bf16.msra.mxu0 0
        %4133 = vmatprep.subr.bf16.mxu0 0
        %4134 = vmatpush1.bf16.msra.mxu0 0
        %4135 = vmatprep.subr.bf16.mxu0 0
        %4136 = vmatpush1.bf16.msra.mxu0 0
        %4137 = vmatprep.subr.bf16.mxu0 0
        %4138 = vmatpush1.bf16.msra.mxu0 0
        %4139 = vmatprep.subr.bf16.mxu0 0
        %4140 = vmatpush1.bf16.msra.mxu0 0
        %4141 = vmatprep.subr.bf16.mxu0 0
        %4142 = vmatpush1.bf16.msra.mxu0 0
        %4143 = vmatprep.mubr.bf16.mxu0 0
        %4144 = vmatmul.mubr.bf16.gmra.mrb[0].mxu0 %v3666
        %v4145 = vpop.f32.mrb[0].mxu0
        %v4146 = vadd.f32 0.0, %v4145
        %v4147 = vpop.f32.mrb[0].mxu0
        %v4148 = vpop.f32.mrb[0].mxu0
        %v4149 = vpop.f32.mrb[0].mxu0
        %4150 = vdwg.mxu0
        %v4167 = vunpack.c.l.b16 %v3735
        %v4168 = vunpack.c.l.b16 %v3736
        %v4169 = vunpack.c.l.b16 %v3737
        %v4170 = vunpack.c.l.b16 %v3738
        %v4171 = vunpack.c.l.b16 %v3739
        %v4172 = vunpack.c.l.b16 %v3740
        %v4173 = vunpack.c.l.b16 %v3741
        %v4174 = vunpack.c.l.b16 %v3742
        %v4175 = vunpack.c.l.b16 %v3743
        %v4176 = vunpack.c.l.b16 %v3744
        %v4177 = vunpack.c.l.b16 %v3745
        %v4178 = vunpack.c.l.b16 %v3746
        %v4179 = vunpack.c.l.b16 %v3747
        %v4180 = vunpack.c.l.b16 %v3748
        %v4181 = vunpack.c.l.b16 %v3749
        %v4182 = vunpack.c.l.b16 %v3750
        %v4183 = vpack.c.b16 %v4168, %v4167
        %v4184 = vpack.c.b16 %v4170, %v4169
        %v4185 = vpack.c.b16 %v4172, %v4171
        %v4186 = vpack.c.b16 %v4174, %v4173
        %v4187 = vpack.c.b16 %v4176, %v4175
        %v4188 = vpack.c.b16 %v4178, %v4177
        %v4189 = vpack.c.b16 %v4180, %v4179
        %v4190 = vpack.c.b16 %v4182, %v4181
        %4199 = vmatprep.subr.bf16.mxu0 0
        %4200 = vmatpush1.bf16.msra.mxu0 %v4183
        %4201 = vmatprep.subr.bf16.mxu0 0
        %4202 = vmatpush1.bf16.msra.mxu0 %v4184
        %4203 = vmatprep.subr.bf16.mxu0 0
        %4204 = vmatpush1.bf16.msra.mxu0 %v4185
        %4205 = vmatprep.subr.bf16.mxu0 0
        %4206 = vmatpush1.bf16.msra.mxu0 %v4186
        %4207 = vmatprep.subr.bf16.mxu0 0
        %4208 = vmatpush1.bf16.msra.mxu0 %v4187
        %4209 = vmatprep.subr.bf16.mxu0 0
        %4210 = vmatpush1.bf16.msra.mxu0 %v4188
        %4211 = vmatprep.subr.bf16.mxu0 0
        %4212 = vmatpush1.bf16.msra.mxu0 %v4189
        %4213 = vmatprep.subr.bf16.mxu0 0
        %4214 = vmatpush1.bf16.msra.mxu0 %v4190
        %4215 = vmatprep.subr.bf16.mxu0 0
        %4216 = vmatpush1.bf16.msra.mxu0 0
        %4217 = vmatprep.subr.bf16.mxu0 0
        %4218 = vmatpush1.bf16.msra.mxu0 0
        %4219 = vmatprep.subr.bf16.mxu0 0
        %4220 = vmatpush1.bf16.msra.mxu0 0
        %4221 = vmatprep.subr.bf16.mxu0 0
        %4222 = vmatpush1.bf16.msra.mxu0 0
        %4223 = vmatprep.subr.bf16.mxu0 0
        %4224 = vmatpush1.bf16.msra.mxu0 0
        %4225 = vmatprep.subr.bf16.mxu0 0
        %4226 = vmatpush1.bf16.msra.mxu0 0
        %4227 = vmatprep.subr.bf16.mxu0 0
        %4228 = vmatpush1.bf16.msra.mxu0 0
        %4229 = vmatprep.subr.bf16.mxu0 0
        %4230 = vmatpush1.bf16.msra.mxu0 0
        %4231 = vmatprep.mubr.bf16.mxu0 0
        %4232 = vmatmul.mubr.bf16.gmra.mrb[0].mxu0 %v3667
        %v4233 = vpop.f32.mrb[0].mxu0
        %v4234 = vadd.f32 0.0, %v4233
        %v4235 = vpop.f32.mrb[0].mxu0
        %v4236 = vpop.f32.mrb[0].mxu0
        %v4237 = vpop.f32.mrb[0].mxu0
        %4238 = vdwg.mxu0
        %v4255 = vunpack.c.l.b16 %v3751
        %v4256 = vunpack.c.l.b16 %v3752
        %v4257 = vunpack.c.l.b16 %v3753
        %v4258 = vunpack.c.l.b16 %v3754
        %v4259 = vunpack.c.l.b16 %v3755
        %v4260 = vunpack.c.l.b16 %v3756
        %v4261 = vunpack.c.l.b16 %v3757
        %v4262 = vunpack.c.l.b16 %v3758
        %v4263 = vunpack.c.l.b16 %v3759
        %v4264 = vunpack.c.l.b16 %v3760
        %v4265 = vunpack.c.l.b16 %v3761
        %v4266 = vunpack.c.l.b16 %v3762
        %v4267 = vunpack.c.l.b16 %v3763
        %v4268 = vunpack.c.l.b16 %v3764
        %v4269 = vunpack.c.l.b16 %v3765
        %v4270 = vunpack.c.l.b16 %v3766
        %v4271 = vpack.c.b16 %v4256, %v4255
        %v4272 = vpack.c.b16 %v4258, %v4257
        %v4273 = vpack.c.b16 %v4260, %v4259
        %v4274 = vpack.c.b16 %v4262, %v4261
        %v4275 = vpack.c.b16 %v4264, %v4263
        %v4276 = vpack.c.b16 %v4266, %v4265
        %v4277 = vpack.c.b16 %v4268, %v4267
        %v4278 = vpack.c.b16 %v4270, %v4269
        %4287 = vmatprep.subr.bf16.mxu0 0
        %4288 = vmatpush1.bf16.msra.mxu0 %v4271
        %4289 = vmatprep.subr.bf16.mxu0 0
        %4290 = vmatpush1.bf16.msra.mxu0 %v4272
        %4291 = vmatprep.subr.bf16.mxu0 0
        %4292 = vmatpush1.bf16.msra.mxu0 %v4273
        %4293 = vmatprep.subr.bf16.mxu0 0
        %4294 = vmatpush1.bf16.msra.mxu0 %v4274
        %4295 = vmatprep.subr.bf16.mxu0 0
        %4296 = vmatpush1.bf16.msra.mxu0 %v4275
        %4297 = vmatprep.subr.bf16.mxu0 0
        %4298 = vmatpush1.bf16.msra.mxu0 %v4276
        %4299 = vmatprep.subr.bf16.mxu0 0
        %4300 = vmatpush1.bf16.msra.mxu0 %v4277
        %4301 = vmatprep.subr.bf16.mxu0 0
        %4302 = vmatpush1.bf16.msra.mxu0 %v4278
        %4303 = vmatprep.subr.bf16.mxu0 0
        %4304 = vmatpush1.bf16.msra.mxu0 0
        %4305 = vmatprep.subr.bf16.mxu0 0
        %4306 = vmatpush1.bf16.msra.mxu0 0
        %4307 = vmatprep.subr.bf16.mxu0 0
        %4308 = vmatpush1.bf16.msra.mxu0 0
        %4309 = vmatprep.subr.bf16.mxu0 0
        %4310 = vmatpush1.bf16.msra.mxu0 0
        %4311 = vmatprep.subr.bf16.mxu0 0
        %4312 = vmatpush1.bf16.msra.mxu0 0
        %4313 = vmatprep.subr.bf16.mxu0 0
        %4314 = vmatpush1.bf16.msra.mxu0 0
        %4315 = vmatprep.subr.bf16.mxu0 0
        %4316 = vmatpush1.bf16.msra.mxu0 0
        %4317 = vmatprep.subr.bf16.mxu0 0
        %4318 = vmatpush1.bf16.msra.mxu0 0
        %4319 = vmatprep.mubr.bf16.mxu0 0
        %4320 = vmatmul.mubr.bf16.gmra.mrb[0].mxu0 %v3668
        %v4321 = vpop.f32.mrb[0].mxu0
        %v4322 = vadd.f32 0.0, %v4321
        %v4323 = vpop.f32.mrb[0].mxu0
        %v4324 = vpop.f32.mrb[0].mxu0
        %v4325 = vpop.f32.mrb[0].mxu0
        %4326 = vdwg.mxu0
        %v4343 = vunpack.c.l.b16 %v3767
        %v4344 = vunpack.c.l.b16 %v3768
        %v4345 = vunpack.c.l.b16 %v3769
        %v4346 = vunpack.c.l.b16 %v3770
        %v4347 = vunpack.c.l.b16 %v3771
        %v4348 = vunpack.c.l.b16 %v3772
        %v4349 = vunpack.c.l.b16 %v3773
        %v4350 = vunpack.c.l.b16 %v3774
        %v4351 = vunpack.c.l.b16 %v3775
        %v4352 = vunpack.c.l.b16 %v3776
        %v4353 = vunpack.c.l.b16 %v3777
        %v4354 = vunpack.c.l.b16 %v3778
        %v4355 = vunpack.c.l.b16 %v3779
        %v4356 = vunpack.c.l.b16 %v3780
        %v4357 = vunpack.c.l.b16 %v3781
        %v4358 = vunpack.c.l.b16 %v3782
        %v4359 = vpack.c.b16 %v4344, %v4343
        %v4360 = vpack.c.b16 %v4346, %v4345
        %v4361 = vpack.c.b16 %v4348, %v4347
        %v4362 = vpack.c.b16 %v4350, %v4349
        %v4363 = vpack.c.b16 %v4352, %v4351
        %v4364 = vpack.c.b16 %v4354, %v4353
        %v4365 = vpack.c.b16 %v4356, %v4355
        %v4366 = vpack.c.b16 %v4358, %v4357
        %4375 = vmatprep.subr.bf16.mxu0 0
        %4376 = vmatpush1.bf16.msra.mxu0 %v4359
        %4377 = vmatprep.subr.bf16.mxu0 0
        %4378 = vmatpush1.bf16.msra.mxu0 %v4360
        %4379 = vmatprep.subr.bf16.mxu0 0
        %4380 = vmatpush1.bf16.msra.mxu0 %v4361
        %4381 = vmatprep.subr.bf16.mxu0 0
        %4382 = vmatpush1.bf16.msra.mxu0 %v4362
        %4383 = vmatprep.subr.bf16.mxu0 0
        %4384 = vmatpush1.bf16.msra.mxu0 %v4363
        %4385 = vmatprep.subr.bf16.mxu0 0
        %4386 = vmatpush1.bf16.msra.mxu0 %v4364
        %4387 = vmatprep.subr.bf16.mxu0 0
        %4388 = vmatpush1.bf16.msra.mxu0 %v4365
        %4389 = vmatprep.subr.bf16.mxu0 0
        %4390 = vmatpush1.bf16.msra.mxu0 %v4366
        %4391 = vmatprep.subr.bf16.mxu0 0
        %4392 = vmatpush1.bf16.msra.mxu0 0
        %4393 = vmatprep.subr.bf16.mxu0 0
        %4394 = vmatpush1.bf16.msra.mxu0 0
        %4395 = vmatprep.subr.bf16.mxu0 0
        %4396 = vmatpush1.bf16.msra.mxu0 0
        %4397 = vmatprep.subr.bf16.mxu0 0
        %4398 = vmatpush1.bf16.msra.mxu0 0
        %4399 = vmatprep.subr.bf16.mxu0 0
        %4400 = vmatpush1.bf16.msra.mxu0 0
        %4401 = vmatprep.subr.bf16.mxu0 0
        %4402 = vmatpush1.bf16.msra.mxu0 0
        %4403 = vmatprep.subr.bf16.mxu0 0
        %4404 = vmatpush1.bf16.msra.mxu0 0
        %4405 = vmatprep.subr.bf16.mxu0 0
        %4406 = vmatpush1.bf16.msra.mxu0 0
        %4407 = vmatprep.mubr.bf16.mxu0 0
        %4408 = vmatmul.mubr.bf16.gmra.mrb[0].mxu0 %v3669
        %v4409 = vpop.f32.mrb[0].mxu0
        %v4410 = vadd.f32 0.0, %v4409
        %v4411 = vpop.f32.mrb[0].mxu0
        %v4412 = vpop.f32.mrb[0].mxu0
        %v4413 = vpop.f32.mrb[0].mxu0
        %4414 = vdwg.mxu0
        %v4431 = vunpack.c.l.b16 %v3783
        %v4432 = vunpack.c.l.b16 %v3784
        %v4433 = vunpack.c.l.b16 %v3785
        %v4434 = vunpack.c.l.b16 %v3786
        %v4435 = vunpack.c.l.b16 %v3787
        %v4436 = vunpack.c.l.b16 %v3788
        %v4437 = vunpack.c.l.b16 %v3789
        %v4438 = vunpack.c.l.b16 %v3790
        %v4439 = vunpack.c.l.b16 %v3791
        %v4440 = vunpack.c.l.b16 %v3792
        %v4441 = vunpack.c.l.b16 %v3793
        %v4442 = vunpack.c.l.b16 %v3794
        %v4443 = vunpack.c.l.b16 %v3795
        %v4444 = vunpack.c.l.b16 %v3796
        %v4445 = vunpack.c.l.b16 %v3797
        %v4446 = vunpack.c.l.b16 %v3798
        %v4447 = vpack.c.b16 %v4432, %v4431
        %v4448 = vpack.c.b16 %v4434, %v4433
        %v4449 = vpack.c.b16 %v4436, %v4435
        %v4450 = vpack.c.b16 %v4438, %v4437
        %v4451 = vpack.c.b16 %v4440, %v4439
        %v4452 = vpack.c.b16 %v4442, %v4441
        %v4453 = vpack.c.b16 %v4444, %v4443
        %v4454 = vpack.c.b16 %v4446, %v4445
        %4463 = vmatprep.subr.bf16.mxu0 0
        %4464 = vmatpush1.bf16.msra.mxu0 %v4447
        %4465 = vmatprep.subr.bf16.mxu0 0
        %4466 = vmatpush1.bf16.msra.mxu0 %v4448
        %4467 = vmatprep.subr.bf16.mxu0 0
        %4468 = vmatpush1.bf16.msra.mxu0 %v4449
        %4469 = vmatprep.subr.bf16.mxu0 0
        %4470 = vmatpush1.bf16.msra.mxu0 %v4450
        %4471 = vmatprep.subr.bf16.mxu0 0
        %4472 = vmatpush1.bf16.msra.mxu0 %v4451
        %4473 = vmatprep.subr.bf16.mxu0 0
        %4474 = vmatpush1.bf16.msra.mxu0 %v4452
        %4475 = vmatprep.subr.bf16.mxu0 0
        %4476 = vmatpush1.bf16.msra.mxu0 %v4453
        %4477 = vmatprep.subr.bf16.mxu0 0
        %4478 = vmatpush1.bf16.msra.mxu0 %v4454
        %4479 = vmatprep.subr.bf16.mxu0 0
        %4480 = vmatpush1.bf16.msra.mxu0 0
        %4481 = vmatprep.subr.bf16.mxu0 0
        %4482 = vmatpush1.bf16.msra.mxu0 0
        %4483 = vmatprep.subr.bf16.mxu0 0
        %4484 = vmatpush1.bf16.msra.mxu0 0
        %4485 = vmatprep.subr.bf16.mxu0 0
        %4486 = vmatpush1.bf16.msra.mxu0 0
        %4487 = vmatprep.subr.bf16.mxu0 0
        %4488 = vmatpush1.bf16.msra.mxu0 0
        %4489 = vmatprep.subr.bf16.mxu0 0
        %4490 = vmatpush1.bf16.msra.mxu0 0
        %4491 = vmatprep.subr.bf16.mxu0 0
        %4492 = vmatpush1.bf16.msra.mxu0 0
        %4493 = vmatprep.subr.bf16.mxu0 0
        %4494 = vmatpush1.bf16.msra.mxu0 0
        %4495 = vmatprep.mubr.bf16.mxu0 0
        %4496 = vmatmul.mubr.bf16.gmra.mrb[0].mxu0 %v3670
        %v4497 = vpop.f32.mrb[0].mxu0
        %v4498 = vadd.f32 0.0, %v4497
        %v4499 = vpop.f32.mrb[0].mxu0
        %v4500 = vpop.f32.mrb[0].mxu0
        %v4501 = vpop.f32.mrb[0].mxu0
        %4502 = vdwg.mxu0
        %v4511 = vrot.slane %v3970, 7
        %v4512 = vsel %vm3559, %v4511, %v3882
        %v4513 = vrot.slane %v4058, 6
        %v4514 = vsel %vm3561, %v4513, %v4512
        %v4515 = vrot.slane %v4146, 5
        %v4516 = vsel %vm3563, %v4515, %v4514
        %v4517 = vrot.slane %v4234, 4
        %v4518 = vsel %vm3565, %v4517, %v4516
        %v4519 = vrot.slane %v4322, 3
        %v4520 = vsel %vm3567, %v4519, %v4518
        %v4521 = vrot.slane %v4410, 2
        %v4522 = vsel %vm3569, %v4521, %v4520
        %v4523 = vrot.slane %v4498, 1
        %v4524 = vsel %vm3571, %v4523, %v4522
        %v4526 = vadd.f32 %v3604, %v4524
        %4527 = vst.msk [vmem:[#allocation5] sm:$0xff] %vm2380, %v4526
        %4528 = vst.msk [vmem:[#allocation3] sm:$0xff] %vm3596, %v3579
        %p4529 = scmp.eq.s32.totalorder %s30, 1
        // Predicated region
        $region131: #{tpu_custom_call.1} parent=117 // pred_check
          %p4530 = pneg %p4529
        $region132: #{tpu_custom_call.1} parent=117 // pred_check_branch
          %4532 = sbr.rel (%p4530) target = $region134
        $region133: #{tpu_custom_call.1} parent=117 // pred_region
          %v4533 = vld [vmem:[%s5 + $0x2] sm:$0x1]
          %v4534 = vld [vmem:[%s5 + $0x3] sm:$0x1]
          %v4535 = vld [vmem:[%s5 + $0x4] sm:$0x1]
          %v4536 = vld [vmem:[%s5 + $0x5] sm:$0x1]
          %v4537 = vld [vmem:[#allocation4] sm:$0xff]
          %vm4538 = vcmp.gt.f32.partialorder %v4537, 0.0
          %v4539 = vsel %vm4538, %v4537, 1.0
          %v4540 = vld [vmem:[#allocation5] sm:$0xff]
          %v4541 = vrcp.pop %v4539
          %4543 = vset.pattern.permute.xlu0 0
          %4544 = vperm.xlu0 %4543, %v4541
          %v4545 = vpop.permute.xlu0 %4544
          %v4547 = vmul.f32 %v4540, %v4545
          %v4548 = vlaneseq
          %v4549 = vshrl.u32 %v4548, 7
          %v4550 = vsub.s32 0, %v4549
          %v4551 = vrot.slane %v4535, %v4550
          %v4552 = vsub.f32 %v4547, %v4551
          %v4553 = vadd.f32 %v4536, 1e-05
          %v4554 = vrsqrt.pop %v4553
          %v4555 = vmul.f32 %v4533, %v4554
          %v4556 = vlaneseq
          %v4557 = vshrl.u32 %v4556, 7
          %v4558 = vsub.s32 0, %v4557
          %v4559 = vrot.slane %v4555, %v4558
          %v4560 = vmul.f32 %v4552, %v4559
          %v4561 = vlaneseq
          %v4562 = vshrl.u32 %v4561, 7
          %v4563 = vsub.s32 0, %v4562
          %v4564 = vrot.slane %v4534, %v4563
          %v4565 = vadd.f32 %v4560, %v4564
          %4566 = vst.msk [vmem:[#allocation10] sm:$0xff] %vm2380, %v4565
          %v4567 = vld [vmem:[#allocation3] sm:$0xff]
          %4568 = vst.msk [vmem:[%s1546] sm:$0xff] %vm3596, %v4567
          %v4569 = vld [vmem:[#allocation4] sm:$0xff]
          %4570 = vst.msk [vmem:[%s1550] sm:$0xff] %vm3596, %v4569
        $region134: #{tpu_custom_call.1} parent=117 // pred_fallthru
          _
        %s4571 = sand.u32 %s199, 1
        %s4572 = scalar_lea.sflag [#allocation9], %s4571
        %s4573 = sand.u32 %s199, 1
        %s4574 = smul.addr %s4573, 8
        %s4575 = scalar_lea.vmem [#allocation8], %s4574
        %p4576 = scmp.lt.s32.totalorder %s29, 0
        %s4577 = scalar_select %p4576, %s29, 0
        %s4578 = smul.addr %s4577, 8
        %s4579 = scalar_lea.vmem %s7, %s4578
        %p4580 = scmp.lt.s32.totalorder %s29, 0
        %s4581 = scalar_select %p4580, %s29, 0
        %s4582 = smul.addr %s4581, 8
        %s4583 = scalar_lea.vmem %s8, %s4582
        // Predicated region
        $region135: #{tpu_custom_call.1} parent=117 // pred_check
          %p4584 = pneg %p209
        $region136: #{tpu_custom_call.1} parent=117 // pred_check_branch
          %4586 = sbr.rel (%p4584) target = $region138
        $region137: #{tpu_custom_call.1} parent=117 // pred_region
          %s4588 = ssub.s32 128, 128
          %4589 = vsyncadd %s4572, %s4588
          %s4590 = smul.addr %s29, 2
          %s4591 = sadd.s32 %s30, %s4590
          %s4592 = smul.addr %s4591, 128
          %s4593 = scalar_lea.hbm %s6, %s4592
          %s4595 = sshll.u32 %s4575, 4
          %s4596 = int_to_ptr.vmem [resolvable:$true] %s4595
          %4598 = dma.vmem_to_hbm [thread:$0]  %s4596, 128, %s4593, %s4572
        $region138: #{tpu_custom_call.1} parent=117 // pred_fallthru
          _
        // Predicated region
        $region139: #{tpu_custom_call.1} parent=117 // pred_check
          %p4599 = pneg %p235
        $region140: #{tpu_custom_call.1} parent=117 // pred_check_branch
          %4601 = sbr.rel (%p4599) target = $region142
        $region141: #{tpu_custom_call.1} parent=117 // pred_region
          _
        $region142: #{tpu_custom_call.1} parent=117 // pred_fallthru
          _
        // Predicated region
        $region143: #{tpu_custom_call.1} parent=117 // pred_check
          %p4602 = pneg %p261
        $region144: #{tpu_custom_call.1} parent=117 // pred_check_branch
          %4604 = sbr.rel (%p4602) target = $region146
        $region145: #{tpu_custom_call.1} parent=117 // pred_region
          _
        $region146: #{tpu_custom_call.1} parent=117 // pred_fallthru
          _
        // Predicated region
        $region147: #{tpu_custom_call.1} parent=117 // pred_check
          %p4605 = pneg %p287
        $region148: #{tpu_custom_call.1} parent=117 // pred_check_branch
          %4607 = sbr.rel (%p4605) target = $region150
        $region149: #{tpu_custom_call.1} parent=117 // pred_region
          %s4609 = ssub.s32 128, 128
          %4610 = vsyncadd [#allocation11], %s4609
          %s4611 = smul.addr %s29, 128
          %s4612 = scalar_lea.hbm %s9, %s4611
          %s4614 = sshll.u32 [#allocation10], 4
          %s4615 = int_to_ptr.vmem [resolvable:$true] %s4614
          %4617 = dma.vmem_to_hbm [thread:$0]  %s4615, 128, %s4612, [#allocation11]
        $region150: #{tpu_custom_call.1} parent=117 // pred_fallthru
          _
        // Predicated region
        $region151: #{tpu_custom_call.1} parent=117 // pred_check
          %p4618 = pneg %p235
        $region152: #{tpu_custom_call.1} parent=117 // pred_check_branch
          %4620 = sbr.rel (%p4618) target = $region154
        $region153: #{tpu_custom_call.1} parent=117 // pred_region
          %p4621 = scmp.lt.s32.totalorder %s29, 0
          %s4622 = scalar_select %p4621, %s29, 0
          %s4623 = smul.addr %s4622, 8
          %s4624 = scalar_lea.vmem %s7, %s4623
        $region154: #{tpu_custom_call.1} parent=117 // pred_fallthru
          _
        // Predicated region
        $region155: #{tpu_custom_call.1} parent=117 // pred_check
          %p4625 = pneg %p261
        $region156: #{tpu_custom_call.1} parent=117 // pred_check_branch
          %4627 = sbr.rel (%p4625) target = $region158
        $region157: #{tpu_custom_call.1} parent=117 // pred_region
          %p4628 = scmp.lt.s32.totalorder %s29, 0
          %s4629 = scalar_select %p4628, %s29, 0
          %s4630 = smul.addr %s4629, 8
          %s4631 = scalar_lea.vmem %s8, %s4630
        $region158: #{tpu_custom_call.1} parent=117 // pred_fallthru
          _
        // Predicated region
        $region159: #{tpu_custom_call.1} parent=117 // pred_check
          %p4632 = pneg %p287
        $region160: #{tpu_custom_call.1} parent=117 // pred_check_branch
          %4634 = sbr.rel (%p4632) target = $region162
        $region161: #{tpu_custom_call.1} parent=117 // pred_region
          %4635 = dma.done [#allocation11], 128
        $region162: #{tpu_custom_call.1} parent=117 // pred_fallthru
          _
      $region118: #{tpu_custom_call.1} parent=5 // pred_fallthru
        _
      %p4636 = scmp.le.s32.totalorder 2, %s20
      // Predicated region
      $region163: #{tpu_custom_call.1} parent=5 // pred_check
        %p4637 = pneg %p4636
      $region164: #{tpu_custom_call.1} parent=5 // pred_check_branch
        %4639 = sbr.rel (%p4637) target = $region166
      $region165: #{tpu_custom_call.1} parent=5 // pred_region
        %s4640 = ssub.s32 %s20, 2
        // Predicated region
        $region167: #{tpu_custom_call.1} parent=165 // pred_check
          %p4641 = pneg %p215
        $region168: #{tpu_custom_call.1} parent=165 // pred_check_branch
          %4643 = sbr.rel (%p4641) target = $region170
        $region169: #{tpu_custom_call.1} parent=165 // pred_region
          %s4644 = sand.u32 %s200, 1
          %s4645 = scalar_lea.sflag [#allocation9], %s4644
          %s4646 = sand.u32 %s200, 1
          %s4647 = smul.addr %s4646, 8
          %s4648 = scalar_lea.vmem [#allocation8], %s4647
          %4649 = dma.done %s4645, 128
        $region170: #{tpu_custom_call.1} parent=165 // pred_fallthru
          _
      $region166: #{tpu_custom_call.1} parent=5 // pred_fallthru
        _
    $region6: #{tpu_custom_call.1} parent=1 // loop_footer
      %s24 = sadd.s32 1, %s20
    $region7: #{tpu_custom_call.1} parent=1 // loop_footer_branch
      %19 = sbr.rel target = $region3
    $region8: #{tpu_custom_call.1} parent=1 // loop_exit
      _
    %4650 = vsyncpa [#allocation9], 1
    %s4651 = scalar_lea.sflag [#allocation9], 1
    %4652 = vsyncpa %s4651, 1
    %4653 = vsyncpa [#allocation11], 1

</llo_original>
